<compile_context>
chip_gen: v6e
topology: v6e:2x2x1
jax: 0.10.0
libtpu: 0.0.40
codegen_flags: <defaults>
</compile_context>

<pallas_src>
import functools

import jax
import jax.numpy as jnp
from jax.experimental import pallas as pl
from jax.experimental.pallas import tpu as pltpu

LATENT_DIM = 100
LATENT_PAD = 128            # latent padded to one full lane group (zero cols)
H1, H2, H3 = 256, 512, 1024
OUT = 28 * 28               # 784 = 6*128 + 16 -> 6 dense lane groups + 1 masked


def _round_up(x, m):
    return (x + m - 1) // m * m


def _generator_kernel(z_ref,
                      w1_ref, b1_ref,
                      w2_ref, b2_ref,
                      w3_ref, b3_ref,
                      w4_ref, b4_ref,
                      o_ref):
    # bf16 operands hit the MXU's native bf16 path; accumulation and all
    # elementwise work (bias add, ReLU, tanh) stay in f32.
    h = jnp.dot(z_ref[...], w1_ref[...],
                preferred_element_type=jnp.float32) + b1_ref[...]
    h = jnp.maximum(h, 0.0).astype(jnp.bfloat16)

    h = jnp.dot(h, w2_ref[...],
                preferred_element_type=jnp.float32) + b2_ref[...]
    h = jnp.maximum(h, 0.0).astype(jnp.bfloat16)

    h = jnp.dot(h, w3_ref[...],
                preferred_element_type=jnp.float32) + b3_ref[...]
    h = jnp.maximum(h, 0.0).astype(jnp.bfloat16)

    h = jnp.dot(h, w4_ref[...],
                preferred_element_type=jnp.float32) + b4_ref[...]
    o_ref[...] = jnp.tanh(h).astype(o_ref.dtype)   # f32 tanh, bf16 store


def init_generator_params(key):
    """PyTorch-style Linear init (uniform +-1/sqrt(fan_in), true fan_in).
    Weights stored (in, out) in bf16; w1 rows zero-padded 100->128.
    Biases stored f32 (elementwise path stays f32). Layer 4 kept at width 784
    so the kernel stores the true output width directly."""
    dims = [(LATENT_DIM, H1), (H1, H2), (H2, H3), (H3, OUT)]
    pads = [(LATENT_PAD, H1), (H1, H2), (H2, H3), (H3, OUT)]
    params = {}
    for idx, ((fi, fo), (pi, po)) in enumerate(zip(dims, pads), start=1):
        key, kw, kb = jax.random.split(key, 3)
        bound = 1.0 / (fi ** 0.5)
        w = jax.random.uniform(kw, (fi, fo), jnp.float32, -bound, bound)
        b = jax.random.uniform(kb, (1, fo), jnp.float32, -bound, bound)
        if (pi, po) != (fi, fo):
            wp = (jnp.zeros((pi, po), jnp.bfloat16)
                  .at[:fi, :fo].set(w.astype(jnp.bfloat16)))
        else:
            wp = w.astype(jnp.bfloat16)
        params[f"w{idx}"] = wp
        params[f"b{idx}"] = b
    return params


def _choose_batch_tile(B, batch_tile):
    """Batch tile: multiple of 16 (bf16 sublane pack), 128-aligned when large,
    capped so large batches give >= 2 grid tiles (v7x: 2 TensorCores)."""
    b_req = _round_up(B, 16)
    tb = min(batch_tile, b_req)
    if b_req >= 256:
        tb = min(tb, max(128, _round_up(b_req // 2, 128)))
    tb = _round_up(tb, 128 if tb >= 128 else 16)
    b_pad = _round_up(B, tb)
    return tb, b_pad


@functools.partial(jax.jit, static_argnames=("batch_tile",))
def generator_forward(z, params, *, batch_tile=512):
    B = z.shape[0]
    tb, b_pad = _choose_batch_tile(B, batch_tile)
    n_tiles = b_pad // tb

    # Single pad op: batch rows -> b_pad, latent 100 -> 128 (zeros), bf16 cast.
    z_p = jnp.pad(z.astype(jnp.bfloat16),
                  ((0, b_pad - B), (0, LATENT_PAD - LATENT_DIM)))

    operands = (z_p,
                params["w1"], params["b1"],
                params["w2"], params["b2"],
                params["w3"], params["b3"],
                params["w4"], params["b4"])

    # Weights/biases: full block, constant index_map (fetched once, VMEM
    # resident across batch tiles), single-buffered to save VMEM.
    def const_spec(op):
        return pl.BlockSpec(op.shape, lambda i: (0, 0),
                            pipeline_mode=pl.Buffered(1))

    in_specs = [pl.BlockSpec((tb, LATENT_PAD), lambda i: (i, 0))]
    in_specs += [const_spec(op) for op in operands[1:]]

    flops = 2 * b_pad * (LATENT_PAD * H1 + H1 * H2 + H2 * H3 + H3 * OUT)
    bytes_accessed = int(sum(op.size * op.dtype.itemsize for op in operands)
                         + b_pad * OUT * 2)
    cost = pl.CostEstimate(flops=flops,
                           transcendentals=b_pad * OUT,
                           bytes_accessed=bytes_accessed)

    flat = pl.pallas_call(
        _generator_kernel,
        out_shape=jax.ShapeDtypeStruct((b_pad, OUT), jnp.bfloat16),
        grid=(n_tiles,),
        in_specs=in_specs,
        out_specs=pl.BlockSpec((tb, OUT), lambda i: (i, 0)),
        compiler_params=pltpu.CompilerParams(
            dimension_semantics=("parallel",),
            vmem_limit_bytes=32 << 20),
        cost_estimate=cost,
    )(*operands)

    # Only the batch padding (if any) is dropped; feature width is already 784.
    if b_pad != B:
        flat = flat[:B]
    return flat.reshape(B, 1, 28, 28)   # matches PyTorch .view(B, 1, 28, 28)


def generator_reference(z, params):
    """Pure-JAX reference with the same bf16-matmul / f32-elementwise pattern."""
    B = z.shape[0]
    h = jnp.pad(z.astype(jnp.bfloat16), ((0, 0), (0, LATENT_PAD - LATENT_DIM)))
    h = jnp.dot(h, params["w1"], preferred_element_type=jnp.float32) + params["b1"]
    h = jnp.maximum(h, 0.0).astype(jnp.bfloat16)
    h = jnp.dot(h, params["w2"], preferred_element_type=jnp.float32) + params["b2"]
    h = jnp.maximum(h, 0.0).astype(jnp.bfloat16)
    h = jnp.dot(h, params["w3"], preferred_element_type=jnp.float32) + params["b3"]
    h = jnp.maximum(h, 0.0).astype(jnp.bfloat16)
    h = jnp.dot(h, params["w4"], preferred_element_type=jnp.float32) + params["b4"]
    h = jnp.tanh(h).astype(jnp.bfloat16)
    return h.reshape(B, 1, 28, 28)


if __name__ == "__main__":
    key = jax.random.PRNGKey(0)
    key_params, key_z = jax.random.split(key)

    params = init_generator_params(key_params)
    B = 8
    z = jax.random.normal(key_z, (B, LATENT_DIM), dtype=jnp.float32)

    out = generator_forward(z, params)
    out = jax.block_until_ready(out)

    ref = generator_reference(z, params)
    assert out.shape == (B, 1, 28, 28), out.shape
    diff = jnp.max(jnp.abs(out.astype(jnp.float32) - ref.astype(jnp.float32)))
    assert jnp.allclose(out.astype(jnp.float32), ref.astype(jnp.float32),
                        atol=1e-2, rtol=1e-2), (
        f"mismatch vs reference, max abs diff = {diff}")

    print("KERNEL_OK")
</pallas_src>

<mosaic_0001>
module attributes {stable_mosaic.version = 11 : i64} {
  func.func @_generator_kernel(%arg0: i32, %arg1: memref<16x128xbf16, #tpu.memory_space<vmem>>, %arg2: memref<128x256xbf16, #tpu.memory_space<vmem>>, %arg3: memref<1x256xf32, #tpu.memory_space<vmem>>, %arg4: memref<256x512xbf16, #tpu.memory_space<vmem>>, %arg5: memref<1x512xf32, #tpu.memory_space<vmem>>, %arg6: memref<512x1024xbf16, #tpu.memory_space<vmem>>, %arg7: memref<1x1024xf32, #tpu.memory_space<vmem>>, %arg8: memref<1024x784xbf16, #tpu.memory_space<vmem>>, %arg9: memref<1x784xf32, #tpu.memory_space<vmem>>, %arg10: memref<16x784xbf16, #tpu.memory_space<vmem>>) attributes {dimension_semantics = [#tpu.dimension_semantics<parallel>], iteration_bounds = array<i64: 1>, scalar_prefetch = 0 : i64, scratch_operands = 0 : i64, tpu.core_type = #tpu.core_type<tc>, window_params = [{transform_indices = @transform_0, window_bounds = array<i64: 16, 128>}, {pipeline_mode = #tpu.pipeline_mode<synchronous>, transform_indices = @transform_1, window_bounds = array<i64: 128, 256>}, {pipeline_mode = #tpu.pipeline_mode<synchronous>, transform_indices = @transform_2, window_bounds = array<i64: 1, 256>}, {pipeline_mode = #tpu.pipeline_mode<synchronous>, transform_indices = @transform_3, window_bounds = array<i64: 256, 512>}, {pipeline_mode = #tpu.pipeline_mode<synchronous>, transform_indices = @transform_4, window_bounds = array<i64: 1, 512>}, {pipeline_mode = #tpu.pipeline_mode<synchronous>, transform_indices = @transform_5, window_bounds = array<i64: 512, 1024>}, {pipeline_mode = #tpu.pipeline_mode<synchronous>, transform_indices = @transform_6, window_bounds = array<i64: 1, 1024>}, {pipeline_mode = #tpu.pipeline_mode<synchronous>, transform_indices = @transform_7, window_bounds = array<i64: 1024, 784>}, {pipeline_mode = #tpu.pipeline_mode<synchronous>, transform_indices = @transform_8, window_bounds = array<i64: 1, 784>}, {transform_indices = @transform_9, window_bounds = array<i64: 16, 784>}]} {
    %c0 = arith.constant 0 : index
    %c0_0 = arith.constant 0 : index
    %0 = vector.load %arg1[%c0, %c0_0] : memref<16x128xbf16, #tpu.memory_space<vmem>>, vector<16x128xbf16>
    %c0_1 = arith.constant 0 : index
    %c0_2 = arith.constant 0 : index
    %1 = vector.load %arg2[%c0_1, %c0_2] : memref<128x256xbf16, #tpu.memory_space<vmem>>, vector<128x256xbf16>
    %cst = arith.constant dense<0.000000e+00> : vector<16x256xf32>
    %2 = tpu.matmul %0, %1, %cst {dimension_numbers = #tpu.dot_dimension_numbers<[1], [0], [0], [1], [0, 0, 1, 1], [], []>} : vector<16x128xbf16>, vector<128x256xbf16>, vector<16x256xf32> -> vector<16x256xf32>
    %c0_3 = arith.constant 0 : index
    %c0_4 = arith.constant 0 : index
    %3 = vector.load %arg3[%c0_3, %c0_4] : memref<1x256xf32, #tpu.memory_space<vmem>>, vector<1x256xf32>
    %4 = vector.broadcast %3 : vector<1x256xf32> to vector<16x256xf32>
    %5 = arith.addf %2, %4 : vector<16x256xf32>
    %cst_5 = arith.constant 0.000000e+00 : f32
    %6 = vector.broadcast %cst_5 : f32 to vector<16x256xf32>
    %7 = arith.maximumf %5, %6 : vector<16x256xf32>
    %8 = arith.truncf %7 : vector<16x256xf32> to vector<16x256xbf16>
    %c0_6 = arith.constant 0 : index
    %c0_7 = arith.constant 0 : index
    %9 = vector.load %arg4[%c0_6, %c0_7] : memref<256x512xbf16, #tpu.memory_space<vmem>>, vector<256x512xbf16>
    %cst_8 = arith.constant dense<0.000000e+00> : vector<16x512xf32>
    %10 = tpu.matmul %8, %9, %cst_8 {dimension_numbers = #tpu.dot_dimension_numbers<[1], [0], [0], [1], [0, 0, 1, 1], [], []>} : vector<16x256xbf16>, vector<256x512xbf16>, vector<16x512xf32> -> vector<16x512xf32>
    %c0_9 = arith.constant 0 : index
    %c0_10 = arith.constant 0 : index
    %11 = vector.load %arg5[%c0_9, %c0_10] : memref<1x512xf32, #tpu.memory_space<vmem>>, vector<1x512xf32>
    %12 = vector.broadcast %11 : vector<1x512xf32> to vector<16x512xf32>
    %13 = arith.addf %10, %12 : vector<16x512xf32>
    %cst_11 = arith.constant 0.000000e+00 : f32
    %14 = vector.broadcast %cst_11 : f32 to vector<16x512xf32>
    %15 = arith.maximumf %13, %14 : vector<16x512xf32>
    %16 = arith.truncf %15 : vector<16x512xf32> to vector<16x512xbf16>
    %c0_12 = arith.constant 0 : index
    %c0_13 = arith.constant 0 : index
    %17 = vector.load %arg6[%c0_12, %c0_13] : memref<512x1024xbf16, #tpu.memory_space<vmem>>, vector<512x1024xbf16>
    %cst_14 = arith.constant dense<0.000000e+00> : vector<16x1024xf32>
    %18 = tpu.matmul %16, %17, %cst_14 {dimension_numbers = #tpu.dot_dimension_numbers<[1], [0], [0], [1], [0, 0, 1, 1], [], []>} : vector<16x512xbf16>, vector<512x1024xbf16>, vector<16x1024xf32> -> vector<16x1024xf32>
    %c0_15 = arith.constant 0 : index
    %c0_16 = arith.constant 0 : index
    %19 = vector.load %arg7[%c0_15, %c0_16] : memref<1x1024xf32, #tpu.memory_space<vmem>>, vector<1x1024xf32>
    %20 = vector.broadcast %19 : vector<1x1024xf32> to vector<16x1024xf32>
    %21 = arith.addf %18, %20 : vector<16x1024xf32>
    %cst_17 = arith.constant 0.000000e+00 : f32
    %22 = vector.broadcast %cst_17 : f32 to vector<16x1024xf32>
    %23 = arith.maximumf %21, %22 : vector<16x1024xf32>
    %24 = arith.truncf %23 : vector<16x1024xf32> to vector<16x1024xbf16>
    %c0_18 = arith.constant 0 : index
    %c0_19 = arith.constant 0 : index
    %25 = vector.load %arg8[%c0_18, %c0_19] : memref<1024x784xbf16, #tpu.memory_space<vmem>>, vector<1024x784xbf16>
    %cst_20 = arith.constant dense<0.000000e+00> : vector<16x784xf32>
    %26 = tpu.matmul %24, %25, %cst_20 {dimension_numbers = #tpu.dot_dimension_numbers<[1], [0], [0], [1], [0, 0, 1, 1], [], []>} : vector<16x1024xbf16>, vector<1024x784xbf16>, vector<16x784xf32> -> vector<16x784xf32>
    %c0_21 = arith.constant 0 : index
    %c0_22 = arith.constant 0 : index
    %27 = vector.load %arg9[%c0_21, %c0_22] : memref<1x784xf32, #tpu.memory_space<vmem>>, vector<1x784xf32>
    %28 = vector.broadcast %27 : vector<1x784xf32> to vector<16x784xf32>
    %29 = arith.addf %26, %28 : vector<16x784xf32>
    %30 = math.tanh %29 : vector<16x784xf32>
    %31 = arith.truncf %30 : vector<16x784xf32> to vector<16x784xbf16>
    %c0_23 = arith.constant 0 : index
    %c0_24 = arith.constant 0 : index
    %32 = vector.load %arg10[%c0_23, %c0_24] : memref<16x784xbf16, #tpu.memory_space<vmem>>, vector<16x784xbf16>
    tpu.vector_store %arg10[%c0_23, %c0_24], %31 {strides = array<i32>} : memref<16x784xbf16, #tpu.memory_space<vmem>>, vector<16x784xbf16>,
    return
  }
  func.func @transform_0(%arg0: i32) -> (i32, i32) {
    %c0_i32 = arith.constant 0 : i32
    %c0_i32_0 = arith.constant 0 : i32
    return %arg0, %c0_i32 : i32, i32
  }
  func.func @transform_1(%arg0: i32) -> (i32, i32) {
    %c0_i32 = arith.constant 0 : i32
    %c0_i32_0 = arith.constant 0 : i32
    %c0_i32_1 = arith.constant 0 : i32
    return %c0_i32, %c0_i32_0 : i32, i32
  }
  func.func @transform_2(%arg0: i32) -> (i32, i32) {
    %c0_i32 = arith.constant 0 : i32
    %c0_i32_0 = arith.constant 0 : i32
    %c0_i32_1 = arith.constant 0 : i32
    return %c0_i32, %c0_i32_0 : i32, i32
  }
  func.func @transform_3(%arg0: i32) -> (i32, i32) {
    %c0_i32 = arith.constant 0 : i32
    %c0_i32_0 = arith.constant 0 : i32
    %c0_i32_1 = arith.constant 0 : i32
    return %c0_i32, %c0_i32_0 : i32, i32
  }
  func.func @transform_4(%arg0: i32) -> (i32, i32) {
    %c0_i32 = arith.constant 0 : i32
    %c0_i32_0 = arith.constant 0 : i32
    %c0_i32_1 = arith.constant 0 : i32
    return %c0_i32, %c0_i32_0 : i32, i32
  }
  func.func @transform_5(%arg0: i32) -> (i32, i32) {
    %c0_i32 = arith.constant 0 : i32
    %c0_i32_0 = arith.constant 0 : i32
    %c0_i32_1 = arith.constant 0 : i32
    return %c0_i32, %c0_i32_0 : i32, i32
  }
  func.func @transform_6(%arg0: i32) -> (i32, i32) {
    %c0_i32 = arith.constant 0 : i32
    %c0_i32_0 = arith.constant 0 : i32
    %c0_i32_1 = arith.constant 0 : i32
    return %c0_i32, %c0_i32_0 : i32, i32
  }
  func.func @transform_7(%arg0: i32) -> (i32, i32) {
    %c0_i32 = arith.constant 0 : i32
    %c0_i32_0 = arith.constant 0 : i32
    %c0_i32_1 = arith.constant 0 : i32
    return %c0_i32, %c0_i32_0 : i32, i32
  }
  func.func @transform_8(%arg0: i32) -> (i32, i32) {
    %c0_i32 = arith.constant 0 : i32
    %c0_i32_0 = arith.constant 0 : i32
    %c0_i32_1 = arith.constant 0 : i32
    return %c0_i32, %c0_i32_0 : i32, i32
  }
  func.func @transform_9(%arg0: i32) -> (i32, i32) {
    %c0_i32 = arith.constant 0 : i32
    %c0_i32_0 = arith.constant 0 : i32
    return %arg0, %c0_i32 : i32, i32
  }
}

</mosaic_0001>

<llo_original>
// kernel: generator_forward.1
$region0: #{generator_forward.1}
  #allocation0 [shape = 'u32[]', space=smem, size = 0x4, offset = 0x4, fixed_abs, tag = 'smem constant byte address 0x4 - core index']
  #allocation1 [shape = 'u32[144,128]{1,0:T(1,128)}', space=vmem, size = 0x12000, scoped, tag = 'internal scratch']
  %s0 = inlined_call_operand.vmem [shape: bf16[16,128], index: 0, kind: input, shape index: {}]
  %s1 = inlined_call_operand.vmem [shape: bf16[128,256], index: 1, kind: input, shape index: {}]
  %s2 = inlined_call_operand.vmem [shape: f32[1,256], index: 2, kind: input, shape index: {}]
  %s3 = inlined_call_operand.vmem [shape: bf16[256,512], index: 3, kind: input, shape index: {}]
  %s4 = inlined_call_operand.vmem [shape: f32[1,512], index: 4, kind: input, shape index: {}]
  %s5 = inlined_call_operand.vmem [shape: bf16[512,1024], index: 5, kind: input, shape index: {}]
  %s6 = inlined_call_operand.vmem [shape: f32[1,1024], index: 6, kind: input, shape index: {}]
  %s7 = inlined_call_operand.vmem [shape: bf16[1024,784], index: 7, kind: input, shape index: {}]
  %s8 = inlined_call_operand.vmem [shape: f32[1,784], index: 8, kind: input, shape index: {}]
  %s9 = inlined_call_operand.vmem [shape: bf16[16,784], index: 9, kind: output, shape index: {}]
  %s10 = sld [smem:[#allocation0]]
  $region46: #{generator_forward.1} parent=0
    _
  %s12 = ssub.s32 1, %s10
  %s13 = scalar_select 0, %s12, %s10
  // Predicated region
  $region2: #{generator_forward.1} parent=0 // pred_check
    _
  $region3: #{generator_forward.1} parent=0 // pred_check_branch
    %15 = sbr.rel (0) target = $region5
  $region4: #{generator_forward.1} parent=0 // pred_region
    _
  $region5: #{generator_forward.1} parent=0 // pred_fallthru
    _
  // Predicated region
  $region6: #{generator_forward.1} parent=0 // pred_check
    _
  $region7: #{generator_forward.1} parent=0 // pred_check_branch
    %17 = sbr.rel (0) target = $region9
  $region8: #{generator_forward.1} parent=0 // pred_region
    _
  $region9: #{generator_forward.1} parent=0 // pred_fallthru
    _
  // Predicated region
  $region10: #{generator_forward.1} parent=0 // pred_check
    _
  $region11: #{generator_forward.1} parent=0 // pred_check_branch
    %19 = sbr.rel (0) target = $region13
  $region12: #{generator_forward.1} parent=0 // pred_region
    _
  $region13: #{generator_forward.1} parent=0 // pred_fallthru
    _
  // Predicated region
  $region14: #{generator_forward.1} parent=0 // pred_check
    _
  $region15: #{generator_forward.1} parent=0 // pred_check_branch
    %21 = sbr.rel (0) target = $region17
  $region16: #{generator_forward.1} parent=0 // pred_region
    _
  $region17: #{generator_forward.1} parent=0 // pred_fallthru
    _
  // Predicated region
  $region18: #{generator_forward.1} parent=0 // pred_check
    _
  $region19: #{generator_forward.1} parent=0 // pred_check_branch
    %23 = sbr.rel (0) target = $region21
  $region20: #{generator_forward.1} parent=0 // pred_region
    _
  $region21: #{generator_forward.1} parent=0 // pred_fallthru
    _
  // Predicated region
  $region22: #{generator_forward.1} parent=0 // pred_check
    _
  $region23: #{generator_forward.1} parent=0 // pred_check_branch
    %25 = sbr.rel (0) target = $region25
  $region24: #{generator_forward.1} parent=0 // pred_region
    _
  $region25: #{generator_forward.1} parent=0 // pred_fallthru
    _
  // Predicated region
  $region26: #{generator_forward.1} parent=0 // pred_check
    _
  $region27: #{generator_forward.1} parent=0 // pred_check_branch
    %27 = sbr.rel (0) target = $region29
  $region28: #{generator_forward.1} parent=0 // pred_region
    _
  $region29: #{generator_forward.1} parent=0 // pred_fallthru
    _
  // Predicated region
  $region30: #{generator_forward.1} parent=0 // pred_check
    _
  $region31: #{generator_forward.1} parent=0 // pred_check_branch
    %29 = sbr.rel (0) target = $region33
  $region32: #{generator_forward.1} parent=0 // pred_region
    _
  $region33: #{generator_forward.1} parent=0 // pred_fallthru
    _
  // Predicated region
  $region34: #{generator_forward.1} parent=0 // pred_check
    _
  $region35: #{generator_forward.1} parent=0 // pred_check_branch
    %31 = sbr.rel (0) target = $region37
  $region36: #{generator_forward.1} parent=0 // pred_region
    _
  $region37: #{generator_forward.1} parent=0 // pred_fallthru
    _
  %v33 = vld [vmem:[%s0] sm:$0xf]
  %v34 = vld [vmem:[%s0 + $0x4] sm:$0xf]
  %v35 = vld [vmem:[%s1] sm:$0xff]
  %v36 = vld [vmem:[%s1 + $0x8] sm:$0xff]
  %v37 = vld [vmem:[%s1 + $0x10] sm:$0xff]
  %v38 = vld [vmem:[%s1 + $0x18] sm:$0xff]
  %v39 = vld [vmem:[%s1 + $0x20] sm:$0xff]
  %v40 = vld [vmem:[%s1 + $0x28] sm:$0xff]
  %v41 = vld [vmem:[%s1 + $0x30] sm:$0xff]
  %v42 = vld [vmem:[%s1 + $0x38] sm:$0xff]
  %v43 = vld [vmem:[%s1 + $0x40] sm:$0xff]
  %v44 = vld [vmem:[%s1 + $0x48] sm:$0xff]
  %v45 = vld [vmem:[%s1 + $0x50] sm:$0xff]
  %v46 = vld [vmem:[%s1 + $0x58] sm:$0xff]
  %v47 = vld [vmem:[%s1 + $0x60] sm:$0xff]
  %v48 = vld [vmem:[%s1 + $0x68] sm:$0xff]
  %v49 = vld [vmem:[%s1 + $0x70] sm:$0xff]
  %v50 = vld [vmem:[%s1 + $0x78] sm:$0xff]
  %v51 = vld [vmem:[%s2] sm:$0x3]
  %v53 = vlaneseq
  %v54 = vshrl.u32 %v53, 7
  %v55 = vsub.s32 0, %v54
  %v56 = vrot.slane %v51, %v55
  %v57 = vlaneseq
  %v58 = vshrl.u32 %v57, 7
  %v59 = vsub.s32 1, %v58
  %v60 = vrot.slane %v51, %v59
  %v65 = vunpack.c.l.b16 %v33
  %v66 = vunpack.c.l.b16 %v34
  %v67 = vpack.c.b16 %v66, %v65
  %v85 = vunpack.c.l.b16 %v35
  %v86 = vunpack.c.h.b16 %v35
  %v87 = vunpack.c.l.b16 %v36
  %v88 = vunpack.c.h.b16 %v36
  %v89 = vunpack.c.l.b16 %v37
  %v90 = vunpack.c.h.b16 %v37
  %v91 = vunpack.c.l.b16 %v38
  %v92 = vunpack.c.h.b16 %v38
  %v93 = vunpack.c.l.b16 %v39
  %v94 = vunpack.c.h.b16 %v39
  %v95 = vunpack.c.l.b16 %v40
  %v96 = vunpack.c.h.b16 %v40
  %v97 = vunpack.c.l.b16 %v41
  %v98 = vunpack.c.h.b16 %v41
  %v99 = vunpack.c.l.b16 %v42
  %v100 = vunpack.c.h.b16 %v42
  %v101 = vunpack.c.l.b16 %v43
  %v102 = vunpack.c.h.b16 %v43
  %v103 = vunpack.c.l.b16 %v44
  %v104 = vunpack.c.h.b16 %v44
  %v105 = vunpack.c.l.b16 %v45
  %v106 = vunpack.c.h.b16 %v45
  %v107 = vunpack.c.l.b16 %v46
  %v108 = vunpack.c.h.b16 %v46
  %v109 = vunpack.c.l.b16 %v47
  %v110 = vunpack.c.h.b16 %v47
  %v111 = vunpack.c.l.b16 %v48
  %v112 = vunpack.c.h.b16 %v48
  %v113 = vunpack.c.l.b16 %v49
  %v114 = vunpack.c.h.b16 %v49
  %v115 = vunpack.c.l.b16 %v50
  %v116 = vunpack.c.h.b16 %v50
  %v117 = vpack.c.b16 %v87, %v85
  %v118 = vpack.c.b16 %v88, %v86
  %v119 = vpack.c.b16 %v91, %v89
  %v120 = vpack.c.b16 %v92, %v90
  %v121 = vpack.c.b16 %v95, %v93
  %v122 = vpack.c.b16 %v96, %v94
  %v123 = vpack.c.b16 %v99, %v97
  %v124 = vpack.c.b16 %v100, %v98
  %v125 = vpack.c.b16 %v103, %v101
  %v126 = vpack.c.b16 %v104, %v102
  %v127 = vpack.c.b16 %v107, %v105
  %v128 = vpack.c.b16 %v108, %v106
  %v129 = vpack.c.b16 %v111, %v109
  %v130 = vpack.c.b16 %v112, %v110
  %v131 = vpack.c.b16 %v115, %v113
  %v132 = vpack.c.b16 %v116, %v114
  %149 = vmatprep.subr.bf16.mxu0 %v132
  %150 = vmatpush1.bf16.msra.mxu0 %v131
  %151 = vmatprep.subr.bf16.mxu0 %v130
  %152 = vmatpush1.bf16.msra.mxu0 %v129
  %153 = vmatprep.subr.bf16.mxu0 %v128
  %154 = vmatpush1.bf16.msra.mxu0 %v127
  %155 = vmatprep.subr.bf16.mxu0 %v126
  %156 = vmatpush1.bf16.msra.mxu0 %v125
  %157 = vmatprep.subr.bf16.mxu0 %v124
  %158 = vmatpush1.bf16.msra.mxu0 %v123
  %159 = vmatprep.subr.bf16.mxu0 %v122
  %160 = vmatpush1.bf16.msra.mxu0 %v121
  %161 = vmatprep.subr.bf16.mxu0 %v120
  %162 = vmatpush1.bf16.msra.mxu0 %v119
  %163 = vmatprep.subr.bf16.mxu0 %v118
  %164 = vmatpush1.bf16.msra.mxu0 %v117
  %165 = vmatprep.subr.bf16.mxu0 0
  %166 = vmatpush2.bf16.msra.mxu0 0
  %167 = vmatprep.subr.bf16.mxu0 0
  %168 = vmatpush2.bf16.msra.mxu0 0
  %169 = vmatprep.subr.bf16.mxu0 0
  %170 = vmatpush2.bf16.msra.mxu0 0
  %171 = vmatprep.subr.bf16.mxu0 0
  %172 = vmatpush2.bf16.msra.mxu0 0
  %173 = vmatprep.subr.bf16.mxu0 0
  %174 = vmatpush2.bf16.msra.mxu0 0
  %175 = vmatprep.subr.bf16.mxu0 0
  %176 = vmatpush2.bf16.msra.mxu0 0
  %177 = vmatprep.subr.bf16.mxu0 0
  %178 = vmatpush2.bf16.msra.mxu0 0
  %179 = vmatprep.subr.bf16.mxu0 0
  %180 = vmatpush2.bf16.msra.mxu0 0
  %181 = vmatprep.mubr.bf16.mxu0 0
  %182 = vmatmul.mubr.bf16.gmra.mxu0 %v67
  %v183 = vpop.f32.mrf.mxu0
  %v184 = vadd.f32 %v56, %v183
  %v185 = vpop.f32.mrf.mxu0
  %v186 = vadd.f32 %v60, %v185
  %v187 = vpop.f32.mrf.mxu0
  %v188 = vadd.f32 %v56, %v187
  %v189 = vpop.f32.mrf.mxu0
  %v190 = vadd.f32 %v60, %v189
  %191 = vdwg.mxu0
  %v192 = vmax.f32 %v184, 0.0
  %v193 = vmax.f32 %v186, 0.0
  %v194 = vmax.f32 %v188, 0.0
  %v195 = vmax.f32 %v190, 0.0
  %v196 = vpack.c.bf16 %v194, %v192
  %v197 = vpack.c.bf16 %v195, %v193
  %v198 = vld [vmem:[%s3] sm:$0xff]
  %v199 = vld [vmem:[%s3 + $0x8] sm:$0xff]
  %v200 = vld [vmem:[%s3 + $0x10] sm:$0xff]
  %v201 = vld [vmem:[%s3 + $0x18] sm:$0xff]
  %v202 = vld [vmem:[%s3 + $0x20] sm:$0xff]
  %v203 = vld [vmem:[%s3 + $0x28] sm:$0xff]
  %v204 = vld [vmem:[%s3 + $0x30] sm:$0xff]
  %v205 = vld [vmem:[%s3 + $0x38] sm:$0xff]
  %v206 = vld [vmem:[%s3 + $0x40] sm:$0xff]
  %v207 = vld [vmem:[%s3 + $0x48] sm:$0xff]
  %v208 = vld [vmem:[%s3 + $0x50] sm:$0xff]
  %v209 = vld [vmem:[%s3 + $0x58] sm:$0xff]
  %v210 = vld [vmem:[%s3 + $0x60] sm:$0xff]
  %v211 = vld [vmem:[%s3 + $0x68] sm:$0xff]
  %v212 = vld [vmem:[%s3 + $0x70] sm:$0xff]
  %v213 = vld [vmem:[%s3 + $0x78] sm:$0xff]
  %v214 = vld [vmem:[%s3 + $0x80] sm:$0xff]
  %v215 = vld [vmem:[%s3 + $0x88] sm:$0xff]
  %v216 = vld [vmem:[%s3 + $0x90] sm:$0xff]
  %v217 = vld [vmem:[%s3 + $0x98] sm:$0xff]
  %v218 = vld [vmem:[%s3 + $0xa0] sm:$0xff]
  %v219 = vld [vmem:[%s3 + $0xa8] sm:$0xff]
  %v220 = vld [vmem:[%s3 + $0xb0] sm:$0xff]
  %v221 = vld [vmem:[%s3 + $0xb8] sm:$0xff]
  %v222 = vld [vmem:[%s3 + $0xc0] sm:$0xff]
  %v223 = vld [vmem:[%s3 + $0xc8] sm:$0xff]
  %v224 = vld [vmem:[%s3 + $0xd0] sm:$0xff]
  %v225 = vld [vmem:[%s3 + $0xd8] sm:$0xff]
  %v226 = vld [vmem:[%s3 + $0xe0] sm:$0xff]
  %v227 = vld [vmem:[%s3 + $0xe8] sm:$0xff]
  %v228 = vld [vmem:[%s3 + $0xf0] sm:$0xff]
  %v229 = vld [vmem:[%s3 + $0xf8] sm:$0xff]
  %v230 = vld [vmem:[%s3 + $0x100] sm:$0xff]
  %v231 = vld [vmem:[%s3 + $0x108] sm:$0xff]
  %v232 = vld [vmem:[%s3 + $0x110] sm:$0xff]
  %v233 = vld [vmem:[%s3 + $0x118] sm:$0xff]
  %v234 = vld [vmem:[%s3 + $0x120] sm:$0xff]
  %v235 = vld [vmem:[%s3 + $0x128] sm:$0xff]
  %v236 = vld [vmem:[%s3 + $0x130] sm:$0xff]
  %v237 = vld [vmem:[%s3 + $0x138] sm:$0xff]
  %v238 = vld [vmem:[%s3 + $0x140] sm:$0xff]
  %v239 = vld [vmem:[%s3 + $0x148] sm:$0xff]
  %v240 = vld [vmem:[%s3 + $0x150] sm:$0xff]
  %v241 = vld [vmem:[%s3 + $0x158] sm:$0xff]
  %v242 = vld [vmem:[%s3 + $0x160] sm:$0xff]
  %v243 = vld [vmem:[%s3 + $0x168] sm:$0xff]
  %v244 = vld [vmem:[%s3 + $0x170] sm:$0xff]
  %v245 = vld [vmem:[%s3 + $0x178] sm:$0xff]
  %v246 = vld [vmem:[%s3 + $0x180] sm:$0xff]
  %v247 = vld [vmem:[%s3 + $0x188] sm:$0xff]
  %v248 = vld [vmem:[%s3 + $0x190] sm:$0xff]
  %v249 = vld [vmem:[%s3 + $0x198] sm:$0xff]
  %v250 = vld [vmem:[%s3 + $0x1a0] sm:$0xff]
  %v251 = vld [vmem:[%s3 + $0x1a8] sm:$0xff]
  %v252 = vld [vmem:[%s3 + $0x1b0] sm:$0xff]
  %v253 = vld [vmem:[%s3 + $0x1b8] sm:$0xff]
  %v254 = vld [vmem:[%s3 + $0x1c0] sm:$0xff]
  %v255 = vld [vmem:[%s3 + $0x1c8] sm:$0xff]
  %v256 = vld [vmem:[%s3 + $0x1d0] sm:$0xff]
  %v257 = vld [vmem:[%s3 + $0x1d8] sm:$0xff]
  %v258 = vld [vmem:[%s3 + $0x1e0] sm:$0xff]
  %v259 = vld [vmem:[%s3 + $0x1e8] sm:$0xff]
  %v260 = vld [vmem:[%s3 + $0x1f0] sm:$0xff]
  %v261 = vld [vmem:[%s3 + $0x1f8] sm:$0xff]
  %v262 = vld [vmem:[%s4] sm:$0xf]
  %v264 = vlaneseq
  %v265 = vshrl.u32 %v264, 7
  %v266 = vsub.s32 0, %v265
  %v267 = vrot.slane %v262, %v266
  %v268 = vlaneseq
  %v269 = vshrl.u32 %v268, 7
  %v270 = vsub.s32 1, %v269
  %v271 = vrot.slane %v262, %v270
  %v272 = vlaneseq
  %v273 = vshrl.u32 %v272, 7
  %v274 = vsub.s32 2, %v273
  %v275 = vrot.slane %v262, %v274
  %v276 = vlaneseq
  %v277 = vshrl.u32 %v276, 7
  %v278 = vsub.s32 3, %v277
  %v279 = vrot.slane %v262, %v278
  %v348 = vunpack.c.l.b16 %v198
  %v349 = vunpack.c.h.b16 %v198
  %v350 = vunpack.c.l.b16 %v199
  %v351 = vunpack.c.h.b16 %v199
  %v352 = vunpack.c.l.b16 %v200
  %v353 = vunpack.c.h.b16 %v200
  %v354 = vunpack.c.l.b16 %v201
  %v355 = vunpack.c.h.b16 %v201
  %v356 = vunpack.c.l.b16 %v202
  %v357 = vunpack.c.h.b16 %v202
  %v358 = vunpack.c.l.b16 %v203
  %v359 = vunpack.c.h.b16 %v203
  %v360 = vunpack.c.l.b16 %v204
  %v361 = vunpack.c.h.b16 %v204
  %v362 = vunpack.c.l.b16 %v205
  %v363 = vunpack.c.h.b16 %v205
  %v364 = vunpack.c.l.b16 %v206
  %v365 = vunpack.c.h.b16 %v206
  %v366 = vunpack.c.l.b16 %v207
  %v367 = vunpack.c.h.b16 %v207
  %v368 = vunpack.c.l.b16 %v208
  %v369 = vunpack.c.h.b16 %v208
  %v370 = vunpack.c.l.b16 %v209
  %v371 = vunpack.c.h.b16 %v209
  %v372 = vunpack.c.l.b16 %v210
  %v373 = vunpack.c.h.b16 %v210
  %v374 = vunpack.c.l.b16 %v211
  %v375 = vunpack.c.h.b16 %v211
  %v376 = vunpack.c.l.b16 %v212
  %v377 = vunpack.c.h.b16 %v212
  %v378 = vunpack.c.l.b16 %v213
  %v379 = vunpack.c.h.b16 %v213
  %v380 = vunpack.c.l.b16 %v214
  %v381 = vunpack.c.h.b16 %v214
  %v382 = vunpack.c.l.b16 %v215
  %v383 = vunpack.c.h.b16 %v215
  %v384 = vunpack.c.l.b16 %v216
  %v385 = vunpack.c.h.b16 %v216
  %v386 = vunpack.c.l.b16 %v217
  %v387 = vunpack.c.h.b16 %v217
  %v388 = vunpack.c.l.b16 %v218
  %v389 = vunpack.c.h.b16 %v218
  %v390 = vunpack.c.l.b16 %v219
  %v391 = vunpack.c.h.b16 %v219
  %v392 = vunpack.c.l.b16 %v220
  %v393 = vunpack.c.h.b16 %v220
  %v394 = vunpack.c.l.b16 %v221
  %v395 = vunpack.c.h.b16 %v221
  %v396 = vunpack.c.l.b16 %v222
  %v397 = vunpack.c.h.b16 %v222
  %v398 = vunpack.c.l.b16 %v223
  %v399 = vunpack.c.h.b16 %v223
  %v400 = vunpack.c.l.b16 %v224
  %v401 = vunpack.c.h.b16 %v224
  %v402 = vunpack.c.l.b16 %v225
  %v403 = vunpack.c.h.b16 %v225
  %v404 = vunpack.c.l.b16 %v226
  %v405 = vunpack.c.h.b16 %v226
  %v406 = vunpack.c.l.b16 %v227
  %v407 = vunpack.c.h.b16 %v227
  %v408 = vunpack.c.l.b16 %v228
  %v409 = vunpack.c.h.b16 %v228
  %v410 = vunpack.c.l.b16 %v229
  %v411 = vunpack.c.h.b16 %v229
  %v412 = vunpack.c.l.b16 %v230
  %v413 = vunpack.c.h.b16 %v230
  %v414 = vunpack.c.l.b16 %v231
  %v415 = vunpack.c.h.b16 %v231
  %v416 = vunpack.c.l.b16 %v232
  %v417 = vunpack.c.h.b16 %v232
  %v418 = vunpack.c.l.b16 %v233
  %v419 = vunpack.c.h.b16 %v233
  %v420 = vunpack.c.l.b16 %v234
  %v421 = vunpack.c.h.b16 %v234
  %v422 = vunpack.c.l.b16 %v235
  %v423 = vunpack.c.h.b16 %v235
  %v424 = vunpack.c.l.b16 %v236
  %v425 = vunpack.c.h.b16 %v236
  %v426 = vunpack.c.l.b16 %v237
  %v427 = vunpack.c.h.b16 %v237
  %v428 = vunpack.c.l.b16 %v238
  %v429 = vunpack.c.h.b16 %v238
  %v430 = vunpack.c.l.b16 %v239
  %v431 = vunpack.c.h.b16 %v239
  %v432 = vunpack.c.l.b16 %v240
  %v433 = vunpack.c.h.b16 %v240
  %v434 = vunpack.c.l.b16 %v241
  %v435 = vunpack.c.h.b16 %v241
  %v436 = vunpack.c.l.b16 %v242
  %v437 = vunpack.c.h.b16 %v242
  %v438 = vunpack.c.l.b16 %v243
  %v439 = vunpack.c.h.b16 %v243
  %v440 = vunpack.c.l.b16 %v244
  %v441 = vunpack.c.h.b16 %v244
  %v442 = vunpack.c.l.b16 %v245
  %v443 = vunpack.c.h.b16 %v245
  %v444 = vunpack.c.l.b16 %v246
  %v445 = vunpack.c.h.b16 %v246
  %v446 = vunpack.c.l.b16 %v247
  %v447 = vunpack.c.h.b16 %v247
  %v448 = vunpack.c.l.b16 %v248
  %v449 = vunpack.c.h.b16 %v248
  %v450 = vunpack.c.l.b16 %v249
  %v451 = vunpack.c.h.b16 %v249
  %v452 = vunpack.c.l.b16 %v250
  %v453 = vunpack.c.h.b16 %v250
  %v454 = vunpack.c.l.b16 %v251
  %v455 = vunpack.c.h.b16 %v251
  %v456 = vunpack.c.l.b16 %v252
  %v457 = vunpack.c.h.b16 %v252
  %v458 = vunpack.c.l.b16 %v253
  %v459 = vunpack.c.h.b16 %v253
  %v460 = vunpack.c.l.b16 %v254
  %v461 = vunpack.c.h.b16 %v254
  %v462 = vunpack.c.l.b16 %v255
  %v463 = vunpack.c.h.b16 %v255
  %v464 = vunpack.c.l.b16 %v256
  %v465 = vunpack.c.h.b16 %v256
  %v466 = vunpack.c.l.b16 %v257
  %v467 = vunpack.c.h.b16 %v257
  %v468 = vunpack.c.l.b16 %v258
  %v469 = vunpack.c.h.b16 %v258
  %v470 = vunpack.c.l.b16 %v259
  %v471 = vunpack.c.h.b16 %v259
  %v472 = vunpack.c.l.b16 %v260
  %v473 = vunpack.c.h.b16 %v260
  %v474 = vunpack.c.l.b16 %v261
  %v475 = vunpack.c.h.b16 %v261
  %v476 = vpack.c.b16 %v352, %v348
  %v477 = vpack.c.b16 %v353, %v349
  %v478 = vpack.c.b16 %v354, %v350
  %v479 = vpack.c.b16 %v355, %v351
  %v480 = vpack.c.b16 %v360, %v356
  %v481 = vpack.c.b16 %v361, %v357
  %v482 = vpack.c.b16 %v362, %v358
  %v483 = vpack.c.b16 %v363, %v359
  %v484 = vpack.c.b16 %v368, %v364
  %v485 = vpack.c.b16 %v369, %v365
  %v486 = vpack.c.b16 %v370, %v366
  %v487 = vpack.c.b16 %v371, %v367
  %v488 = vpack.c.b16 %v376, %v372
  %v489 = vpack.c.b16 %v377, %v373
  %v490 = vpack.c.b16 %v378, %v374
  %v491 = vpack.c.b16 %v379, %v375
  %v492 = vpack.c.b16 %v384, %v380
  %v493 = vpack.c.b16 %v385, %v381
  %v494 = vpack.c.b16 %v386, %v382
  %v495 = vpack.c.b16 %v387, %v383
  %v496 = vpack.c.b16 %v392, %v388
  %v497 = vpack.c.b16 %v393, %v389
  %v498 = vpack.c.b16 %v394, %v390
  %v499 = vpack.c.b16 %v395, %v391
  %v500 = vpack.c.b16 %v400, %v396
  %v501 = vpack.c.b16 %v401, %v397
  %v502 = vpack.c.b16 %v402, %v398
  %v503 = vpack.c.b16 %v403, %v399
  %v504 = vpack.c.b16 %v408, %v404
  %v505 = vpack.c.b16 %v409, %v405
  %v506 = vpack.c.b16 %v410, %v406
  %v507 = vpack.c.b16 %v411, %v407
  %v508 = vpack.c.b16 %v416, %v412
  %v509 = vpack.c.b16 %v417, %v413
  %v510 = vpack.c.b16 %v418, %v414
  %v511 = vpack.c.b16 %v419, %v415
  %v512 = vpack.c.b16 %v424, %v420
  %v513 = vpack.c.b16 %v425, %v421
  %v514 = vpack.c.b16 %v426, %v422
  %v515 = vpack.c.b16 %v427, %v423
  %v516 = vpack.c.b16 %v432, %v428
  %v517 = vpack.c.b16 %v433, %v429
  %v518 = vpack.c.b16 %v434, %v430
  %v519 = vpack.c.b16 %v435, %v431
  %v520 = vpack.c.b16 %v440, %v436
  %v521 = vpack.c.b16 %v441, %v437
  %v522 = vpack.c.b16 %v442, %v438
  %v523 = vpack.c.b16 %v443, %v439
  %v524 = vpack.c.b16 %v448, %v444
  %v525 = vpack.c.b16 %v449, %v445
  %v526 = vpack.c.b16 %v450, %v446
  %v527 = vpack.c.b16 %v451, %v447
  %v528 = vpack.c.b16 %v456, %v452
  %v529 = vpack.c.b16 %v457, %v453
  %v530 = vpack.c.b16 %v458, %v454
  %v531 = vpack.c.b16 %v459, %v455
  %v532 = vpack.c.b16 %v464, %v460
  %v533 = vpack.c.b16 %v465, %v461
  %v534 = vpack.c.b16 %v466, %v462
  %v535 = vpack.c.b16 %v467, %v463
  %v536 = vpack.c.b16 %v472, %v468
  %v537 = vpack.c.b16 %v473, %v469
  %v538 = vpack.c.b16 %v474, %v470
  %v539 = vpack.c.b16 %v475, %v471
  %604 = vmatprep.subr.bf16.mxu0 %v505
  %605 = vmatpush1.bf16.msra.mxu0 %v504
  %606 = vmatprep.subr.bf16.mxu0 %v501
  %607 = vmatpush1.bf16.msra.mxu0 %v500
  %608 = vmatprep.subr.bf16.mxu0 %v497
  %609 = vmatpush1.bf16.msra.mxu0 %v496
  %610 = vmatprep.subr.bf16.mxu0 %v493
  %611 = vmatpush1.bf16.msra.mxu0 %v492
  %612 = vmatprep.subr.bf16.mxu0 %v489
  %613 = vmatpush1.bf16.msra.mxu0 %v488
  %614 = vmatprep.subr.bf16.mxu0 %v485
  %615 = vmatpush1.bf16.msra.mxu0 %v484
  %616 = vmatprep.subr.bf16.mxu0 %v481
  %617 = vmatpush1.bf16.msra.mxu0 %v480
  %618 = vmatprep.subr.bf16.mxu0 %v477
  %619 = vmatpush1.bf16.msra.mxu0 %v476
  %620 = vmatprep.subr.bf16.mxu0 %v537
  %621 = vmatpush2.bf16.msra.mxu0 %v536
  %622 = vmatprep.subr.bf16.mxu0 %v533
  %623 = vmatpush2.bf16.msra.mxu0 %v532
  %624 = vmatprep.subr.bf16.mxu0 %v529
  %625 = vmatpush2.bf16.msra.mxu0 %v528
  %626 = vmatprep.subr.bf16.mxu0 %v525
  %627 = vmatpush2.bf16.msra.mxu0 %v524
  %628 = vmatprep.subr.bf16.mxu0 %v521
  %629 = vmatpush2.bf16.msra.mxu0 %v520
  %630 = vmatprep.subr.bf16.mxu0 %v517
  %631 = vmatpush2.bf16.msra.mxu0 %v516
  %632 = vmatprep.subr.bf16.mxu0 %v513
  %633 = vmatpush2.bf16.msra.mxu0 %v512
  %634 = vmatprep.subr.bf16.mxu0 %v509
  %635 = vmatpush2.bf16.msra.mxu0 %v508
  %636 = vmatprep.mubr.bf16.mxu0 %v197
  %637 = vmatmul.mubr.bf16.gmra.mxu0 %v196
  %v638 = vpop.f32.mrf.mxu0
  %v639 = vadd.f32 %v267, %v638
  %v640 = vpop.f32.mrf.mxu0
  %v641 = vadd.f32 %v271, %v640
  %v642 = vpop.f32.mrf.mxu0
  %v643 = vadd.f32 %v267, %v642
  %v644 = vpop.f32.mrf.mxu0
  %v645 = vadd.f32 %v271, %v644
  %646 = vdwg.mxu0
  %647 = vmatprep.subr.bf16.mxu0 %v507
  %648 = vmatpush1.bf16.msra.mxu0 %v506
  %649 = vmatprep.subr.bf16.mxu0 %v503
  %650 = vmatpush1.bf16.msra.mxu0 %v502
  %651 = vmatprep.subr.bf16.mxu0 %v499
  %652 = vmatpush1.bf16.msra.mxu0 %v498
  %653 = vmatprep.subr.bf16.mxu0 %v495
  %654 = vmatpush1.bf16.msra.mxu0 %v494
  %655 = vmatprep.subr.bf16.mxu0 %v491
  %656 = vmatpush1.bf16.msra.mxu0 %v490
  %657 = vmatprep.subr.bf16.mxu0 %v487
  %658 = vmatpush1.bf16.msra.mxu0 %v486
  %659 = vmatprep.subr.bf16.mxu0 %v483
  %660 = vmatpush1.bf16.msra.mxu0 %v482
  %661 = vmatprep.subr.bf16.mxu0 %v479
  %662 = vmatpush1.bf16.msra.mxu0 %v478
  %663 = vmatprep.subr.bf16.mxu0 %v539
  %664 = vmatpush2.bf16.msra.mxu0 %v538
  %665 = vmatprep.subr.bf16.mxu0 %v535
  %666 = vmatpush2.bf16.msra.mxu0 %v534
  %667 = vmatprep.subr.bf16.mxu0 %v531
  %668 = vmatpush2.bf16.msra.mxu0 %v530
  %669 = vmatprep.subr.bf16.mxu0 %v527
  %670 = vmatpush2.bf16.msra.mxu0 %v526
  %671 = vmatprep.subr.bf16.mxu0 %v523
  %672 = vmatpush2.bf16.msra.mxu0 %v522
  %673 = vmatprep.subr.bf16.mxu0 %v519
  %674 = vmatpush2.bf16.msra.mxu0 %v518
  %675 = vmatprep.subr.bf16.mxu0 %v515
  %676 = vmatpush2.bf16.msra.mxu0 %v514
  %677 = vmatprep.subr.bf16.mxu0 %v511
  %678 = vmatpush2.bf16.msra.mxu0 %v510
  %679 = vmatprep.mubr.bf16.mxu0 %v197
  %680 = vmatmul.mubr.bf16.gmra.mxu0 %v196
  %v681 = vpop.f32.mrf.mxu0
  %v682 = vadd.f32 %v275, %v681
  %v683 = vpop.f32.mrf.mxu0
  %v684 = vadd.f32 %v279, %v683
  %v685 = vpop.f32.mrf.mxu0
  %v686 = vadd.f32 %v275, %v685
  %v687 = vpop.f32.mrf.mxu0
  %v688 = vadd.f32 %v279, %v687
  %689 = vdwg.mxu0
  %v690 = vmax.f32 %v639, 0.0
  %v691 = vmax.f32 %v641, 0.0
  %v692 = vmax.f32 %v682, 0.0
  %v693 = vmax.f32 %v684, 0.0
  %v694 = vmax.f32 %v643, 0.0
  %v695 = vmax.f32 %v645, 0.0
  %v696 = vmax.f32 %v686, 0.0
  %v697 = vmax.f32 %v688, 0.0
  %v698 = vpack.c.bf16 %v694, %v690
  %v699 = vpack.c.bf16 %v695, %v691
  %v700 = vpack.c.bf16 %v696, %v692
  %v701 = vpack.c.bf16 %v697, %v693
  %v702 = vld [vmem:[%s5] sm:$0xff]
  %v703 = vld [vmem:[%s5 + $0x8] sm:$0xff]
  %v704 = vld [vmem:[%s5 + $0x10] sm:$0xff]
  %v705 = vld [vmem:[%s5 + $0x18] sm:$0xff]
  %v706 = vld [vmem:[%s5 + $0x20] sm:$0xff]
  %v707 = vld [vmem:[%s5 + $0x28] sm:$0xff]
  %v708 = vld [vmem:[%s5 + $0x30] sm:$0xff]
  %v709 = vld [vmem:[%s5 + $0x38] sm:$0xff]
  %v710 = vld [vmem:[%s5 + $0x40] sm:$0xff]
  %v711 = vld [vmem:[%s5 + $0x48] sm:$0xff]
  %v712 = vld [vmem:[%s5 + $0x50] sm:$0xff]
  %v713 = vld [vmem:[%s5 + $0x58] sm:$0xff]
  %v714 = vld [vmem:[%s5 + $0x60] sm:$0xff]
  %v715 = vld [vmem:[%s5 + $0x68] sm:$0xff]
  %v716 = vld [vmem:[%s5 + $0x70] sm:$0xff]
  %v717 = vld [vmem:[%s5 + $0x78] sm:$0xff]
  %v718 = vld [vmem:[%s5 + $0x80] sm:$0xff]
  %v719 = vld [vmem:[%s5 + $0x88] sm:$0xff]
  %v720 = vld [vmem:[%s5 + $0x90] sm:$0xff]
  %v721 = vld [vmem:[%s5 + $0x98] sm:$0xff]
  %v722 = vld [vmem:[%s5 + $0xa0] sm:$0xff]
  %v723 = vld [vmem:[%s5 + $0xa8] sm:$0xff]
  %v724 = vld [vmem:[%s5 + $0xb0] sm:$0xff]
  %v725 = vld [vmem:[%s5 + $0xb8] sm:$0xff]
  %v726 = vld [vmem:[%s5 + $0xc0] sm:$0xff]
  %v727 = vld [vmem:[%s5 + $0xc8] sm:$0xff]
  %v728 = vld [vmem:[%s5 + $0xd0] sm:$0xff]
  %v729 = vld [vmem:[%s5 + $0xd8] sm:$0xff]
  %v730 = vld [vmem:[%s5 + $0xe0] sm:$0xff]
  %v731 = vld [vmem:[%s5 + $0xe8] sm:$0xff]
  %v732 = vld [vmem:[%s5 + $0xf0] sm:$0xff]
  %v733 = vld [vmem:[%s5 + $0xf8] sm:$0xff]
  %v734 = vld [vmem:[%s5 + $0x100] sm:$0xff]
  %v735 = vld [vmem:[%s5 + $0x108] sm:$0xff]
  %v736 = vld [vmem:[%s5 + $0x110] sm:$0xff]
  %v737 = vld [vmem:[%s5 + $0x118] sm:$0xff]
  %v738 = vld [vmem:[%s5 + $0x120] sm:$0xff]
  %v739 = vld [vmem:[%s5 + $0x128] sm:$0xff]
  %v740 = vld [vmem:[%s5 + $0x130] sm:$0xff]
  %v741 = vld [vmem:[%s5 + $0x138] sm:$0xff]
  %v742 = vld [vmem:[%s5 + $0x140] sm:$0xff]
  %v743 = vld [vmem:[%s5 + $0x148] sm:$0xff]
  %v744 = vld [vmem:[%s5 + $0x150] sm:$0xff]
  %v745 = vld [vmem:[%s5 + $0x158] sm:$0xff]
  %v746 = vld [vmem:[%s5 + $0x160] sm:$0xff]
  %v747 = vld [vmem:[%s5 + $0x168] sm:$0xff]
  %v748 = vld [vmem:[%s5 + $0x170] sm:$0xff]
  %v749 = vld [vmem:[%s5 + $0x178] sm:$0xff]
  %v750 = vld [vmem:[%s5 + $0x180] sm:$0xff]
  %v751 = vld [vmem:[%s5 + $0x188] sm:$0xff]
  %v752 = vld [vmem:[%s5 + $0x190] sm:$0xff]
  %v753 = vld [vmem:[%s5 + $0x198] sm:$0xff]
  %v754 = vld [vmem:[%s5 + $0x1a0] sm:$0xff]
  %v755 = vld [vmem:[%s5 + $0x1a8] sm:$0xff]
  %v756 = vld [vmem:[%s5 + $0x1b0] sm:$0xff]
  %v757 = vld [vmem:[%s5 + $0x1b8] sm:$0xff]
  %v758 = vld [vmem:[%s5 + $0x1c0] sm:$0xff]
  %v759 = vld [vmem:[%s5 + $0x1c8] sm:$0xff]
  %v760 = vld [vmem:[%s5 + $0x1d0] sm:$0xff]
  %v761 = vld [vmem:[%s5 + $0x1d8] sm:$0xff]
  %v762 = vld [vmem:[%s5 + $0x1e0] sm:$0xff]
  %v763 = vld [vmem:[%s5 + $0x1e8] sm:$0xff]
  %v764 = vld [vmem:[%s5 + $0x1f0] sm:$0xff]
  %v765 = vld [vmem:[%s5 + $0x1f8] sm:$0xff]
  %v766 = vld [vmem:[%s5 + $0x200] sm:$0xff]
  %v767 = vld [vmem:[%s5 + $0x208] sm:$0xff]
  %v768 = vld [vmem:[%s5 + $0x210] sm:$0xff]
  %v769 = vld [vmem:[%s5 + $0x218] sm:$0xff]
  %v770 = vld [vmem:[%s5 + $0x220] sm:$0xff]
  %v771 = vld [vmem:[%s5 + $0x228] sm:$0xff]
  %v772 = vld [vmem:[%s5 + $0x230] sm:$0xff]
  %v773 = vld [vmem:[%s5 + $0x238] sm:$0xff]
  %v774 = vld [vmem:[%s5 + $0x240] sm:$0xff]
  %v775 = vld [vmem:[%s5 + $0x248] sm:$0xff]
  %v776 = vld [vmem:[%s5 + $0x250] sm:$0xff]
  %v777 = vld [vmem:[%s5 + $0x258] sm:$0xff]
  %v778 = vld [vmem:[%s5 + $0x260] sm:$0xff]
  %v779 = vld [vmem:[%s5 + $0x268] sm:$0xff]
  %v780 = vld [vmem:[%s5 + $0x270] sm:$0xff]
  %v781 = vld [vmem:[%s5 + $0x278] sm:$0xff]
  %v782 = vld [vmem:[%s5 + $0x280] sm:$0xff]
  %v783 = vld [vmem:[%s5 + $0x288] sm:$0xff]
  %v784 = vld [vmem:[%s5 + $0x290] sm:$0xff]
  %v785 = vld [vmem:[%s5 + $0x298] sm:$0xff]
  %v786 = vld [vmem:[%s5 + $0x2a0] sm:$0xff]
  %v787 = vld [vmem:[%s5 + $0x2a8] sm:$0xff]
  %v788 = vld [vmem:[%s5 + $0x2b0] sm:$0xff]
  %v789 = vld [vmem:[%s5 + $0x2b8] sm:$0xff]
  %v790 = vld [vmem:[%s5 + $0x2c0] sm:$0xff]
  %v791 = vld [vmem:[%s5 + $0x2c8] sm:$0xff]
  %v792 = vld [vmem:[%s5 + $0x2d0] sm:$0xff]
  %v793 = vld [vmem:[%s5 + $0x2d8] sm:$0xff]
  %v794 = vld [vmem:[%s5 + $0x2e0] sm:$0xff]
  %v795 = vld [vmem:[%s5 + $0x2e8] sm:$0xff]
  %v796 = vld [vmem:[%s5 + $0x2f0] sm:$0xff]
  %v797 = vld [vmem:[%s5 + $0x2f8] sm:$0xff]
  %v798 = vld [vmem:[%s5 + $0x300] sm:$0xff]
  %v799 = vld [vmem:[%s5 + $0x308] sm:$0xff]
  %v800 = vld [vmem:[%s5 + $0x310] sm:$0xff]
  %v801 = vld [vmem:[%s5 + $0x318] sm:$0xff]
  %v802 = vld [vmem:[%s5 + $0x320] sm:$0xff]
  %v803 = vld [vmem:[%s5 + $0x328] sm:$0xff]
  %v804 = vld [vmem:[%s5 + $0x330] sm:$0xff]
  %v805 = vld [vmem:[%s5 + $0x338] sm:$0xff]
  %v806 = vld [vmem:[%s5 + $0x340] sm:$0xff]
  %v807 = vld [vmem:[%s5 + $0x348] sm:$0xff]
  %v808 = vld [vmem:[%s5 + $0x350] sm:$0xff]
  %v809 = vld [vmem:[%s5 + $0x358] sm:$0xff]
  %v810 = vld [vmem:[%s5 + $0x360] sm:$0xff]
  %v811 = vld [vmem:[%s5 + $0x368] sm:$0xff]
  %v812 = vld [vmem:[%s5 + $0x370] sm:$0xff]
  %v813 = vld [vmem:[%s5 + $0x378] sm:$0xff]
  %v814 = vld [vmem:[%s5 + $0x380] sm:$0xff]
  %v815 = vld [vmem:[%s5 + $0x388] sm:$0xff]
  %v816 = vld [vmem:[%s5 + $0x390] sm:$0xff]
  %v817 = vld [vmem:[%s5 + $0x398] sm:$0xff]
  %v818 = vld [vmem:[%s5 + $0x3a0] sm:$0xff]
  %v819 = vld [vmem:[%s5 + $0x3a8] sm:$0xff]
  %v820 = vld [vmem:[%s5 + $0x3b0] sm:$0xff]
  %v821 = vld [vmem:[%s5 + $0x3b8] sm:$0xff]
  %v822 = vld [vmem:[%s5 + $0x3c0] sm:$0xff]
  %v823 = vld [vmem:[%s5 + $0x3c8] sm:$0xff]
  %v824 = vld [vmem:[%s5 + $0x3d0] sm:$0xff]
  %v825 = vld [vmem:[%s5 + $0x3d8] sm:$0xff]
  %v826 = vld [vmem:[%s5 + $0x3e0] sm:$0xff]
  %v827 = vld [vmem:[%s5 + $0x3e8] sm:$0xff]
  %v828 = vld [vmem:[%s5 + $0x3f0] sm:$0xff]
  %v829 = vld [vmem:[%s5 + $0x3f8] sm:$0xff]
  %v830 = vld [vmem:[%s5 + $0x400] sm:$0xff]
  %v831 = vld [vmem:[%s5 + $0x408] sm:$0xff]
  %v832 = vld [vmem:[%s5 + $0x410] sm:$0xff]
  %v833 = vld [vmem:[%s5 + $0x418] sm:$0xff]
  %v834 = vld [vmem:[%s5 + $0x420] sm:$0xff]
  %v835 = vld [vmem:[%s5 + $0x428] sm:$0xff]
  %v836 = vld [vmem:[%s5 + $0x430] sm:$0xff]
  %v837 = vld [vmem:[%s5 + $0x438] sm:$0xff]
  %v838 = vld [vmem:[%s5 + $0x440] sm:$0xff]
  %v839 = vld [vmem:[%s5 + $0x448] sm:$0xff]
  %v840 = vld [vmem:[%s5 + $0x450] sm:$0xff]
  %v841 = vld [vmem:[%s5 + $0x458] sm:$0xff]
  %v842 = vld [vmem:[%s5 + $0x460] sm:$0xff]
  %v843 = vld [vmem:[%s5 + $0x468] sm:$0xff]
  %v844 = vld [vmem:[%s5 + $0x470] sm:$0xff]
  %v845 = vld [vmem:[%s5 + $0x478] sm:$0xff]
  %v846 = vld [vmem:[%s5 + $0x480] sm:$0xff]
  %v847 = vld [vmem:[%s5 + $0x488] sm:$0xff]
  %v848 = vld [vmem:[%s5 + $0x490] sm:$0xff]
  %v849 = vld [vmem:[%s5 + $0x498] sm:$0xff]
  %v850 = vld [vmem:[%s5 + $0x4a0] sm:$0xff]
  %v851 = vld [vmem:[%s5 + $0x4a8] sm:$0xff]
  %v852 = vld [vmem:[%s5 + $0x4b0] sm:$0xff]
  %v853 = vld [vmem:[%s5 + $0x4b8] sm:$0xff]
  %v854 = vld [vmem:[%s5 + $0x4c0] sm:$0xff]
  %v855 = vld [vmem:[%s5 + $0x4c8] sm:$0xff]
  %v856 = vld [vmem:[%s5 + $0x4d0] sm:$0xff]
  %v857 = vld [vmem:[%s5 + $0x4d8] sm:$0xff]
  %v858 = vld [vmem:[%s5 + $0x4e0] sm:$0xff]
  %v859 = vld [vmem:[%s5 + $0x4e8] sm:$0xff]
  %v860 = vld [vmem:[%s5 + $0x4f0] sm:$0xff]
  %v861 = vld [vmem:[%s5 + $0x4f8] sm:$0xff]
  %v862 = vld [vmem:[%s5 + $0x500] sm:$0xff]
  %v863 = vld [vmem:[%s5 + $0x508] sm:$0xff]
  %v864 = vld [vmem:[%s5 + $0x510] sm:$0xff]
  %v865 = vld [vmem:[%s5 + $0x518] sm:$0xff]
  %v866 = vld [vmem:[%s5 + $0x520] sm:$0xff]
  %v867 = vld [vmem:[%s5 + $0x528] sm:$0xff]
  %v868 = vld [vmem:[%s5 + $0x530] sm:$0xff]
  %v869 = vld [vmem:[%s5 + $0x538] sm:$0xff]
  %v870 = vld [vmem:[%s5 + $0x540] sm:$0xff]
  %v871 = vld [vmem:[%s5 + $0x548] sm:$0xff]
  %v872 = vld [vmem:[%s5 + $0x550] sm:$0xff]
  %v873 = vld [vmem:[%s5 + $0x558] sm:$0xff]
  %v874 = vld [vmem:[%s5 + $0x560] sm:$0xff]
  %v875 = vld [vmem:[%s5 + $0x568] sm:$0xff]
  %v876 = vld [vmem:[%s5 + $0x570] sm:$0xff]
  %v877 = vld [vmem:[%s5 + $0x578] sm:$0xff]
  %v878 = vld [vmem:[%s5 + $0x580] sm:$0xff]
  %v879 = vld [vmem:[%s5 + $0x588] sm:$0xff]
  %v880 = vld [vmem:[%s5 + $0x590] sm:$0xff]
  %v881 = vld [vmem:[%s5 + $0x598] sm:$0xff]
  %v882 = vld [vmem:[%s5 + $0x5a0] sm:$0xff]
  %v883 = vld [vmem:[%s5 + $0x5a8] sm:$0xff]
  %v884 = vld [vmem:[%s5 + $0x5b0] sm:$0xff]
  %v885 = vld [vmem:[%s5 + $0x5b8] sm:$0xff]
  %v886 = vld [vmem:[%s5 + $0x5c0] sm:$0xff]
  %v887 = vld [vmem:[%s5 + $0x5c8] sm:$0xff]
  %v888 = vld [vmem:[%s5 + $0x5d0] sm:$0xff]
  %v889 = vld [vmem:[%s5 + $0x5d8] sm:$0xff]
  %v890 = vld [vmem:[%s5 + $0x5e0] sm:$0xff]
  %v891 = vld [vmem:[%s5 + $0x5e8] sm:$0xff]
  %v892 = vld [vmem:[%s5 + $0x5f0] sm:$0xff]
  %v893 = vld [vmem:[%s5 + $0x5f8] sm:$0xff]
  %v894 = vld [vmem:[%s5 + $0x600] sm:$0xff]
  %v895 = vld [vmem:[%s5 + $0x608] sm:$0xff]
  %v896 = vld [vmem:[%s5 + $0x610] sm:$0xff]
  %v897 = vld [vmem:[%s5 + $0x618] sm:$0xff]
  %v898 = vld [vmem:[%s5 + $0x620] sm:$0xff]
  %v899 = vld [vmem:[%s5 + $0x628] sm:$0xff]
  %v900 = vld [vmem:[%s5 + $0x630] sm:$0xff]
  %v901 = vld [vmem:[%s5 + $0x638] sm:$0xff]
  %v902 = vld [vmem:[%s5 + $0x640] sm:$0xff]
  %v903 = vld [vmem:[%s5 + $0x648] sm:$0xff]
  %v904 = vld [vmem:[%s5 + $0x650] sm:$0xff]
  %v905 = vld [vmem:[%s5 + $0x658] sm:$0xff]
  %v906 = vld [vmem:[%s5 + $0x660] sm:$0xff]
  %v907 = vld [vmem:[%s5 + $0x668] sm:$0xff]
  %v908 = vld [vmem:[%s5 + $0x670] sm:$0xff]
  %v909 = vld [vmem:[%s5 + $0x678] sm:$0xff]
  %v910 = vld [vmem:[%s5 + $0x680] sm:$0xff]
  %v911 = vld [vmem:[%s5 + $0x688] sm:$0xff]
  %v912 = vld [vmem:[%s5 + $0x690] sm:$0xff]
  %v913 = vld [vmem:[%s5 + $0x698] sm:$0xff]
  %v914 = vld [vmem:[%s5 + $0x6a0] sm:$0xff]
  %v915 = vld [vmem:[%s5 + $0x6a8] sm:$0xff]
  %v916 = vld [vmem:[%s5 + $0x6b0] sm:$0xff]
  %v917 = vld [vmem:[%s5 + $0x6b8] sm:$0xff]
  %v918 = vld [vmem:[%s5 + $0x6c0] sm:$0xff]
  %v919 = vld [vmem:[%s5 + $0x6c8] sm:$0xff]
  %v920 = vld [vmem:[%s5 + $0x6d0] sm:$0xff]
  %v921 = vld [vmem:[%s5 + $0x6d8] sm:$0xff]
  %v922 = vld [vmem:[%s5 + $0x6e0] sm:$0xff]
  %v923 = vld [vmem:[%s5 + $0x6e8] sm:$0xff]
  %v924 = vld [vmem:[%s5 + $0x6f0] sm:$0xff]
  %v925 = vld [vmem:[%s5 + $0x6f8] sm:$0xff]
  %v926 = vld [vmem:[%s5 + $0x700] sm:$0xff]
  %v927 = vld [vmem:[%s5 + $0x708] sm:$0xff]
  %v928 = vld [vmem:[%s5 + $0x710] sm:$0xff]
  %v929 = vld [vmem:[%s5 + $0x718] sm:$0xff]
  %v930 = vld [vmem:[%s5 + $0x720] sm:$0xff]
  %v931 = vld [vmem:[%s5 + $0x728] sm:$0xff]
  %v932 = vld [vmem:[%s5 + $0x730] sm:$0xff]
  %v933 = vld [vmem:[%s5 + $0x738] sm:$0xff]
  %v934 = vld [vmem:[%s5 + $0x740] sm:$0xff]
  %v935 = vld [vmem:[%s5 + $0x748] sm:$0xff]
  %v936 = vld [vmem:[%s5 + $0x750] sm:$0xff]
  %v937 = vld [vmem:[%s5 + $0x758] sm:$0xff]
  %v938 = vld [vmem:[%s5 + $0x760] sm:$0xff]
  %v939 = vld [vmem:[%s5 + $0x768] sm:$0xff]
  %v940 = vld [vmem:[%s5 + $0x770] sm:$0xff]
  %v941 = vld [vmem:[%s5 + $0x778] sm:$0xff]
  %v942 = vld [vmem:[%s5 + $0x780] sm:$0xff]
  %v943 = vld [vmem:[%s5 + $0x788] sm:$0xff]
  %v944 = vld [vmem:[%s5 + $0x790] sm:$0xff]
  %v945 = vld [vmem:[%s5 + $0x798] sm:$0xff]
  %v946 = vld [vmem:[%s5 + $0x7a0] sm:$0xff]
  %v947 = vld [vmem:[%s5 + $0x7a8] sm:$0xff]
  %v948 = vld [vmem:[%s5 + $0x7b0] sm:$0xff]
  %v949 = vld [vmem:[%s5 + $0x7b8] sm:$0xff]
  %v950 = vld [vmem:[%s5 + $0x7c0] sm:$0xff]
  %v951 = vld [vmem:[%s5 + $0x7c8] sm:$0xff]
  %v952 = vld [vmem:[%s5 + $0x7d0] sm:$0xff]
  %v953 = vld [vmem:[%s5 + $0x7d8] sm:$0xff]
  %v954 = vld [vmem:[%s5 + $0x7e0] sm:$0xff]
  %v955 = vld [vmem:[%s5 + $0x7e8] sm:$0xff]
  %v956 = vld [vmem:[%s5 + $0x7f0] sm:$0xff]
  %v957 = vld [vmem:[%s5 + $0x7f8] sm:$0xff]
  %v958 = vld [vmem:[%s6] sm:$0xff]
  %v960 = vlaneseq
  %v961 = vshrl.u32 %v960, 7
  %v962 = vsub.s32 0, %v961
  %v963 = vrot.slane %v958, %v962
  %v964 = vlaneseq
  %v965 = vshrl.u32 %v964, 7
  %v966 = vsub.s32 1, %v965
  %v967 = vrot.slane %v958, %v966
  %v968 = vlaneseq
  %v969 = vshrl.u32 %v968, 7
  %v970 = vsub.s32 2, %v969
  %v971 = vrot.slane %v958, %v970
  %v972 = vlaneseq
  %v973 = vshrl.u32 %v972, 7
  %v974 = vsub.s32 3, %v973
  %v975 = vrot.slane %v958, %v974
  %v976 = vlaneseq
  %v977 = vshrl.u32 %v976, 7
  %v978 = vsub.s32 4, %v977
  %v979 = vrot.slane %v958, %v978
  %v980 = vlaneseq
  %v981 = vshrl.u32 %v980, 7
  %v982 = vsub.s32 5, %v981
  %v983 = vrot.slane %v958, %v982
  %v984 = vlaneseq
  %v985 = vshrl.u32 %v984, 7
  %v986 = vsub.s32 6, %v985
  %v987 = vrot.slane %v958, %v986
  %v988 = vlaneseq
  %v989 = vshrl.u32 %v988, 7
  %v990 = vsub.s32 7, %v989
  %v991 = vrot.slane %v958, %v990
  %v1256 = vunpack.c.l.b16 %v702
  %v1257 = vunpack.c.h.b16 %v702
  %v1258 = vunpack.c.l.b16 %v703
  %v1259 = vunpack.c.h.b16 %v703
  %v1260 = vunpack.c.l.b16 %v704
  %v1261 = vunpack.c.h.b16 %v704
  %v1262 = vunpack.c.l.b16 %v705
  %v1263 = vunpack.c.h.b16 %v705
  %v1264 = vunpack.c.l.b16 %v706
  %v1265 = vunpack.c.h.b16 %v706
  %v1266 = vunpack.c.l.b16 %v707
  %v1267 = vunpack.c.h.b16 %v707
  %v1268 = vunpack.c.l.b16 %v708
  %v1269 = vunpack.c.h.b16 %v708
  %v1270 = vunpack.c.l.b16 %v709
  %v1271 = vunpack.c.h.b16 %v709
  %v1272 = vunpack.c.l.b16 %v710
  %v1273 = vunpack.c.h.b16 %v710
  %v1274 = vunpack.c.l.b16 %v711
  %v1275 = vunpack.c.h.b16 %v711
  %v1276 = vunpack.c.l.b16 %v712
  %v1277 = vunpack.c.h.b16 %v712
  %v1278 = vunpack.c.l.b16 %v713
  %v1279 = vunpack.c.h.b16 %v713
  %v1280 = vunpack.c.l.b16 %v714
  %v1281 = vunpack.c.h.b16 %v714
  %v1282 = vunpack.c.l.b16 %v715
  %v1283 = vunpack.c.h.b16 %v715
  %v1284 = vunpack.c.l.b16 %v716
  %v1285 = vunpack.c.h.b16 %v716
  %v1286 = vunpack.c.l.b16 %v717
  %v1287 = vunpack.c.h.b16 %v717
  %v1288 = vunpack.c.l.b16 %v718
  %v1289 = vunpack.c.h.b16 %v718
  %v1290 = vunpack.c.l.b16 %v719
  %v1291 = vunpack.c.h.b16 %v719
  %v1292 = vunpack.c.l.b16 %v720
  %v1293 = vunpack.c.h.b16 %v720
  %v1294 = vunpack.c.l.b16 %v721
  %v1295 = vunpack.c.h.b16 %v721
  %v1296 = vunpack.c.l.b16 %v722
  %v1297 = vunpack.c.h.b16 %v722
  %v1298 = vunpack.c.l.b16 %v723
  %v1299 = vunpack.c.h.b16 %v723
  %v1300 = vunpack.c.l.b16 %v724
  %v1301 = vunpack.c.h.b16 %v724
  %v1302 = vunpack.c.l.b16 %v725
  %v1303 = vunpack.c.h.b16 %v725
  %v1304 = vunpack.c.l.b16 %v726
  %v1305 = vunpack.c.h.b16 %v726
  %v1306 = vunpack.c.l.b16 %v727
  %v1307 = vunpack.c.h.b16 %v727
  %v1308 = vunpack.c.l.b16 %v728
  %v1309 = vunpack.c.h.b16 %v728
  %v1310 = vunpack.c.l.b16 %v729
  %v1311 = vunpack.c.h.b16 %v729
  %v1312 = vunpack.c.l.b16 %v730
  %v1313 = vunpack.c.h.b16 %v730
  %v1314 = vunpack.c.l.b16 %v731
  %v1315 = vunpack.c.h.b16 %v731
  %v1316 = vunpack.c.l.b16 %v732
  %v1317 = vunpack.c.h.b16 %v732
  %v1318 = vunpack.c.l.b16 %v733
  %v1319 = vunpack.c.h.b16 %v733
  %v1320 = vunpack.c.l.b16 %v734
  %v1321 = vunpack.c.h.b16 %v734
  %v1322 = vunpack.c.l.b16 %v735
  %v1323 = vunpack.c.h.b16 %v735
  %v1324 = vunpack.c.l.b16 %v736
  %v1325 = vunpack.c.h.b16 %v736
  %v1326 = vunpack.c.l.b16 %v737
  %v1327 = vunpack.c.h.b16 %v737
  %v1328 = vunpack.c.l.b16 %v738
  %v1329 = vunpack.c.h.b16 %v738
  %v1330 = vunpack.c.l.b16 %v739
  %v1331 = vunpack.c.h.b16 %v739
  %v1332 = vunpack.c.l.b16 %v740
  %v1333 = vunpack.c.h.b16 %v740
  %v1334 = vunpack.c.l.b16 %v741
  %v1335 = vunpack.c.h.b16 %v741
  %v1336 = vunpack.c.l.b16 %v742
  %v1337 = vunpack.c.h.b16 %v742
  %v1338 = vunpack.c.l.b16 %v743
  %v1339 = vunpack.c.h.b16 %v743
  %v1340 = vunpack.c.l.b16 %v744
  %v1341 = vunpack.c.h.b16 %v744
  %v1342 = vunpack.c.l.b16 %v745
  %v1343 = vunpack.c.h.b16 %v745
  %v1344 = vunpack.c.l.b16 %v746
  %v1345 = vunpack.c.h.b16 %v746
  %v1346 = vunpack.c.l.b16 %v747
  %v1347 = vunpack.c.h.b16 %v747
  %v1348 = vunpack.c.l.b16 %v748
  %v1349 = vunpack.c.h.b16 %v748
  %v1350 = vunpack.c.l.b16 %v749
  %v1351 = vunpack.c.h.b16 %v749
  %v1352 = vunpack.c.l.b16 %v750
  %v1353 = vunpack.c.h.b16 %v750
  %v1354 = vunpack.c.l.b16 %v751
  %v1355 = vunpack.c.h.b16 %v751
  %v1356 = vunpack.c.l.b16 %v752
  %v1357 = vunpack.c.h.b16 %v752
  %v1358 = vunpack.c.l.b16 %v753
  %v1359 = vunpack.c.h.b16 %v753
  %v1360 = vunpack.c.l.b16 %v754
  %v1361 = vunpack.c.h.b16 %v754
  %v1362 = vunpack.c.l.b16 %v755
  %v1363 = vunpack.c.h.b16 %v755
  %v1364 = vunpack.c.l.b16 %v756
  %v1365 = vunpack.c.h.b16 %v756
  %v1366 = vunpack.c.l.b16 %v757
  %v1367 = vunpack.c.h.b16 %v757
  %v1368 = vunpack.c.l.b16 %v758
  %v1369 = vunpack.c.h.b16 %v758
  %v1370 = vunpack.c.l.b16 %v759
  %v1371 = vunpack.c.h.b16 %v759
  %v1372 = vunpack.c.l.b16 %v760
  %v1373 = vunpack.c.h.b16 %v760
  %v1374 = vunpack.c.l.b16 %v761
  %v1375 = vunpack.c.h.b16 %v761
  %v1376 = vunpack.c.l.b16 %v762
  %v1377 = vunpack.c.h.b16 %v762
  %v1378 = vunpack.c.l.b16 %v763
  %v1379 = vunpack.c.h.b16 %v763
  %v1380 = vunpack.c.l.b16 %v764
  %v1381 = vunpack.c.h.b16 %v764
  %v1382 = vunpack.c.l.b16 %v765
  %v1383 = vunpack.c.h.b16 %v765
  %v1384 = vunpack.c.l.b16 %v766
  %v1385 = vunpack.c.h.b16 %v766
  %v1386 = vunpack.c.l.b16 %v767
  %v1387 = vunpack.c.h.b16 %v767
  %v1388 = vunpack.c.l.b16 %v768
  %v1389 = vunpack.c.h.b16 %v768
  %v1390 = vunpack.c.l.b16 %v769
  %v1391 = vunpack.c.h.b16 %v769
  %v1392 = vunpack.c.l.b16 %v770
  %v1393 = vunpack.c.h.b16 %v770
  %v1394 = vunpack.c.l.b16 %v771
  %v1395 = vunpack.c.h.b16 %v771
  %v1396 = vunpack.c.l.b16 %v772
  %v1397 = vunpack.c.h.b16 %v772
  %v1398 = vunpack.c.l.b16 %v773
  %v1399 = vunpack.c.h.b16 %v773
  %v1400 = vunpack.c.l.b16 %v774
  %v1401 = vunpack.c.h.b16 %v774
  %v1402 = vunpack.c.l.b16 %v775
  %v1403 = vunpack.c.h.b16 %v775
  %v1404 = vunpack.c.l.b16 %v776
  %v1405 = vunpack.c.h.b16 %v776
  %v1406 = vunpack.c.l.b16 %v777
  %v1407 = vunpack.c.h.b16 %v777
  %v1408 = vunpack.c.l.b16 %v778
  %v1409 = vunpack.c.h.b16 %v778
  %v1410 = vunpack.c.l.b16 %v779
  %v1411 = vunpack.c.h.b16 %v779
  %v1412 = vunpack.c.l.b16 %v780
  %v1413 = vunpack.c.h.b16 %v780
  %v1414 = vunpack.c.l.b16 %v781
  %v1415 = vunpack.c.h.b16 %v781
  %v1416 = vunpack.c.l.b16 %v782
  %v1417 = vunpack.c.h.b16 %v782
  %v1418 = vunpack.c.l.b16 %v783
  %v1419 = vunpack.c.h.b16 %v783
  %v1420 = vunpack.c.l.b16 %v784
  %v1421 = vunpack.c.h.b16 %v784
  %v1422 = vunpack.c.l.b16 %v785
  %v1423 = vunpack.c.h.b16 %v785
  %v1424 = vunpack.c.l.b16 %v786
  %v1425 = vunpack.c.h.b16 %v786
  %v1426 = vunpack.c.l.b16 %v787
  %v1427 = vunpack.c.h.b16 %v787
  %v1428 = vunpack.c.l.b16 %v788
  %v1429 = vunpack.c.h.b16 %v788
  %v1430 = vunpack.c.l.b16 %v789
  %v1431 = vunpack.c.h.b16 %v789
  %v1432 = vunpack.c.l.b16 %v790
  %v1433 = vunpack.c.h.b16 %v790
  %v1434 = vunpack.c.l.b16 %v791
  %v1435 = vunpack.c.h.b16 %v791
  %v1436 = vunpack.c.l.b16 %v792
  %v1437 = vunpack.c.h.b16 %v792
  %v1438 = vunpack.c.l.b16 %v793
  %v1439 = vunpack.c.h.b16 %v793
  %v1440 = vunpack.c.l.b16 %v794
  %v1441 = vunpack.c.h.b16 %v794
  %v1442 = vunpack.c.l.b16 %v795
  %v1443 = vunpack.c.h.b16 %v795
  %v1444 = vunpack.c.l.b16 %v796
  %v1445 = vunpack.c.h.b16 %v796
  %v1446 = vunpack.c.l.b16 %v797
  %v1447 = vunpack.c.h.b16 %v797
  %v1448 = vunpack.c.l.b16 %v798
  %v1449 = vunpack.c.h.b16 %v798
  %v1450 = vunpack.c.l.b16 %v799
  %v1451 = vunpack.c.h.b16 %v799
  %v1452 = vunpack.c.l.b16 %v800
  %v1453 = vunpack.c.h.b16 %v800
  %v1454 = vunpack.c.l.b16 %v801
  %v1455 = vunpack.c.h.b16 %v801
  %v1456 = vunpack.c.l.b16 %v802
  %v1457 = vunpack.c.h.b16 %v802
  %v1458 = vunpack.c.l.b16 %v803
  %v1459 = vunpack.c.h.b16 %v803
  %v1460 = vunpack.c.l.b16 %v804
  %v1461 = vunpack.c.h.b16 %v804
  %v1462 = vunpack.c.l.b16 %v805
  %v1463 = vunpack.c.h.b16 %v805
  %v1464 = vunpack.c.l.b16 %v806
  %v1465 = vunpack.c.h.b16 %v806
  %v1466 = vunpack.c.l.b16 %v807
  %v1467 = vunpack.c.h.b16 %v807
  %v1468 = vunpack.c.l.b16 %v808
  %v1469 = vunpack.c.h.b16 %v808
  %v1470 = vunpack.c.l.b16 %v809
  %v1471 = vunpack.c.h.b16 %v809
  %v1472 = vunpack.c.l.b16 %v810
  %v1473 = vunpack.c.h.b16 %v810
  %v1474 = vunpack.c.l.b16 %v811
  %v1475 = vunpack.c.h.b16 %v811
  %v1476 = vunpack.c.l.b16 %v812
  %v1477 = vunpack.c.h.b16 %v812
  %v1478 = vunpack.c.l.b16 %v813
  %v1479 = vunpack.c.h.b16 %v813
  %v1480 = vunpack.c.l.b16 %v814
  %v1481 = vunpack.c.h.b16 %v814
  %v1482 = vunpack.c.l.b16 %v815
  %v1483 = vunpack.c.h.b16 %v815
  %v1484 = vunpack.c.l.b16 %v816
  %v1485 = vunpack.c.h.b16 %v816
  %v1486 = vunpack.c.l.b16 %v817
  %v1487 = vunpack.c.h.b16 %v817
  %v1488 = vunpack.c.l.b16 %v818
  %v1489 = vunpack.c.h.b16 %v818
  %v1490 = vunpack.c.l.b16 %v819
  %v1491 = vunpack.c.h.b16 %v819
  %v1492 = vunpack.c.l.b16 %v820
  %v1493 = vunpack.c.h.b16 %v820
  %v1494 = vunpack.c.l.b16 %v821
  %v1495 = vunpack.c.h.b16 %v821
  %v1496 = vunpack.c.l.b16 %v822
  %v1497 = vunpack.c.h.b16 %v822
  %v1498 = vunpack.c.l.b16 %v823
  %v1499 = vunpack.c.h.b16 %v823
  %v1500 = vunpack.c.l.b16 %v824
  %v1501 = vunpack.c.h.b16 %v824
  %v1502 = vunpack.c.l.b16 %v825
  %v1503 = vunpack.c.h.b16 %v825
  %v1504 = vunpack.c.l.b16 %v826
  %v1505 = vunpack.c.h.b16 %v826
  %v1506 = vunpack.c.l.b16 %v827
  %v1507 = vunpack.c.h.b16 %v827
  %v1508 = vunpack.c.l.b16 %v828
  %v1509 = vunpack.c.h.b16 %v828
  %v1510 = vunpack.c.l.b16 %v829
  %v1511 = vunpack.c.h.b16 %v829
  %v1512 = vunpack.c.l.b16 %v830
  %v1513 = vunpack.c.h.b16 %v830
  %v1514 = vunpack.c.l.b16 %v831
  %v1515 = vunpack.c.h.b16 %v831
  %v1516 = vunpack.c.l.b16 %v832
  %v1517 = vunpack.c.h.b16 %v832
  %v1518 = vunpack.c.l.b16 %v833
  %v1519 = vunpack.c.h.b16 %v833
  %v1520 = vunpack.c.l.b16 %v834
  %v1521 = vunpack.c.h.b16 %v834
  %v1522 = vunpack.c.l.b16 %v835
  %v1523 = vunpack.c.h.b16 %v835
  %v1524 = vunpack.c.l.b16 %v836
  %v1525 = vunpack.c.h.b16 %v836
  %v1526 = vunpack.c.l.b16 %v837
  %v1527 = vunpack.c.h.b16 %v837
  %v1528 = vunpack.c.l.b16 %v838
  %v1529 = vunpack.c.h.b16 %v838
  %v1530 = vunpack.c.l.b16 %v839
  %v1531 = vunpack.c.h.b16 %v839
  %v1532 = vunpack.c.l.b16 %v840
  %v1533 = vunpack.c.h.b16 %v840
  %v1534 = vunpack.c.l.b16 %v841
  %v1535 = vunpack.c.h.b16 %v841
  %v1536 = vunpack.c.l.b16 %v842
  %v1537 = vunpack.c.h.b16 %v842
  %v1538 = vunpack.c.l.b16 %v843
  %v1539 = vunpack.c.h.b16 %v843
  %v1540 = vunpack.c.l.b16 %v844
  %v1541 = vunpack.c.h.b16 %v844
  %v1542 = vunpack.c.l.b16 %v845
  %v1543 = vunpack.c.h.b16 %v845
  %v1544 = vunpack.c.l.b16 %v846
  %v1545 = vunpack.c.h.b16 %v846
  %v1546 = vunpack.c.l.b16 %v847
  %v1547 = vunpack.c.h.b16 %v847
  %v1548 = vunpack.c.l.b16 %v848
  %v1549 = vunpack.c.h.b16 %v848
  %v1550 = vunpack.c.l.b16 %v849
  %v1551 = vunpack.c.h.b16 %v849
  %v1552 = vunpack.c.l.b16 %v850
  %v1553 = vunpack.c.h.b16 %v850
  %v1554 = vunpack.c.l.b16 %v851
  %v1555 = vunpack.c.h.b16 %v851
  %v1556 = vunpack.c.l.b16 %v852
  %v1557 = vunpack.c.h.b16 %v852
  %v1558 = vunpack.c.l.b16 %v853
  %v1559 = vunpack.c.h.b16 %v853
  %v1560 = vunpack.c.l.b16 %v854
  %v1561 = vunpack.c.h.b16 %v854
  %v1562 = vunpack.c.l.b16 %v855
  %v1563 = vunpack.c.h.b16 %v855
  %v1564 = vunpack.c.l.b16 %v856
  %v1565 = vunpack.c.h.b16 %v856
  %v1566 = vunpack.c.l.b16 %v857
  %v1567 = vunpack.c.h.b16 %v857
  %v1568 = vunpack.c.l.b16 %v858
  %v1569 = vunpack.c.h.b16 %v858
  %v1570 = vunpack.c.l.b16 %v859
  %v1571 = vunpack.c.h.b16 %v859
  %v1572 = vunpack.c.l.b16 %v860
  %v1573 = vunpack.c.h.b16 %v860
  %v1574 = vunpack.c.l.b16 %v861
  %v1575 = vunpack.c.h.b16 %v861
  %v1576 = vunpack.c.l.b16 %v862
  %v1577 = vunpack.c.h.b16 %v862
  %v1578 = vunpack.c.l.b16 %v863
  %v1579 = vunpack.c.h.b16 %v863
  %v1580 = vunpack.c.l.b16 %v864
  %v1581 = vunpack.c.h.b16 %v864
  %v1582 = vunpack.c.l.b16 %v865
  %v1583 = vunpack.c.h.b16 %v865
  %v1584 = vunpack.c.l.b16 %v866
  %v1585 = vunpack.c.h.b16 %v866
  %v1586 = vunpack.c.l.b16 %v867
  %v1587 = vunpack.c.h.b16 %v867
  %v1588 = vunpack.c.l.b16 %v868
  %v1589 = vunpack.c.h.b16 %v868
  %v1590 = vunpack.c.l.b16 %v869
  %v1591 = vunpack.c.h.b16 %v869
  %v1592 = vunpack.c.l.b16 %v870
  %v1593 = vunpack.c.h.b16 %v870
  %v1594 = vunpack.c.l.b16 %v871
  %v1595 = vunpack.c.h.b16 %v871
  %v1596 = vunpack.c.l.b16 %v872
  %v1597 = vunpack.c.h.b16 %v872
  %v1598 = vunpack.c.l.b16 %v873
  %v1599 = vunpack.c.h.b16 %v873
  %v1600 = vunpack.c.l.b16 %v874
  %v1601 = vunpack.c.h.b16 %v874
  %v1602 = vunpack.c.l.b16 %v875
  %v1603 = vunpack.c.h.b16 %v875
  %v1604 = vunpack.c.l.b16 %v876
  %v1605 = vunpack.c.h.b16 %v876
  %v1606 = vunpack.c.l.b16 %v877
  %v1607 = vunpack.c.h.b16 %v877
  %v1608 = vunpack.c.l.b16 %v878
  %v1609 = vunpack.c.h.b16 %v878
  %v1610 = vunpack.c.l.b16 %v879
  %v1611 = vunpack.c.h.b16 %v879
  %v1612 = vunpack.c.l.b16 %v880
  %v1613 = vunpack.c.h.b16 %v880
  %v1614 = vunpack.c.l.b16 %v881
  %v1615 = vunpack.c.h.b16 %v881
  %v1616 = vunpack.c.l.b16 %v882
  %v1617 = vunpack.c.h.b16 %v882
  %v1618 = vunpack.c.l.b16 %v883
  %v1619 = vunpack.c.h.b16 %v883
  %v1620 = vunpack.c.l.b16 %v884
  %v1621 = vunpack.c.h.b16 %v884
  %v1622 = vunpack.c.l.b16 %v885
  %v1623 = vunpack.c.h.b16 %v885
  %v1624 = vunpack.c.l.b16 %v886
  %v1625 = vunpack.c.h.b16 %v886
  %v1626 = vunpack.c.l.b16 %v887
  %v1627 = vunpack.c.h.b16 %v887
  %v1628 = vunpack.c.l.b16 %v888
  %v1629 = vunpack.c.h.b16 %v888
  %v1630 = vunpack.c.l.b16 %v889
  %v1631 = vunpack.c.h.b16 %v889
  %v1632 = vunpack.c.l.b16 %v890
  %v1633 = vunpack.c.h.b16 %v890
  %v1634 = vunpack.c.l.b16 %v891
  %v1635 = vunpack.c.h.b16 %v891
  %v1636 = vunpack.c.l.b16 %v892
  %v1637 = vunpack.c.h.b16 %v892
  %v1638 = vunpack.c.l.b16 %v893
  %v1639 = vunpack.c.h.b16 %v893
  %v1640 = vunpack.c.l.b16 %v894
  %v1641 = vunpack.c.h.b16 %v894
  %v1642 = vunpack.c.l.b16 %v895
  %v1643 = vunpack.c.h.b16 %v895
  %v1644 = vunpack.c.l.b16 %v896
  %v1645 = vunpack.c.h.b16 %v896
  %v1646 = vunpack.c.l.b16 %v897
  %v1647 = vunpack.c.h.b16 %v897
  %v1648 = vunpack.c.l.b16 %v898
  %v1649 = vunpack.c.h.b16 %v898
  %v1650 = vunpack.c.l.b16 %v899
  %v1651 = vunpack.c.h.b16 %v899
  %v1652 = vunpack.c.l.b16 %v900
  %v1653 = vunpack.c.h.b16 %v900
  %v1654 = vunpack.c.l.b16 %v901
  %v1655 = vunpack.c.h.b16 %v901
  %v1656 = vunpack.c.l.b16 %v902
  %v1657 = vunpack.c.h.b16 %v902
  %v1658 = vunpack.c.l.b16 %v903
  %v1659 = vunpack.c.h.b16 %v903
  %v1660 = vunpack.c.l.b16 %v904
  %v1661 = vunpack.c.h.b16 %v904
  %v1662 = vunpack.c.l.b16 %v905
  %v1663 = vunpack.c.h.b16 %v905
  %v1664 = vunpack.c.l.b16 %v906
  %v1665 = vunpack.c.h.b16 %v906
  %v1666 = vunpack.c.l.b16 %v907
  %v1667 = vunpack.c.h.b16 %v907
  %v1668 = vunpack.c.l.b16 %v908
  %v1669 = vunpack.c.h.b16 %v908
  %v1670 = vunpack.c.l.b16 %v909
  %v1671 = vunpack.c.h.b16 %v909
  %v1672 = vunpack.c.l.b16 %v910
  %v1673 = vunpack.c.h.b16 %v910
  %v1674 = vunpack.c.l.b16 %v911
  %v1675 = vunpack.c.h.b16 %v911
  %v1676 = vunpack.c.l.b16 %v912
  %v1677 = vunpack.c.h.b16 %v912
  %v1678 = vunpack.c.l.b16 %v913
  %v1679 = vunpack.c.h.b16 %v913
  %v1680 = vunpack.c.l.b16 %v914
  %v1681 = vunpack.c.h.b16 %v914
  %v1682 = vunpack.c.l.b16 %v915
  %v1683 = vunpack.c.h.b16 %v915
  %v1684 = vunpack.c.l.b16 %v916
  %v1685 = vunpack.c.h.b16 %v916
  %v1686 = vunpack.c.l.b16 %v917
  %v1687 = vunpack.c.h.b16 %v917
  %v1688 = vunpack.c.l.b16 %v918
  %v1689 = vunpack.c.h.b16 %v918
  %v1690 = vunpack.c.l.b16 %v919
  %v1691 = vunpack.c.h.b16 %v919
  %v1692 = vunpack.c.l.b16 %v920
  %v1693 = vunpack.c.h.b16 %v920
  %v1694 = vunpack.c.l.b16 %v921
  %v1695 = vunpack.c.h.b16 %v921
  %v1696 = vunpack.c.l.b16 %v922
  %v1697 = vunpack.c.h.b16 %v922
  %v1698 = vunpack.c.l.b16 %v923
  %v1699 = vunpack.c.h.b16 %v923
  %v1700 = vunpack.c.l.b16 %v924
  %v1701 = vunpack.c.h.b16 %v924
  %v1702 = vunpack.c.l.b16 %v925
  %v1703 = vunpack.c.h.b16 %v925
  %v1704 = vunpack.c.l.b16 %v926
  %v1705 = vunpack.c.h.b16 %v926
  %v1706 = vunpack.c.l.b16 %v927
  %v1707 = vunpack.c.h.b16 %v927
  %v1708 = vunpack.c.l.b16 %v928
  %v1709 = vunpack.c.h.b16 %v928
  %v1710 = vunpack.c.l.b16 %v929
  %v1711 = vunpack.c.h.b16 %v929
  %v1712 = vunpack.c.l.b16 %v930
  %v1713 = vunpack.c.h.b16 %v930
  %v1714 = vunpack.c.l.b16 %v931
  %v1715 = vunpack.c.h.b16 %v931
  %v1716 = vunpack.c.l.b16 %v932
  %v1717 = vunpack.c.h.b16 %v932
  %v1718 = vunpack.c.l.b16 %v933
  %v1719 = vunpack.c.h.b16 %v933
  %v1720 = vunpack.c.l.b16 %v934
  %v1721 = vunpack.c.h.b16 %v934
  %v1722 = vunpack.c.l.b16 %v935
  %v1723 = vunpack.c.h.b16 %v935
  %v1724 = vunpack.c.l.b16 %v936
  %v1725 = vunpack.c.h.b16 %v936
  %v1726 = vunpack.c.l.b16 %v937
  %v1727 = vunpack.c.h.b16 %v937
  %v1728 = vunpack.c.l.b16 %v938
  %v1729 = vunpack.c.h.b16 %v938
  %v1730 = vunpack.c.l.b16 %v939
  %v1731 = vunpack.c.h.b16 %v939
  %v1732 = vunpack.c.l.b16 %v940
  %v1733 = vunpack.c.h.b16 %v940
  %v1734 = vunpack.c.l.b16 %v941
  %v1735 = vunpack.c.h.b16 %v941
  %v1736 = vunpack.c.l.b16 %v942
  %v1737 = vunpack.c.h.b16 %v942
  %v1738 = vunpack.c.l.b16 %v943
  %v1739 = vunpack.c.h.b16 %v943
  %v1740 = vunpack.c.l.b16 %v944
  %v1741 = vunpack.c.h.b16 %v944
  %v1742 = vunpack.c.l.b16 %v945
  %v1743 = vunpack.c.h.b16 %v945
  %v1744 = vunpack.c.l.b16 %v946
  %v1745 = vunpack.c.h.b16 %v946
  %v1746 = vunpack.c.l.b16 %v947
  %v1747 = vunpack.c.h.b16 %v947
  %v1748 = vunpack.c.l.b16 %v948
  %v1749 = vunpack.c.h.b16 %v948
  %v1750 = vunpack.c.l.b16 %v949
  %v1751 = vunpack.c.h.b16 %v949
  %v1752 = vunpack.c.l.b16 %v950
  %v1753 = vunpack.c.h.b16 %v950
  %v1754 = vunpack.c.l.b16 %v951
  %v1755 = vunpack.c.h.b16 %v951
  %v1756 = vunpack.c.l.b16 %v952
  %v1757 = vunpack.c.h.b16 %v952
  %v1758 = vunpack.c.l.b16 %v953
  %v1759 = vunpack.c.h.b16 %v953
  %v1760 = vunpack.c.l.b16 %v954
  %v1761 = vunpack.c.h.b16 %v954
  %v1762 = vunpack.c.l.b16 %v955
  %v1763 = vunpack.c.h.b16 %v955
  %v1764 = vunpack.c.l.b16 %v956
  %v1765 = vunpack.c.h.b16 %v956
  %v1766 = vunpack.c.l.b16 %v957
  %v1767 = vunpack.c.h.b16 %v957
  %v1768 = vpack.c.b16 %v1264, %v1256
  %v1769 = vpack.c.b16 %v1265, %v1257
  %v1770 = vpack.c.b16 %v1266, %v1258
  %v1771 = vpack.c.b16 %v1267, %v1259
  %v1772 = vpack.c.b16 %v1268, %v1260
  %v1773 = vpack.c.b16 %v1269, %v1261
  %v1774 = vpack.c.b16 %v1270, %v1262
  %v1775 = vpack.c.b16 %v1271, %v1263
  %v1776 = vpack.c.b16 %v1280, %v1272
  %v1777 = vpack.c.b16 %v1281, %v1273
  %v1778 = vpack.c.b16 %v1282, %v1274
  %v1779 = vpack.c.b16 %v1283, %v1275
  %v1780 = vpack.c.b16 %v1284, %v1276
  %v1781 = vpack.c.b16 %v1285, %v1277
  %v1782 = vpack.c.b16 %v1286, %v1278
  %v1783 = vpack.c.b16 %v1287, %v1279
  %v1784 = vpack.c.b16 %v1296, %v1288
  %v1785 = vpack.c.b16 %v1297, %v1289
  %v1786 = vpack.c.b16 %v1298, %v1290
  %v1787 = vpack.c.b16 %v1299, %v1291
  %v1788 = vpack.c.b16 %v1300, %v1292
  %v1789 = vpack.c.b16 %v1301, %v1293
  %v1790 = vpack.c.b16 %v1302, %v1294
  %v1791 = vpack.c.b16 %v1303, %v1295
  %v1792 = vpack.c.b16 %v1312, %v1304
  %v1793 = vpack.c.b16 %v1313, %v1305
  %v1794 = vpack.c.b16 %v1314, %v1306
  %v1795 = vpack.c.b16 %v1315, %v1307
  %v1796 = vpack.c.b16 %v1316, %v1308
  %v1797 = vpack.c.b16 %v1317, %v1309
  %v1798 = vpack.c.b16 %v1318, %v1310
  %v1799 = vpack.c.b16 %v1319, %v1311
  %v1800 = vpack.c.b16 %v1328, %v1320
  %v1801 = vpack.c.b16 %v1329, %v1321
  %v1802 = vpack.c.b16 %v1330, %v1322
  %v1803 = vpack.c.b16 %v1331, %v1323
  %v1804 = vpack.c.b16 %v1332, %v1324
  %v1805 = vpack.c.b16 %v1333, %v1325
  %v1806 = vpack.c.b16 %v1334, %v1326
  %v1807 = vpack.c.b16 %v1335, %v1327
  %v1808 = vpack.c.b16 %v1344, %v1336
  %v1809 = vpack.c.b16 %v1345, %v1337
  %v1810 = vpack.c.b16 %v1346, %v1338
  %v1811 = vpack.c.b16 %v1347, %v1339
  %v1812 = vpack.c.b16 %v1348, %v1340
  %v1813 = vpack.c.b16 %v1349, %v1341
  %v1814 = vpack.c.b16 %v1350, %v1342
  %v1815 = vpack.c.b16 %v1351, %v1343
  %v1816 = vpack.c.b16 %v1360, %v1352
  %v1817 = vpack.c.b16 %v1361, %v1353
  %v1818 = vpack.c.b16 %v1362, %v1354
  %v1819 = vpack.c.b16 %v1363, %v1355
  %v1820 = vpack.c.b16 %v1364, %v1356
  %v1821 = vpack.c.b16 %v1365, %v1357
  %v1822 = vpack.c.b16 %v1366, %v1358
  %v1823 = vpack.c.b16 %v1367, %v1359
  %v1824 = vpack.c.b16 %v1376, %v1368
  %v1825 = vpack.c.b16 %v1377, %v1369
  %v1826 = vpack.c.b16 %v1378, %v1370
  %v1827 = vpack.c.b16 %v1379, %v1371
  %v1828 = vpack.c.b16 %v1380, %v1372
  %v1829 = vpack.c.b16 %v1381, %v1373
  %v1830 = vpack.c.b16 %v1382, %v1374
  %v1831 = vpack.c.b16 %v1383, %v1375
  %v1832 = vpack.c.b16 %v1392, %v1384
  %v1833 = vpack.c.b16 %v1393, %v1385
  %v1834 = vpack.c.b16 %v1394, %v1386
  %v1835 = vpack.c.b16 %v1395, %v1387
  %v1836 = vpack.c.b16 %v1396, %v1388
  %v1837 = vpack.c.b16 %v1397, %v1389
  %v1838 = vpack.c.b16 %v1398, %v1390
  %v1839 = vpack.c.b16 %v1399, %v1391
  %v1840 = vpack.c.b16 %v1408, %v1400
  %v1841 = vpack.c.b16 %v1409, %v1401
  %v1842 = vpack.c.b16 %v1410, %v1402
  %v1843 = vpack.c.b16 %v1411, %v1403
  %v1844 = vpack.c.b16 %v1412, %v1404
  %v1845 = vpack.c.b16 %v1413, %v1405
  %v1846 = vpack.c.b16 %v1414, %v1406
  %v1847 = vpack.c.b16 %v1415, %v1407
  %v1848 = vpack.c.b16 %v1424, %v1416
  %v1849 = vpack.c.b16 %v1425, %v1417
  %v1850 = vpack.c.b16 %v1426, %v1418
  %v1851 = vpack.c.b16 %v1427, %v1419
  %v1852 = vpack.c.b16 %v1428, %v1420
  %v1853 = vpack.c.b16 %v1429, %v1421
  %v1854 = vpack.c.b16 %v1430, %v1422
  %v1855 = vpack.c.b16 %v1431, %v1423
  %v1856 = vpack.c.b16 %v1440, %v1432
  %v1857 = vpack.c.b16 %v1441, %v1433
  %v1858 = vpack.c.b16 %v1442, %v1434
  %v1859 = vpack.c.b16 %v1443, %v1435
  %v1860 = vpack.c.b16 %v1444, %v1436
  %v1861 = vpack.c.b16 %v1445, %v1437
  %v1862 = vpack.c.b16 %v1446, %v1438
  %v1863 = vpack.c.b16 %v1447, %v1439
  %v1864 = vpack.c.b16 %v1456, %v1448
  %v1865 = vpack.c.b16 %v1457, %v1449
  %v1866 = vpack.c.b16 %v1458, %v1450
  %v1867 = vpack.c.b16 %v1459, %v1451
  %v1868 = vpack.c.b16 %v1460, %v1452
  %v1869 = vpack.c.b16 %v1461, %v1453
  %v1870 = vpack.c.b16 %v1462, %v1454
  %v1871 = vpack.c.b16 %v1463, %v1455
  %v1872 = vpack.c.b16 %v1472, %v1464
  %v1873 = vpack.c.b16 %v1473, %v1465
  %v1874 = vpack.c.b16 %v1474, %v1466
  %v1875 = vpack.c.b16 %v1475, %v1467
  %v1876 = vpack.c.b16 %v1476, %v1468
  %v1877 = vpack.c.b16 %v1477, %v1469
  %v1878 = vpack.c.b16 %v1478, %v1470
  %v1879 = vpack.c.b16 %v1479, %v1471
  %v1880 = vpack.c.b16 %v1488, %v1480
  %v1881 = vpack.c.b16 %v1489, %v1481
  %v1882 = vpack.c.b16 %v1490, %v1482
  %v1883 = vpack.c.b16 %v1491, %v1483
  %v1884 = vpack.c.b16 %v1492, %v1484
  %v1885 = vpack.c.b16 %v1493, %v1485
  %v1886 = vpack.c.b16 %v1494, %v1486
  %v1887 = vpack.c.b16 %v1495, %v1487
  %v1888 = vpack.c.b16 %v1504, %v1496
  %v1889 = vpack.c.b16 %v1505, %v1497
  %v1890 = vpack.c.b16 %v1506, %v1498
  %v1891 = vpack.c.b16 %v1507, %v1499
  %v1892 = vpack.c.b16 %v1508, %v1500
  %v1893 = vpack.c.b16 %v1509, %v1501
  %v1894 = vpack.c.b16 %v1510, %v1502
  %v1895 = vpack.c.b16 %v1511, %v1503
  %v1896 = vpack.c.b16 %v1520, %v1512
  %v1897 = vpack.c.b16 %v1521, %v1513
  %v1898 = vpack.c.b16 %v1522, %v1514
  %v1899 = vpack.c.b16 %v1523, %v1515
  %v1900 = vpack.c.b16 %v1524, %v1516
  %v1901 = vpack.c.b16 %v1525, %v1517
  %v1902 = vpack.c.b16 %v1526, %v1518
  %v1903 = vpack.c.b16 %v1527, %v1519
  %v1904 = vpack.c.b16 %v1536, %v1528
  %v1905 = vpack.c.b16 %v1537, %v1529
  %v1906 = vpack.c.b16 %v1538, %v1530
  %v1907 = vpack.c.b16 %v1539, %v1531
  %v1908 = vpack.c.b16 %v1540, %v1532
  %v1909 = vpack.c.b16 %v1541, %v1533
  %v1910 = vpack.c.b16 %v1542, %v1534
  %v1911 = vpack.c.b16 %v1543, %v1535
  %v1912 = vpack.c.b16 %v1552, %v1544
  %v1913 = vpack.c.b16 %v1553, %v1545
  %v1914 = vpack.c.b16 %v1554, %v1546
  %v1915 = vpack.c.b16 %v1555, %v1547
  %v1916 = vpack.c.b16 %v1556, %v1548
  %v1917 = vpack.c.b16 %v1557, %v1549
  %v1918 = vpack.c.b16 %v1558, %v1550
  %v1919 = vpack.c.b16 %v1559, %v1551
  %v1920 = vpack.c.b16 %v1568, %v1560
  %v1921 = vpack.c.b16 %v1569, %v1561
  %v1922 = vpack.c.b16 %v1570, %v1562
  %v1923 = vpack.c.b16 %v1571, %v1563
  %v1924 = vpack.c.b16 %v1572, %v1564
  %v1925 = vpack.c.b16 %v1573, %v1565
  %v1926 = vpack.c.b16 %v1574, %v1566
  %v1927 = vpack.c.b16 %v1575, %v1567
  %v1928 = vpack.c.b16 %v1584, %v1576
  %v1929 = vpack.c.b16 %v1585, %v1577
  %v1930 = vpack.c.b16 %v1586, %v1578
  %v1931 = vpack.c.b16 %v1587, %v1579
  %v1932 = vpack.c.b16 %v1588, %v1580
  %v1933 = vpack.c.b16 %v1589, %v1581
  %v1934 = vpack.c.b16 %v1590, %v1582
  %v1935 = vpack.c.b16 %v1591, %v1583
  %v1936 = vpack.c.b16 %v1600, %v1592
  %v1937 = vpack.c.b16 %v1601, %v1593
  %v1938 = vpack.c.b16 %v1602, %v1594
  %v1939 = vpack.c.b16 %v1603, %v1595
  %v1940 = vpack.c.b16 %v1604, %v1596
  %v1941 = vpack.c.b16 %v1605, %v1597
  %v1942 = vpack.c.b16 %v1606, %v1598
  %v1943 = vpack.c.b16 %v1607, %v1599
  %v1944 = vpack.c.b16 %v1616, %v1608
  %v1945 = vpack.c.b16 %v1617, %v1609
  %v1946 = vpack.c.b16 %v1618, %v1610
  %v1947 = vpack.c.b16 %v1619, %v1611
  %v1948 = vpack.c.b16 %v1620, %v1612
  %v1949 = vpack.c.b16 %v1621, %v1613
  %v1950 = vpack.c.b16 %v1622, %v1614
  %v1951 = vpack.c.b16 %v1623, %v1615
  %v1952 = vpack.c.b16 %v1632, %v1624
  %v1953 = vpack.c.b16 %v1633, %v1625
  %v1954 = vpack.c.b16 %v1634, %v1626
  %v1955 = vpack.c.b16 %v1635, %v1627
  %v1956 = vpack.c.b16 %v1636, %v1628
  %v1957 = vpack.c.b16 %v1637, %v1629
  %v1958 = vpack.c.b16 %v1638, %v1630
  %v1959 = vpack.c.b16 %v1639, %v1631
  %v1960 = vpack.c.b16 %v1648, %v1640
  %v1961 = vpack.c.b16 %v1649, %v1641
  %v1962 = vpack.c.b16 %v1650, %v1642
  %v1963 = vpack.c.b16 %v1651, %v1643
  %v1964 = vpack.c.b16 %v1652, %v1644
  %v1965 = vpack.c.b16 %v1653, %v1645
  %v1966 = vpack.c.b16 %v1654, %v1646
  %v1967 = vpack.c.b16 %v1655, %v1647
  %v1968 = vpack.c.b16 %v1664, %v1656
  %v1969 = vpack.c.b16 %v1665, %v1657
  %v1970 = vpack.c.b16 %v1666, %v1658
  %v1971 = vpack.c.b16 %v1667, %v1659
  %v1972 = vpack.c.b16 %v1668, %v1660
  %v1973 = vpack.c.b16 %v1669, %v1661
  %v1974 = vpack.c.b16 %v1670, %v1662
  %v1975 = vpack.c.b16 %v1671, %v1663
  %v1976 = vpack.c.b16 %v1680, %v1672
  %v1977 = vpack.c.b16 %v1681, %v1673
  %v1978 = vpack.c.b16 %v1682, %v1674
  %v1979 = vpack.c.b16 %v1683, %v1675
  %v1980 = vpack.c.b16 %v1684, %v1676
  %v1981 = vpack.c.b16 %v1685, %v1677
  %v1982 = vpack.c.b16 %v1686, %v1678
  %v1983 = vpack.c.b16 %v1687, %v1679
  %v1984 = vpack.c.b16 %v1696, %v1688
  %v1985 = vpack.c.b16 %v1697, %v1689
  %v1986 = vpack.c.b16 %v1698, %v1690
  %v1987 = vpack.c.b16 %v1699, %v1691
  %v1988 = vpack.c.b16 %v1700, %v1692
  %v1989 = vpack.c.b16 %v1701, %v1693
  %v1990 = vpack.c.b16 %v1702, %v1694
  %v1991 = vpack.c.b16 %v1703, %v1695
  %v1992 = vpack.c.b16 %v1712, %v1704
  %v1993 = vpack.c.b16 %v1713, %v1705
  %v1994 = vpack.c.b16 %v1714, %v1706
  %v1995 = vpack.c.b16 %v1715, %v1707
  %v1996 = vpack.c.b16 %v1716, %v1708
  %v1997 = vpack.c.b16 %v1717, %v1709
  %v1998 = vpack.c.b16 %v1718, %v1710
  %v1999 = vpack.c.b16 %v1719, %v1711
  %v2000 = vpack.c.b16 %v1728, %v1720
  %v2001 = vpack.c.b16 %v1729, %v1721
  %v2002 = vpack.c.b16 %v1730, %v1722
  %v2003 = vpack.c.b16 %v1731, %v1723
  %v2004 = vpack.c.b16 %v1732, %v1724
  %v2005 = vpack.c.b16 %v1733, %v1725
  %v2006 = vpack.c.b16 %v1734, %v1726
  %v2007 = vpack.c.b16 %v1735, %v1727
  %v2008 = vpack.c.b16 %v1744, %v1736
  %v2009 = vpack.c.b16 %v1745, %v1737
  %v2010 = vpack.c.b16 %v1746, %v1738
  %v2011 = vpack.c.b16 %v1747, %v1739
  %v2012 = vpack.c.b16 %v1748, %v1740
  %v2013 = vpack.c.b16 %v1749, %v1741
  %v2014 = vpack.c.b16 %v1750, %v1742
  %v2015 = vpack.c.b16 %v1751, %v1743
  %v2016 = vpack.c.b16 %v1760, %v1752
  %v2017 = vpack.c.b16 %v1761, %v1753
  %v2018 = vpack.c.b16 %v1762, %v1754
  %v2019 = vpack.c.b16 %v1763, %v1755
  %v2020 = vpack.c.b16 %v1764, %v1756
  %v2021 = vpack.c.b16 %v1765, %v1757
  %v2022 = vpack.c.b16 %v1766, %v1758
  %v2023 = vpack.c.b16 %v1767, %v1759
  %2280 = vmatprep.subr.bf16.mxu0 %v1825
  %2281 = vmatpush1.bf16.msra.mxu0 %v1824
  %2282 = vmatprep.subr.bf16.mxu0 %v1817
  %2283 = vmatpush1.bf16.msra.mxu0 %v1816
  %2284 = vmatprep.subr.bf16.mxu0 %v1809
  %2285 = vmatpush1.bf16.msra.mxu0 %v1808
  %2286 = vmatprep.subr.bf16.mxu0 %v1801
  %2287 = vmatpush1.bf16.msra.mxu0 %v1800
  %2288 = vmatprep.subr.bf16.mxu0 %v1793
  %2289 = vmatpush1.bf16.msra.mxu0 %v1792
  %2290 = vmatprep.subr.bf16.mxu0 %v1785
  %2291 = vmatpush1.bf16.msra.mxu0 %v1784
  %2292 = vmatprep.subr.bf16.mxu0 %v1777
  %2293 = vmatpush1.bf16.msra.mxu0 %v1776
  %2294 = vmatprep.subr.bf16.mxu0 %v1769
  %2295 = vmatpush1.bf16.msra.mxu0 %v1768
  %2296 = vmatprep.subr.bf16.mxu0 %v1889
  %2297 = vmatpush2.bf16.msra.mxu0 %v1888
  %2298 = vmatprep.subr.bf16.mxu0 %v1881
  %2299 = vmatpush2.bf16.msra.mxu0 %v1880
  %2300 = vmatprep.subr.bf16.mxu0 %v1873
  %2301 = vmatpush2.bf16.msra.mxu0 %v1872
  %2302 = vmatprep.subr.bf16.mxu0 %v1865
  %2303 = vmatpush2.bf16.msra.mxu0 %v1864
  %2304 = vmatprep.subr.bf16.mxu0 %v1857
  %2305 = vmatpush2.bf16.msra.mxu0 %v1856
  %2306 = vmatprep.subr.bf16.mxu0 %v1849
  %2307 = vmatpush2.bf16.msra.mxu0 %v1848
  %2308 = vmatprep.subr.bf16.mxu0 %v1841
  %2309 = vmatpush2.bf16.msra.mxu0 %v1840
  %2310 = vmatprep.subr.bf16.mxu0 %v1833
  %2311 = vmatpush2.bf16.msra.mxu0 %v1832
  %2312 = vmatprep.mubr.bf16.mxu0 %v699
  %2313 = vmatmul.mubr.bf16.gmra.mxu0 %v698
  %v2314 = vpop.f32.mrf.mxu0
  %v2315 = vadd.f32 %v963, %v2314
  %v2316 = vpop.f32.mrf.mxu0
  %v2317 = vadd.f32 %v967, %v2316
  %v2318 = vpop.f32.mrf.mxu0
  %v2319 = vadd.f32 %v963, %v2318
  %v2320 = vpop.f32.mrf.mxu0
  %v2321 = vadd.f32 %v967, %v2320
  %2322 = vdwg.mxu0
  %2323 = vmatprep.subr.bf16.mxu0 %v1953
  %2324 = vmatpush1.bf16.msra.mxu0 %v1952
  %2325 = vmatprep.subr.bf16.mxu0 %v1945
  %2326 = vmatpush1.bf16.msra.mxu0 %v1944
  %2327 = vmatprep.subr.bf16.mxu0 %v1937
  %2328 = vmatpush1.bf16.msra.mxu0 %v1936
  %2329 = vmatprep.subr.bf16.mxu0 %v1929
  %2330 = vmatpush1.bf16.msra.mxu0 %v1928
  %2331 = vmatprep.subr.bf16.mxu0 %v1921
  %2332 = vmatpush1.bf16.msra.mxu0 %v1920
  %2333 = vmatprep.subr.bf16.mxu0 %v1913
  %2334 = vmatpush1.bf16.msra.mxu0 %v1912
  %2335 = vmatprep.subr.bf16.mxu0 %v1905
  %2336 = vmatpush1.bf16.msra.mxu0 %v1904
  %2337 = vmatprep.subr.bf16.mxu0 %v1897
  %2338 = vmatpush1.bf16.msra.mxu0 %v1896
  %2339 = vmatprep.subr.bf16.mxu0 %v2017
  %2340 = vmatpush2.bf16.msra.mxu0 %v2016
  %2341 = vmatprep.subr.bf16.mxu0 %v2009
  %2342 = vmatpush2.bf16.msra.mxu0 %v2008
  %2343 = vmatprep.subr.bf16.mxu0 %v2001
  %2344 = vmatpush2.bf16.msra.mxu0 %v2000
  %2345 = vmatprep.subr.bf16.mxu0 %v1993
  %2346 = vmatpush2.bf16.msra.mxu0 %v1992
  %2347 = vmatprep.subr.bf16.mxu0 %v1985
  %2348 = vmatpush2.bf16.msra.mxu0 %v1984
  %2349 = vmatprep.subr.bf16.mxu0 %v1977
  %2350 = vmatpush2.bf16.msra.mxu0 %v1976
  %2351 = vmatprep.subr.bf16.mxu0 %v1969
  %2352 = vmatpush2.bf16.msra.mxu0 %v1968
  %2353 = vmatprep.subr.bf16.mxu0 %v1961
  %2354 = vmatpush2.bf16.msra.mxu0 %v1960
  %2355 = vmatprep.mubr.bf16.mxu0 %v701
  %2356 = vmatmul.mubr.bf16.gmra.mxu0 %v700
  %v2357 = vpop.f32.mrf.mxu0
  %v2358 = vadd.f32 %v2315, %v2357
  %v2359 = vpop.f32.mrf.mxu0
  %v2360 = vadd.f32 %v2317, %v2359
  %v2361 = vpop.f32.mrf.mxu0
  %v2362 = vadd.f32 %v2319, %v2361
  %v2363 = vpop.f32.mrf.mxu0
  %v2364 = vadd.f32 %v2321, %v2363
  %2365 = vdwg.mxu0
  %2366 = vmatprep.subr.bf16.mxu0 %v1827
  %2367 = vmatpush1.bf16.msra.mxu0 %v1826
  %2368 = vmatprep.subr.bf16.mxu0 %v1819
  %2369 = vmatpush1.bf16.msra.mxu0 %v1818
  %2370 = vmatprep.subr.bf16.mxu0 %v1811
  %2371 = vmatpush1.bf16.msra.mxu0 %v1810
  %2372 = vmatprep.subr.bf16.mxu0 %v1803
  %2373 = vmatpush1.bf16.msra.mxu0 %v1802
  %2374 = vmatprep.subr.bf16.mxu0 %v1795
  %2375 = vmatpush1.bf16.msra.mxu0 %v1794
  %2376 = vmatprep.subr.bf16.mxu0 %v1787
  %2377 = vmatpush1.bf16.msra.mxu0 %v1786
  %2378 = vmatprep.subr.bf16.mxu0 %v1779
  %2379 = vmatpush1.bf16.msra.mxu0 %v1778
  %2380 = vmatprep.subr.bf16.mxu0 %v1771
  %2381 = vmatpush1.bf16.msra.mxu0 %v1770
  %2382 = vmatprep.subr.bf16.mxu0 %v1891
  %2383 = vmatpush2.bf16.msra.mxu0 %v1890
  %2384 = vmatprep.subr.bf16.mxu0 %v1883
  %2385 = vmatpush2.bf16.msra.mxu0 %v1882
  %2386 = vmatprep.subr.bf16.mxu0 %v1875
  %2387 = vmatpush2.bf16.msra.mxu0 %v1874
  %2388 = vmatprep.subr.bf16.mxu0 %v1867
  %2389 = vmatpush2.bf16.msra.mxu0 %v1866
  %2390 = vmatprep.subr.bf16.mxu0 %v1859
  %2391 = vmatpush2.bf16.msra.mxu0 %v1858
  %2392 = vmatprep.subr.bf16.mxu0 %v1851
  %2393 = vmatpush2.bf16.msra.mxu0 %v1850
  %2394 = vmatprep.subr.bf16.mxu0 %v1843
  %2395 = vmatpush2.bf16.msra.mxu0 %v1842
  %2396 = vmatprep.subr.bf16.mxu0 %v1835
  %2397 = vmatpush2.bf16.msra.mxu0 %v1834
  %2398 = vmatprep.mubr.bf16.mxu0 %v699
  %2399 = vmatmul.mubr.bf16.gmra.mxu0 %v698
  %v2400 = vpop.f32.mrf.mxu0
  %v2401 = vadd.f32 %v971, %v2400
  %v2402 = vpop.f32.mrf.mxu0
  %v2403 = vadd.f32 %v975, %v2402
  %v2404 = vpop.f32.mrf.mxu0
  %v2405 = vadd.f32 %v971, %v2404
  %v2406 = vpop.f32.mrf.mxu0
  %v2407 = vadd.f32 %v975, %v2406
  %2408 = vdwg.mxu0
  %2409 = vmatprep.subr.bf16.mxu0 %v1955
  %2410 = vmatpush1.bf16.msra.mxu0 %v1954
  %2411 = vmatprep.subr.bf16.mxu0 %v1947
  %2412 = vmatpush1.bf16.msra.mxu0 %v1946
  %2413 = vmatprep.subr.bf16.mxu0 %v1939
  %2414 = vmatpush1.bf16.msra.mxu0 %v1938
  %2415 = vmatprep.subr.bf16.mxu0 %v1931
  %2416 = vmatpush1.bf16.msra.mxu0 %v1930
  %2417 = vmatprep.subr.bf16.mxu0 %v1923
  %2418 = vmatpush1.bf16.msra.mxu0 %v1922
  %2419 = vmatprep.subr.bf16.mxu0 %v1915
  %2420 = vmatpush1.bf16.msra.mxu0 %v1914
  %2421 = vmatprep.subr.bf16.mxu0 %v1907
  %2422 = vmatpush1.bf16.msra.mxu0 %v1906
  %2423 = vmatprep.subr.bf16.mxu0 %v1899
  %2424 = vmatpush1.bf16.msra.mxu0 %v1898
  %2425 = vmatprep.subr.bf16.mxu0 %v2019
  %2426 = vmatpush2.bf16.msra.mxu0 %v2018
  %2427 = vmatprep.subr.bf16.mxu0 %v2011
  %2428 = vmatpush2.bf16.msra.mxu0 %v2010
  %2429 = vmatprep.subr.bf16.mxu0 %v2003
  %2430 = vmatpush2.bf16.msra.mxu0 %v2002
  %2431 = vmatprep.subr.bf16.mxu0 %v1995
  %2432 = vmatpush2.bf16.msra.mxu0 %v1994
  %2433 = vmatprep.subr.bf16.mxu0 %v1987
  %2434 = vmatpush2.bf16.msra.mxu0 %v1986
  %2435 = vmatprep.subr.bf16.mxu0 %v1979
  %2436 = vmatpush2.bf16.msra.mxu0 %v1978
  %2437 = vmatprep.subr.bf16.mxu0 %v1971
  %2438 = vmatpush2.bf16.msra.mxu0 %v1970
  %2439 = vmatprep.subr.bf16.mxu0 %v1963
  %2440 = vmatpush2.bf16.msra.mxu0 %v1962
  %2441 = vmatprep.mubr.bf16.mxu0 %v701
  %2442 = vmatmul.mubr.bf16.gmra.mxu0 %v700
  %v2443 = vpop.f32.mrf.mxu0
  %v2444 = vadd.f32 %v2401, %v2443
  %v2445 = vpop.f32.mrf.mxu0
  %v2446 = vadd.f32 %v2403, %v2445
  %v2447 = vpop.f32.mrf.mxu0
  %v2448 = vadd.f32 %v2405, %v2447
  %v2449 = vpop.f32.mrf.mxu0
  %v2450 = vadd.f32 %v2407, %v2449
  %2451 = vdwg.mxu0
  %2452 = vmatprep.subr.bf16.mxu0 %v1829
  %2453 = vmatpush1.bf16.msra.mxu0 %v1828
  %2454 = vmatprep.subr.bf16.mxu0 %v1821
  %2455 = vmatpush1.bf16.msra.mxu0 %v1820
  %2456 = vmatprep.subr.bf16.mxu0 %v1813
  %2457 = vmatpush1.bf16.msra.mxu0 %v1812
  %2458 = vmatprep.subr.bf16.mxu0 %v1805
  %2459 = vmatpush1.bf16.msra.mxu0 %v1804
  %2460 = vmatprep.subr.bf16.mxu0 %v1797
  %2461 = vmatpush1.bf16.msra.mxu0 %v1796
  %2462 = vmatprep.subr.bf16.mxu0 %v1789
  %2463 = vmatpush1.bf16.msra.mxu0 %v1788
  %2464 = vmatprep.subr.bf16.mxu0 %v1781
  %2465 = vmatpush1.bf16.msra.mxu0 %v1780
  %2466 = vmatprep.subr.bf16.mxu0 %v1773
  %2467 = vmatpush1.bf16.msra.mxu0 %v1772
  %2468 = vmatprep.subr.bf16.mxu0 %v1893
  %2469 = vmatpush2.bf16.msra.mxu0 %v1892
  %2470 = vmatprep.subr.bf16.mxu0 %v1885
  %2471 = vmatpush2.bf16.msra.mxu0 %v1884
  %2472 = vmatprep.subr.bf16.mxu0 %v1877
  %2473 = vmatpush2.bf16.msra.mxu0 %v1876
  %2474 = vmatprep.subr.bf16.mxu0 %v1869
  %2475 = vmatpush2.bf16.msra.mxu0 %v1868
  %2476 = vmatprep.subr.bf16.mxu0 %v1861
  %2477 = vmatpush2.bf16.msra.mxu0 %v1860
  %2478 = vmatprep.subr.bf16.mxu0 %v1853
  %2479 = vmatpush2.bf16.msra.mxu0 %v1852
  %2480 = vmatprep.subr.bf16.mxu0 %v1845
  %2481 = vmatpush2.bf16.msra.mxu0 %v1844
  %2482 = vmatprep.subr.bf16.mxu0 %v1837
  %2483 = vmatpush2.bf16.msra.mxu0 %v1836
  %2484 = vmatprep.mubr.bf16.mxu0 %v699
  %2485 = vmatmul.mubr.bf16.gmra.mxu0 %v698
  %v2486 = vpop.f32.mrf.mxu0
  %v2487 = vadd.f32 %v979, %v2486
  %v2488 = vpop.f32.mrf.mxu0
  %v2489 = vadd.f32 %v983, %v2488
  %v2490 = vpop.f32.mrf.mxu0
  %v2491 = vadd.f32 %v979, %v2490
  %v2492 = vpop.f32.mrf.mxu0
  %v2493 = vadd.f32 %v983, %v2492
  %2494 = vdwg.mxu0
  %2495 = vmatprep.subr.bf16.mxu0 %v1957
  %2496 = vmatpush1.bf16.msra.mxu0 %v1956
  %2497 = vmatprep.subr.bf16.mxu0 %v1949
  %2498 = vmatpush1.bf16.msra.mxu0 %v1948
  %2499 = vmatprep.subr.bf16.mxu0 %v1941
  %2500 = vmatpush1.bf16.msra.mxu0 %v1940
  %2501 = vmatprep.subr.bf16.mxu0 %v1933
  %2502 = vmatpush1.bf16.msra.mxu0 %v1932
  %2503 = vmatprep.subr.bf16.mxu0 %v1925
  %2504 = vmatpush1.bf16.msra.mxu0 %v1924
  %2505 = vmatprep.subr.bf16.mxu0 %v1917
  %2506 = vmatpush1.bf16.msra.mxu0 %v1916
  %2507 = vmatprep.subr.bf16.mxu0 %v1909
  %2508 = vmatpush1.bf16.msra.mxu0 %v1908
  %2509 = vmatprep.subr.bf16.mxu0 %v1901
  %2510 = vmatpush1.bf16.msra.mxu0 %v1900
  %2511 = vmatprep.subr.bf16.mxu0 %v2021
  %2512 = vmatpush2.bf16.msra.mxu0 %v2020
  %2513 = vmatprep.subr.bf16.mxu0 %v2013
  %2514 = vmatpush2.bf16.msra.mxu0 %v2012
  %2515 = vmatprep.subr.bf16.mxu0 %v2005
  %2516 = vmatpush2.bf16.msra.mxu0 %v2004
  %2517 = vmatprep.subr.bf16.mxu0 %v1997
  %2518 = vmatpush2.bf16.msra.mxu0 %v1996
  %2519 = vmatprep.subr.bf16.mxu0 %v1989
  %2520 = vmatpush2.bf16.msra.mxu0 %v1988
  %2521 = vmatprep.subr.bf16.mxu0 %v1981
  %2522 = vmatpush2.bf16.msra.mxu0 %v1980
  %2523 = vmatprep.subr.bf16.mxu0 %v1973
  %2524 = vmatpush2.bf16.msra.mxu0 %v1972
  %2525 = vmatprep.subr.bf16.mxu0 %v1965
  %2526 = vmatpush2.bf16.msra.mxu0 %v1964
  %2527 = vmatprep.mubr.bf16.mxu0 %v701
  %2528 = vmatmul.mubr.bf16.gmra.mxu0 %v700
  %v2529 = vpop.f32.mrf.mxu0
  %v2530 = vadd.f32 %v2487, %v2529
  %v2531 = vpop.f32.mrf.mxu0
  %v2532 = vadd.f32 %v2489, %v2531
  %v2533 = vpop.f32.mrf.mxu0
  %v2534 = vadd.f32 %v2491, %v2533
  %v2535 = vpop.f32.mrf.mxu0
  %v2536 = vadd.f32 %v2493, %v2535
  %2537 = vdwg.mxu0
  %2538 = vmatprep.subr.bf16.mxu0 %v1831
  %2539 = vmatpush1.bf16.msra.mxu0 %v1830
  %2540 = vmatprep.subr.bf16.mxu0 %v1823
  %2541 = vmatpush1.bf16.msra.mxu0 %v1822
  %2542 = vmatprep.subr.bf16.mxu0 %v1815
  %2543 = vmatpush1.bf16.msra.mxu0 %v1814
  %2544 = vmatprep.subr.bf16.mxu0 %v1807
  %2545 = vmatpush1.bf16.msra.mxu0 %v1806
  %2546 = vmatprep.subr.bf16.mxu0 %v1799
  %2547 = vmatpush1.bf16.msra.mxu0 %v1798
  %2548 = vmatprep.subr.bf16.mxu0 %v1791
  %2549 = vmatpush1.bf16.msra.mxu0 %v1790
  %2550 = vmatprep.subr.bf16.mxu0 %v1783
  %2551 = vmatpush1.bf16.msra.mxu0 %v1782
  %2552 = vmatprep.subr.bf16.mxu0 %v1775
  %2553 = vmatpush1.bf16.msra.mxu0 %v1774
  %2554 = vmatprep.subr.bf16.mxu0 %v1895
  %2555 = vmatpush2.bf16.msra.mxu0 %v1894
  %2556 = vmatprep.subr.bf16.mxu0 %v1887
  %2557 = vmatpush2.bf16.msra.mxu0 %v1886
  %2558 = vmatprep.subr.bf16.mxu0 %v1879
  %2559 = vmatpush2.bf16.msra.mxu0 %v1878
  %2560 = vmatprep.subr.bf16.mxu0 %v1871
  %2561 = vmatpush2.bf16.msra.mxu0 %v1870
  %2562 = vmatprep.subr.bf16.mxu0 %v1863
  %2563 = vmatpush2.bf16.msra.mxu0 %v1862
  %2564 = vmatprep.subr.bf16.mxu0 %v1855
  %2565 = vmatpush2.bf16.msra.mxu0 %v1854
  %2566 = vmatprep.subr.bf16.mxu0 %v1847
  %2567 = vmatpush2.bf16.msra.mxu0 %v1846
  %2568 = vmatprep.subr.bf16.mxu0 %v1839
  %2569 = vmatpush2.bf16.msra.mxu0 %v1838
  %2570 = vmatprep.mubr.bf16.mxu0 %v699
  %2571 = vmatmul.mubr.bf16.gmra.mxu0 %v698
  %v2572 = vpop.f32.mrf.mxu0
  %v2573 = vadd.f32 %v987, %v2572
  %v2574 = vpop.f32.mrf.mxu0
  %v2575 = vadd.f32 %v991, %v2574
  %v2576 = vpop.f32.mrf.mxu0
  %v2577 = vadd.f32 %v987, %v2576
  %v2578 = vpop.f32.mrf.mxu0
  %v2579 = vadd.f32 %v991, %v2578
  %2580 = vdwg.mxu0
  %2581 = vmatprep.subr.bf16.mxu0 %v1959
  %2582 = vmatpush1.bf16.msra.mxu0 %v1958
  %2583 = vmatprep.subr.bf16.mxu0 %v1951
  %2584 = vmatpush1.bf16.msra.mxu0 %v1950
  %2585 = vmatprep.subr.bf16.mxu0 %v1943
  %2586 = vmatpush1.bf16.msra.mxu0 %v1942
  %2587 = vmatprep.subr.bf16.mxu0 %v1935
  %2588 = vmatpush1.bf16.msra.mxu0 %v1934
  %2589 = vmatprep.subr.bf16.mxu0 %v1927
  %2590 = vmatpush1.bf16.msra.mxu0 %v1926
  %2591 = vmatprep.subr.bf16.mxu0 %v1919
  %2592 = vmatpush1.bf16.msra.mxu0 %v1918
  %2593 = vmatprep.subr.bf16.mxu0 %v1911
  %2594 = vmatpush1.bf16.msra.mxu0 %v1910
  %2595 = vmatprep.subr.bf16.mxu0 %v1903
  %2596 = vmatpush1.bf16.msra.mxu0 %v1902
  %2597 = vmatprep.subr.bf16.mxu0 %v2023
  %2598 = vmatpush2.bf16.msra.mxu0 %v2022
  %2599 = vmatprep.subr.bf16.mxu0 %v2015
  %2600 = vmatpush2.bf16.msra.mxu0 %v2014
  %2601 = vmatprep.subr.bf16.mxu0 %v2007
  %2602 = vmatpush2.bf16.msra.mxu0 %v2006
  %2603 = vmatprep.subr.bf16.mxu0 %v1999
  %2604 = vmatpush2.bf16.msra.mxu0 %v1998
  %2605 = vmatprep.subr.bf16.mxu0 %v1991
  %2606 = vmatpush2.bf16.msra.mxu0 %v1990
  %2607 = vmatprep.subr.bf16.mxu0 %v1983
  %2608 = vmatpush2.bf16.msra.mxu0 %v1982
  %2609 = vmatprep.subr.bf16.mxu0 %v1975
  %2610 = vmatpush2.bf16.msra.mxu0 %v1974
  %2611 = vmatprep.subr.bf16.mxu0 %v1967
  %2612 = vmatpush2.bf16.msra.mxu0 %v1966
  %2613 = vmatprep.mubr.bf16.mxu0 %v701
  %2614 = vmatmul.mubr.bf16.gmra.mxu0 %v700
  %v2615 = vpop.f32.mrf.mxu0
  %v2616 = vadd.f32 %v2573, %v2615
  %v2617 = vpop.f32.mrf.mxu0
  %v2618 = vadd.f32 %v2575, %v2617
  %v2619 = vpop.f32.mrf.mxu0
  %v2620 = vadd.f32 %v2577, %v2619
  %v2621 = vpop.f32.mrf.mxu0
  %v2622 = vadd.f32 %v2579, %v2621
  %2623 = vdwg.mxu0
  %v2624 = vmax.f32 %v2358, 0.0
  %v2625 = vmax.f32 %v2360, 0.0
  %v2626 = vmax.f32 %v2444, 0.0
  %v2627 = vmax.f32 %v2446, 0.0
  %v2628 = vmax.f32 %v2530, 0.0
  %v2629 = vmax.f32 %v2532, 0.0
  %v2630 = vmax.f32 %v2616, 0.0
  %v2631 = vmax.f32 %v2618, 0.0
  %v2632 = vmax.f32 %v2362, 0.0
  %v2633 = vmax.f32 %v2364, 0.0
  %v2634 = vmax.f32 %v2448, 0.0
  %v2635 = vmax.f32 %v2450, 0.0
  %v2636 = vmax.f32 %v2534, 0.0
  %v2637 = vmax.f32 %v2536, 0.0
  %v2638 = vmax.f32 %v2620, 0.0
  %v2639 = vmax.f32 %v2622, 0.0
  %v2640 = vpack.c.bf16 %v2632, %v2624
  %v2641 = vpack.c.bf16 %v2633, %v2625
  %v2642 = vpack.c.bf16 %v2634, %v2626
  %v2643 = vpack.c.bf16 %v2635, %v2627
  %v2644 = vpack.c.bf16 %v2636, %v2628
  %v2645 = vpack.c.bf16 %v2637, %v2629
  %v2646 = vpack.c.bf16 %v2638, %v2630
  %v2647 = vpack.c.bf16 %v2639, %v2631
  %v2648 = vld [vmem:[%s7] sm:$0xff]
  %v2649 = vld [vmem:[%s7 + $0x8] sm:$0xff]
  %v2650 = vld [vmem:[%s7 + $0x10] sm:$0xff]
  %v2651 = vld [vmem:[%s7 + $0x18] sm:$0xf]
  %v2652 = vld [vmem:[%s7 + $0x1c] sm:$0xff]
  %v2653 = vld [vmem:[%s7 + $0x24] sm:$0xff]
  %v2654 = vld [vmem:[%s7 + $0x2c] sm:$0xff]
  %v2655 = vld [vmem:[%s7 + $0x34] sm:$0xf]
  %v2656 = vld [vmem:[%s7 + $0x38] sm:$0xff]
  %v2657 = vld [vmem:[%s7 + $0x40] sm:$0xff]
  %v2658 = vld [vmem:[%s7 + $0x48] sm:$0xff]
  %v2659 = vld [vmem:[%s7 + $0x50] sm:$0xf]
  %v2660 = vld [vmem:[%s7 + $0x54] sm:$0xff]
  %v2661 = vld [vmem:[%s7 + $0x5c] sm:$0xff]
  %v2662 = vld [vmem:[%s7 + $0x64] sm:$0xff]
  %v2663 = vld [vmem:[%s7 + $0x6c] sm:$0xf]
  %v2664 = vld [vmem:[%s7 + $0x70] sm:$0xff]
  %v2665 = vld [vmem:[%s7 + $0x78] sm:$0xff]
  %v2666 = vld [vmem:[%s7 + $0x80] sm:$0xff]
  %v2667 = vld [vmem:[%s7 + $0x88] sm:$0xf]
  %v2668 = vld [vmem:[%s7 + $0x8c] sm:$0xff]
  %v2669 = vld [vmem:[%s7 + $0x94] sm:$0xff]
  %v2670 = vld [vmem:[%s7 + $0x9c] sm:$0xff]
  %v2671 = vld [vmem:[%s7 + $0xa4] sm:$0xf]
  %v2672 = vld [vmem:[%s7 + $0xa8] sm:$0xff]
  %v2673 = vld [vmem:[%s7 + $0xb0] sm:$0xff]
  %v2674 = vld [vmem:[%s7 + $0xb8] sm:$0xff]
  %v2675 = vld [vmem:[%s7 + $0xc0] sm:$0xf]
  %v2676 = vld [vmem:[%s7 + $0xc4] sm:$0xff]
  %v2677 = vld [vmem:[%s7 + $0xcc] sm:$0xff]
  %v2678 = vld [vmem:[%s7 + $0xd4] sm:$0xff]
  %v2679 = vld [vmem:[%s7 + $0xdc] sm:$0xf]
  %v2680 = vld [vmem:[%s7 + $0xe0] sm:$0xff]
  %v2681 = vld [vmem:[%s7 + $0xe8] sm:$0xff]
  %v2682 = vld [vmem:[%s7 + $0xf0] sm:$0xff]
  %v2683 = vld [vmem:[%s7 + $0xf8] sm:$0xf]
  %v2684 = vld [vmem:[%s7 + $0xfc] sm:$0xff]
  %v2685 = vld [vmem:[%s7 + $0x104] sm:$0xff]
  %v2686 = vld [vmem:[%s7 + $0x10c] sm:$0xff]
  %v2687 = vld [vmem:[%s7 + $0x114] sm:$0xf]
  %v2688 = vld [vmem:[%s7 + $0x118] sm:$0xff]
  %v2689 = vld [vmem:[%s7 + $0x120] sm:$0xff]
  %v2690 = vld [vmem:[%s7 + $0x128] sm:$0xff]
  %v2691 = vld [vmem:[%s7 + $0x130] sm:$0xf]
  %v2692 = vld [vmem:[%s7 + $0x134] sm:$0xff]
  %v2693 = vld [vmem:[%s7 + $0x13c] sm:$0xff]
  %v2694 = vld [vmem:[%s7 + $0x144] sm:$0xff]
  %v2695 = vld [vmem:[%s7 + $0x14c] sm:$0xf]
  %v2696 = vld [vmem:[%s7 + $0x150] sm:$0xff]
  %v2697 = vld [vmem:[%s7 + $0x158] sm:$0xff]
  %v2698 = vld [vmem:[%s7 + $0x160] sm:$0xff]
  %v2699 = vld [vmem:[%s7 + $0x168] sm:$0xf]
  %v2700 = vld [vmem:[%s7 + $0x16c] sm:$0xff]
  %v2701 = vld [vmem:[%s7 + $0x174] sm:$0xff]
  %v2702 = vld [vmem:[%s7 + $0x17c] sm:$0xff]
  %v2703 = vld [vmem:[%s7 + $0x184] sm:$0xf]
  %v2704 = vld [vmem:[%s7 + $0x188] sm:$0xff]
  %v2705 = vld [vmem:[%s7 + $0x190] sm:$0xff]
  %v2706 = vld [vmem:[%s7 + $0x198] sm:$0xff]
  %v2707 = vld [vmem:[%s7 + $0x1a0] sm:$0xf]
  %v2708 = vld [vmem:[%s7 + $0x1a4] sm:$0xff]
  %v2709 = vld [vmem:[%s7 + $0x1ac] sm:$0xff]
  %v2710 = vld [vmem:[%s7 + $0x1b4] sm:$0xff]
  %v2711 = vld [vmem:[%s7 + $0x1bc] sm:$0xf]
  %v2712 = vld [vmem:[%s7 + $0x1c0] sm:$0xff]
  %v2713 = vld [vmem:[%s7 + $0x1c8] sm:$0xff]
  %v2714 = vld [vmem:[%s7 + $0x1d0] sm:$0xff]
  %v2715 = vld [vmem:[%s7 + $0x1d8] sm:$0xf]
  %v2716 = vld [vmem:[%s7 + $0x1dc] sm:$0xff]
  %v2717 = vld [vmem:[%s7 + $0x1e4] sm:$0xff]
  %v2718 = vld [vmem:[%s7 + $0x1ec] sm:$0xff]
  %v2719 = vld [vmem:[%s7 + $0x1f4] sm:$0xf]
  %v2720 = vld [vmem:[%s7 + $0x1f8] sm:$0xff]
  %v2721 = vld [vmem:[%s7 + $0x200] sm:$0xff]
  %v2722 = vld [vmem:[%s7 + $0x208] sm:$0xff]
  %v2723 = vld [vmem:[%s7 + $0x210] sm:$0xf]
  %v2724 = vld [vmem:[%s7 + $0x214] sm:$0xff]
  %v2725 = vld [vmem:[%s7 + $0x21c] sm:$0xff]
  %v2726 = vld [vmem:[%s7 + $0x224] sm:$0xff]
  %v2727 = vld [vmem:[%s7 + $0x22c] sm:$0xf]
  %v2728 = vld [vmem:[%s7 + $0x230] sm:$0xff]
  %v2729 = vld [vmem:[%s7 + $0x238] sm:$0xff]
  %v2730 = vld [vmem:[%s7 + $0x240] sm:$0xff]
  %v2731 = vld [vmem:[%s7 + $0x248] sm:$0xf]
  %v2732 = vld [vmem:[%s7 + $0x24c] sm:$0xff]
  %v2733 = vld [vmem:[%s7 + $0x254] sm:$0xff]
  %v2734 = vld [vmem:[%s7 + $0x25c] sm:$0xff]
  %v2735 = vld [vmem:[%s7 + $0x264] sm:$0xf]
  %v2736 = vld [vmem:[%s7 + $0x268] sm:$0xff]
  %v2737 = vld [vmem:[%s7 + $0x270] sm:$0xff]
  %v2738 = vld [vmem:[%s7 + $0x278] sm:$0xff]
  %v2739 = vld [vmem:[%s7 + $0x280] sm:$0xf]
  %v2740 = vld [vmem:[%s7 + $0x284] sm:$0xff]
  %v2741 = vld [vmem:[%s7 + $0x28c] sm:$0xff]
  %v2742 = vld [vmem:[%s7 + $0x294] sm:$0xff]
  %v2743 = vld [vmem:[%s7 + $0x29c] sm:$0xf]
  %v2744 = vld [vmem:[%s7 + $0x2a0] sm:$0xff]
  %v2745 = vld [vmem:[%s7 + $0x2a8] sm:$0xff]
  %v2746 = vld [vmem:[%s7 + $0x2b0] sm:$0xff]
  %v2747 = vld [vmem:[%s7 + $0x2b8] sm:$0xf]
  %v2748 = vld [vmem:[%s7 + $0x2bc] sm:$0xff]
  %v2749 = vld [vmem:[%s7 + $0x2c4] sm:$0xff]
  %v2750 = vld [vmem:[%s7 + $0x2cc] sm:$0xff]
  %v2751 = vld [vmem:[%s7 + $0x2d4] sm:$0xf]
  %v2752 = vld [vmem:[%s7 + $0x2d8] sm:$0xff]
  %v2753 = vld [vmem:[%s7 + $0x2e0] sm:$0xff]
  %v2754 = vld [vmem:[%s7 + $0x2e8] sm:$0xff]
  %v2755 = vld [vmem:[%s7 + $0x2f0] sm:$0xf]
  %v2756 = vld [vmem:[%s7 + $0x2f4] sm:$0xff]
  %v2757 = vld [vmem:[%s7 + $0x2fc] sm:$0xff]
  %v2758 = vld [vmem:[%s7 + $0x304] sm:$0xff]
  %v2759 = vld [vmem:[%s7 + $0x30c] sm:$0xf]
  %v2760 = vld [vmem:[%s7 + $0x310] sm:$0xff]
  %v2761 = vld [vmem:[%s7 + $0x318] sm:$0xff]
  %v2762 = vld [vmem:[%s7 + $0x320] sm:$0xff]
  %v2763 = vld [vmem:[%s7 + $0x328] sm:$0xf]
  %v2764 = vld [vmem:[%s7 + $0x32c] sm:$0xff]
  %v2765 = vld [vmem:[%s7 + $0x334] sm:$0xff]
  %v2766 = vld [vmem:[%s7 + $0x33c] sm:$0xff]
  %v2767 = vld [vmem:[%s7 + $0x344] sm:$0xf]
  %v2768 = vld [vmem:[%s7 + $0x348] sm:$0xff]
  %v2769 = vld [vmem:[%s7 + $0x350] sm:$0xff]
  %v2770 = vld [vmem:[%s7 + $0x358] sm:$0xff]
  %v2771 = vld [vmem:[%s7 + $0x360] sm:$0xf]
  %v2772 = vld [vmem:[%s7 + $0x364] sm:$0xff]
  %v2773 = vld [vmem:[%s7 + $0x36c] sm:$0xff]
  %v2774 = vld [vmem:[%s7 + $0x374] sm:$0xff]
  %v2775 = vld [vmem:[%s7 + $0x37c] sm:$0xf]
  %v2776 = vld [vmem:[%s7 + $0x380] sm:$0xff]
  %v2777 = vld [vmem:[%s7 + $0x388] sm:$0xff]
  %v2778 = vld [vmem:[%s7 + $0x390] sm:$0xff]
  %v2779 = vld [vmem:[%s7 + $0x398] sm:$0xf]
  %v2780 = vld [vmem:[%s7 + $0x39c] sm:$0xff]
  %v2781 = vld [vmem:[%s7 + $0x3a4] sm:$0xff]
  %v2782 = vld [vmem:[%s7 + $0x3ac] sm:$0xff]
  %v2783 = vld [vmem:[%s7 + $0x3b4] sm:$0xf]
  %v2784 = vld [vmem:[%s7 + $0x3b8] sm:$0xff]
  %v2785 = vld [vmem:[%s7 + $0x3c0] sm:$0xff]
  %v2786 = vld [vmem:[%s7 + $0x3c8] sm:$0xff]
  %v2787 = vld [vmem:[%s7 + $0x3d0] sm:$0xf]
  %v2788 = vld [vmem:[%s7 + $0x3d4] sm:$0xff]
  %v2789 = vld [vmem:[%s7 + $0x3dc] sm:$0xff]
  %v2790 = vld [vmem:[%s7 + $0x3e4] sm:$0xff]
  %v2791 = vld [vmem:[%s7 + $0x3ec] sm:$0xf]
  %v2792 = vld [vmem:[%s7 + $0x3f0] sm:$0xff]
  %v2793 = vld [vmem:[%s7 + $0x3f8] sm:$0xff]
  %v2794 = vld [vmem:[%s7 + $0x400] sm:$0xff]
  %v2795 = vld [vmem:[%s7 + $0x408] sm:$0xf]
  %v2796 = vld [vmem:[%s7 + $0x40c] sm:$0xff]
  %v2797 = vld [vmem:[%s7 + $0x414] sm:$0xff]
  %v2798 = vld [vmem:[%s7 + $0x41c] sm:$0xff]
  %v2799 = vld [vmem:[%s7 + $0x424] sm:$0xf]
  %v2800 = vld [vmem:[%s7 + $0x428] sm:$0xff]
  %v2801 = vld [vmem:[%s7 + $0x430] sm:$0xff]
  %v2802 = vld [vmem:[%s7 + $0x438] sm:$0xff]
  %v2803 = vld [vmem:[%s7 + $0x440] sm:$0xf]
  %v2804 = vld [vmem:[%s7 + $0x444] sm:$0xff]
  %v2805 = vld [vmem:[%s7 + $0x44c] sm:$0xff]
  %v2806 = vld [vmem:[%s7 + $0x454] sm:$0xff]
  %v2807 = vld [vmem:[%s7 + $0x45c] sm:$0xf]
  %v2808 = vld [vmem:[%s7 + $0x460] sm:$0xff]
  %v2809 = vld [vmem:[%s7 + $0x468] sm:$0xff]
  %v2810 = vld [vmem:[%s7 + $0x470] sm:$0xff]
  %v2811 = vld [vmem:[%s7 + $0x478] sm:$0xf]
  %v2812 = vld [vmem:[%s7 + $0x47c] sm:$0xff]
  %v2813 = vld [vmem:[%s7 + $0x484] sm:$0xff]
  %v2814 = vld [vmem:[%s7 + $0x48c] sm:$0xff]
  %v2815 = vld [vmem:[%s7 + $0x494] sm:$0xf]
  %v2816 = vld [vmem:[%s7 + $0x498] sm:$0xff]
  %v2817 = vld [vmem:[%s7 + $0x4a0] sm:$0xff]
  %v2818 = vld [vmem:[%s7 + $0x4a8] sm:$0xff]
  %v2819 = vld [vmem:[%s7 + $0x4b0] sm:$0xf]
  %v2820 = vld [vmem:[%s7 + $0x4b4] sm:$0xff]
  %v2821 = vld [vmem:[%s7 + $0x4bc] sm:$0xff]
  %v2822 = vld [vmem:[%s7 + $0x4c4] sm:$0xff]
  %v2823 = vld [vmem:[%s7 + $0x4cc] sm:$0xf]
  %v2824 = vld [vmem:[%s7 + $0x4d0] sm:$0xff]
  %v2825 = vld [vmem:[%s7 + $0x4d8] sm:$0xff]
  %v2826 = vld [vmem:[%s7 + $0x4e0] sm:$0xff]
  %v2827 = vld [vmem:[%s7 + $0x4e8] sm:$0xf]
  %v2828 = vld [vmem:[%s7 + $0x4ec] sm:$0xff]
  %v2829 = vld [vmem:[%s7 + $0x4f4] sm:$0xff]
  %v2830 = vld [vmem:[%s7 + $0x4fc] sm:$0xff]
  %v2831 = vld [vmem:[%s7 + $0x504] sm:$0xf]
  %v2832 = vld [vmem:[%s7 + $0x508] sm:$0xff]
  %v2833 = vld [vmem:[%s7 + $0x510] sm:$0xff]
  %v2834 = vld [vmem:[%s7 + $0x518] sm:$0xff]
  %v2835 = vld [vmem:[%s7 + $0x520] sm:$0xf]
  %v2836 = vld [vmem:[%s7 + $0x524] sm:$0xff]
  %v2837 = vld [vmem:[%s7 + $0x52c] sm:$0xff]
  %v2838 = vld [vmem:[%s7 + $0x534] sm:$0xff]
  %v2839 = vld [vmem:[%s7 + $0x53c] sm:$0xf]
  %v2840 = vld [vmem:[%s7 + $0x540] sm:$0xff]
  %v2841 = vld [vmem:[%s7 + $0x548] sm:$0xff]
  %v2842 = vld [vmem:[%s7 + $0x550] sm:$0xff]
  %v2843 = vld [vmem:[%s7 + $0x558] sm:$0xf]
  %v2844 = vld [vmem:[%s7 + $0x55c] sm:$0xff]
  %v2845 = vld [vmem:[%s7 + $0x564] sm:$0xff]
  %v2846 = vld [vmem:[%s7 + $0x56c] sm:$0xff]
  %v2847 = vld [vmem:[%s7 + $0x574] sm:$0xf]
  %v2848 = vld [vmem:[%s7 + $0x578] sm:$0xff]
  %v2849 = vld [vmem:[%s7 + $0x580] sm:$0xff]
  %v2850 = vld [vmem:[%s7 + $0x588] sm:$0xff]
  %v2851 = vld [vmem:[%s7 + $0x590] sm:$0xf]
  %v2852 = vld [vmem:[%s7 + $0x594] sm:$0xff]
  %v2853 = vld [vmem:[%s7 + $0x59c] sm:$0xff]
  %v2854 = vld [vmem:[%s7 + $0x5a4] sm:$0xff]
  %v2855 = vld [vmem:[%s7 + $0x5ac] sm:$0xf]
  %v2856 = vld [vmem:[%s7 + $0x5b0] sm:$0xff]
  %v2857 = vld [vmem:[%s7 + $0x5b8] sm:$0xff]
  %v2858 = vld [vmem:[%s7 + $0x5c0] sm:$0xff]
  %v2859 = vld [vmem:[%s7 + $0x5c8] sm:$0xf]
  %v2860 = vld [vmem:[%s7 + $0x5cc] sm:$0xff]
  %v2861 = vld [vmem:[%s7 + $0x5d4] sm:$0xff]
  %v2862 = vld [vmem:[%s7 + $0x5dc] sm:$0xff]
  %v2863 = vld [vmem:[%s7 + $0x5e4] sm:$0xf]
  %v2864 = vld [vmem:[%s7 + $0x5e8] sm:$0xff]
  %v2865 = vld [vmem:[%s7 + $0x5f0] sm:$0xff]
  %v2866 = vld [vmem:[%s7 + $0x5f8] sm:$0xff]
  %v2867 = vld [vmem:[%s7 + $0x600] sm:$0xf]
  %v2868 = vld [vmem:[%s7 + $0x604] sm:$0xff]
  %v2869 = vld [vmem:[%s7 + $0x60c] sm:$0xff]
  %v2870 = vld [vmem:[%s7 + $0x614] sm:$0xff]
  %v2871 = vld [vmem:[%s7 + $0x61c] sm:$0xf]
  %v2872 = vld [vmem:[%s7 + $0x620] sm:$0xff]
  %v2873 = vld [vmem:[%s7 + $0x628] sm:$0xff]
  %v2874 = vld [vmem:[%s7 + $0x630] sm:$0xff]
  %v2875 = vld [vmem:[%s7 + $0x638] sm:$0xf]
  %v2876 = vld [vmem:[%s7 + $0x63c] sm:$0xff]
  %v2877 = vld [vmem:[%s7 + $0x644] sm:$0xff]
  %v2878 = vld [vmem:[%s7 + $0x64c] sm:$0xff]
  %v2879 = vld [vmem:[%s7 + $0x654] sm:$0xf]
  %v2880 = vld [vmem:[%s7 + $0x658] sm:$0xff]
  %v2881 = vld [vmem:[%s7 + $0x660] sm:$0xff]
  %v2882 = vld [vmem:[%s7 + $0x668] sm:$0xff]
  %v2883 = vld [vmem:[%s7 + $0x670] sm:$0xf]
  %v2884 = vld [vmem:[%s7 + $0x674] sm:$0xff]
  %v2885 = vld [vmem:[%s7 + $0x67c] sm:$0xff]
  %v2886 = vld [vmem:[%s7 + $0x684] sm:$0xff]
  %v2887 = vld [vmem:[%s7 + $0x68c] sm:$0xf]
  %v2888 = vld [vmem:[%s7 + $0x690] sm:$0xff]
  %v2889 = vld [vmem:[%s7 + $0x698] sm:$0xff]
  %v2890 = vld [vmem:[%s7 + $0x6a0] sm:$0xff]
  %v2891 = vld [vmem:[%s7 + $0x6a8] sm:$0xf]
  %v2892 = vld [vmem:[%s7 + $0x6ac] sm:$0xff]
  %v2893 = vld [vmem:[%s7 + $0x6b4] sm:$0xff]
  %v2894 = vld [vmem:[%s7 + $0x6bc] sm:$0xff]
  %v2895 = vld [vmem:[%s7 + $0x6c4] sm:$0xf]
  %v2896 = vld [vmem:[%s7 + $0x6c8] sm:$0xff]
  %v2897 = vld [vmem:[%s7 + $0x6d0] sm:$0xff]
  %v2898 = vld [vmem:[%s7 + $0x6d8] sm:$0xff]
  %v2899 = vld [vmem:[%s7 + $0x6e0] sm:$0xf]
  %v2900 = vld [vmem:[%s7 + $0x6e4] sm:$0xff]
  %v2901 = vld [vmem:[%s7 + $0x6ec] sm:$0xff]
  %v2902 = vld [vmem:[%s7 + $0x6f4] sm:$0xff]
  %v2903 = vld [vmem:[%s7 + $0x6fc] sm:$0xf]
  %v2904 = vld [vmem:[%s7 + $0x700] sm:$0xff]
  %v2905 = vld [vmem:[%s7 + $0x708] sm:$0xff]
  %v2906 = vld [vmem:[%s7 + $0x710] sm:$0xff]
  %v2907 = vld [vmem:[%s7 + $0x718] sm:$0xf]
  %v2908 = vld [vmem:[%s7 + $0x71c] sm:$0xff]
  %v2909 = vld [vmem:[%s7 + $0x724] sm:$0xff]
  %v2910 = vld [vmem:[%s7 + $0x72c] sm:$0xff]
  %v2911 = vld [vmem:[%s7 + $0x734] sm:$0xf]
  %v2912 = vld [vmem:[%s7 + $0x738] sm:$0xff]
  %v2913 = vld [vmem:[%s7 + $0x740] sm:$0xff]
  %v2914 = vld [vmem:[%s7 + $0x748] sm:$0xff]
  %v2915 = vld [vmem:[%s7 + $0x750] sm:$0xf]
  %v2916 = vld [vmem:[%s7 + $0x754] sm:$0xff]
  %v2917 = vld [vmem:[%s7 + $0x75c] sm:$0xff]
  %v2918 = vld [vmem:[%s7 + $0x764] sm:$0xff]
  %v2919 = vld [vmem:[%s7 + $0x76c] sm:$0xf]
  %v2920 = vld [vmem:[%s7 + $0x770] sm:$0xff]
  %v2921 = vld [vmem:[%s7 + $0x778] sm:$0xff]
  %v2922 = vld [vmem:[%s7 + $0x780] sm:$0xff]
  %v2923 = vld [vmem:[%s7 + $0x788] sm:$0xf]
  %v2924 = vld [vmem:[%s7 + $0x78c] sm:$0xff]
  %v2925 = vld [vmem:[%s7 + $0x794] sm:$0xff]
  %v2926 = vld [vmem:[%s7 + $0x79c] sm:$0xff]
  %v2927 = vld [vmem:[%s7 + $0x7a4] sm:$0xf]
  %v2928 = vld [vmem:[%s7 + $0x7a8] sm:$0xff]
  %v2929 = vld [vmem:[%s7 + $0x7b0] sm:$0xff]
  %v2930 = vld [vmem:[%s7 + $0x7b8] sm:$0xff]
  %v2931 = vld [vmem:[%s7 + $0x7c0] sm:$0xf]
  %v2932 = vld [vmem:[%s7 + $0x7c4] sm:$0xff]
  %v2933 = vld [vmem:[%s7 + $0x7cc] sm:$0xff]
  %v2934 = vld [vmem:[%s7 + $0x7d4] sm:$0xff]
  %v2935 = vld [vmem:[%s7 + $0x7dc] sm:$0xf]
  %v2936 = vld [vmem:[%s7 + $0x7e0] sm:$0xff]
  %v2937 = vld [vmem:[%s7 + $0x7e8] sm:$0xff]
  %v2938 = vld [vmem:[%s7 + $0x7f0] sm:$0xff]
  %v2939 = vld [vmem:[%s7 + $0x7f8] sm:$0xf]
  %v2940 = vld [vmem:[%s7 + $0x7fc] sm:$0xff]
  %v2941 = vld [vmem:[%s7 + $0x804] sm:$0xff]
  %v2942 = vld [vmem:[%s7 + $0x80c] sm:$0xff]
  %v2943 = vld [vmem:[%s7 + $0x814] sm:$0xf]
  %v2944 = vld [vmem:[%s7 + $0x818] sm:$0xff]
  %v2945 = vld [vmem:[%s7 + $0x820] sm:$0xff]
  %v2946 = vld [vmem:[%s7 + $0x828] sm:$0xff]
  %v2947 = vld [vmem:[%s7 + $0x830] sm:$0xf]
  %v2948 = vld [vmem:[%s7 + $0x834] sm:$0xff]
  %v2949 = vld [vmem:[%s7 + $0x83c] sm:$0xff]
  %v2950 = vld [vmem:[%s7 + $0x844] sm:$0xff]
  %v2951 = vld [vmem:[%s7 + $0x84c] sm:$0xf]
  %v2952 = vld [vmem:[%s7 + $0x850] sm:$0xff]
  %v2953 = vld [vmem:[%s7 + $0x858] sm:$0xff]
  %v2954 = vld [vmem:[%s7 + $0x860] sm:$0xff]
  %v2955 = vld [vmem:[%s7 + $0x868] sm:$0xf]
  %v2956 = vld [vmem:[%s7 + $0x86c] sm:$0xff]
  %v2957 = vld [vmem:[%s7 + $0x874] sm:$0xff]
  %v2958 = vld [vmem:[%s7 + $0x87c] sm:$0xff]
  %v2959 = vld [vmem:[%s7 + $0x884] sm:$0xf]
  %v2960 = vld [vmem:[%s7 + $0x888] sm:$0xff]
  %v2961 = vld [vmem:[%s7 + $0x890] sm:$0xff]
  %v2962 = vld [vmem:[%s7 + $0x898] sm:$0xff]
  %v2963 = vld [vmem:[%s7 + $0x8a0] sm:$0xf]
  %v2964 = vld [vmem:[%s7 + $0x8a4] sm:$0xff]
  %v2965 = vld [vmem:[%s7 + $0x8ac] sm:$0xff]
  %v2966 = vld [vmem:[%s7 + $0x8b4] sm:$0xff]
  %v2967 = vld [vmem:[%s7 + $0x8bc] sm:$0xf]
  %v2968 = vld [vmem:[%s7 + $0x8c0] sm:$0xff]
  %v2969 = vld [vmem:[%s7 + $0x8c8] sm:$0xff]
  %v2970 = vld [vmem:[%s7 + $0x8d0] sm:$0xff]
  %v2971 = vld [vmem:[%s7 + $0x8d8] sm:$0xf]
  %v2972 = vld [vmem:[%s7 + $0x8dc] sm:$0xff]
  %v2973 = vld [vmem:[%s7 + $0x8e4] sm:$0xff]
  %v2974 = vld [vmem:[%s7 + $0x8ec] sm:$0xff]
  %v2975 = vld [vmem:[%s7 + $0x8f4] sm:$0xf]
  %v2976 = vld [vmem:[%s7 + $0x8f8] sm:$0xff]
  %v2977 = vld [vmem:[%s7 + $0x900] sm:$0xff]
  %v2978 = vld [vmem:[%s7 + $0x908] sm:$0xff]
  %v2979 = vld [vmem:[%s7 + $0x910] sm:$0xf]
  %v2980 = vld [vmem:[%s7 + $0x914] sm:$0xff]
  %v2981 = vld [vmem:[%s7 + $0x91c] sm:$0xff]
  %v2982 = vld [vmem:[%s7 + $0x924] sm:$0xff]
  %v2983 = vld [vmem:[%s7 + $0x92c] sm:$0xf]
  %v2984 = vld [vmem:[%s7 + $0x930] sm:$0xff]
  %v2985 = vld [vmem:[%s7 + $0x938] sm:$0xff]
  %v2986 = vld [vmem:[%s7 + $0x940] sm:$0xff]
  %v2987 = vld [vmem:[%s7 + $0x948] sm:$0xf]
  %v2988 = vld [vmem:[%s7 + $0x94c] sm:$0xff]
  %v2989 = vld [vmem:[%s7 + $0x954] sm:$0xff]
  %v2990 = vld [vmem:[%s7 + $0x95c] sm:$0xff]
  %v2991 = vld [vmem:[%s7 + $0x964] sm:$0xf]
  %v2992 = vld [vmem:[%s7 + $0x968] sm:$0xff]
  %v2993 = vld [vmem:[%s7 + $0x970] sm:$0xff]
  %v2994 = vld [vmem:[%s7 + $0x978] sm:$0xff]
  %v2995 = vld [vmem:[%s7 + $0x980] sm:$0xf]
  %v2996 = vld [vmem:[%s7 + $0x984] sm:$0xff]
  %v2997 = vld [vmem:[%s7 + $0x98c] sm:$0xff]
  %v2998 = vld [vmem:[%s7 + $0x994] sm:$0xff]
  %v2999 = vld [vmem:[%s7 + $0x99c] sm:$0xf]
  %v3000 = vld [vmem:[%s7 + $0x9a0] sm:$0xff]
  %v3001 = vld [vmem:[%s7 + $0x9a8] sm:$0xff]
  %v3002 = vld [vmem:[%s7 + $0x9b0] sm:$0xff]
  %v3003 = vld [vmem:[%s7 + $0x9b8] sm:$0xf]
  %v3004 = vld [vmem:[%s7 + $0x9bc] sm:$0xff]
  %v3005 = vld [vmem:[%s7 + $0x9c4] sm:$0xff]
  %v3006 = vld [vmem:[%s7 + $0x9cc] sm:$0xff]
  %v3007 = vld [vmem:[%s7 + $0x9d4] sm:$0xf]
  %v3008 = vld [vmem:[%s7 + $0x9d8] sm:$0xff]
  %v3009 = vld [vmem:[%s7 + $0x9e0] sm:$0xff]
  %v3010 = vld [vmem:[%s7 + $0x9e8] sm:$0xff]
  %v3011 = vld [vmem:[%s7 + $0x9f0] sm:$0xf]
  %v3012 = vld [vmem:[%s7 + $0x9f4] sm:$0xff]
  %v3013 = vld [vmem:[%s7 + $0x9fc] sm:$0xff]
  %v3014 = vld [vmem:[%s7 + $0xa04] sm:$0xff]
  %v3015 = vld [vmem:[%s7 + $0xa0c] sm:$0xf]
  %v3016 = vld [vmem:[%s7 + $0xa10] sm:$0xff]
  %v3017 = vld [vmem:[%s7 + $0xa18] sm:$0xff]
  %v3018 = vld [vmem:[%s7 + $0xa20] sm:$0xff]
  %v3019 = vld [vmem:[%s7 + $0xa28] sm:$0xf]
  %v3020 = vld [vmem:[%s7 + $0xa2c] sm:$0xff]
  %v3021 = vld [vmem:[%s7 + $0xa34] sm:$0xff]
  %v3022 = vld [vmem:[%s7 + $0xa3c] sm:$0xff]
  %v3023 = vld [vmem:[%s7 + $0xa44] sm:$0xf]
  %v3024 = vld [vmem:[%s7 + $0xa48] sm:$0xff]
  %v3025 = vld [vmem:[%s7 + $0xa50] sm:$0xff]
  %v3026 = vld [vmem:[%s7 + $0xa58] sm:$0xff]
  %v3027 = vld [vmem:[%s7 + $0xa60] sm:$0xf]
  %v3028 = vld [vmem:[%s7 + $0xa64] sm:$0xff]
  %v3029 = vld [vmem:[%s7 + $0xa6c] sm:$0xff]
  %v3030 = vld [vmem:[%s7 + $0xa74] sm:$0xff]
  %v3031 = vld [vmem:[%s7 + $0xa7c] sm:$0xf]
  %v3032 = vld [vmem:[%s7 + $0xa80] sm:$0xff]
  %v3033 = vld [vmem:[%s7 + $0xa88] sm:$0xff]
  %v3034 = vld [vmem:[%s7 + $0xa90] sm:$0xff]
  %v3035 = vld [vmem:[%s7 + $0xa98] sm:$0xf]
  %v3036 = vld [vmem:[%s7 + $0xa9c] sm:$0xff]
  %v3037 = vld [vmem:[%s7 + $0xaa4] sm:$0xff]
  %v3038 = vld [vmem:[%s7 + $0xaac] sm:$0xff]
  %v3039 = vld [vmem:[%s7 + $0xab4] sm:$0xf]
  %v3040 = vld [vmem:[%s7 + $0xab8] sm:$0xff]
  %v3041 = vld [vmem:[%s7 + $0xac0] sm:$0xff]
  %v3042 = vld [vmem:[%s7 + $0xac8] sm:$0xff]
  %v3043 = vld [vmem:[%s7 + $0xad0] sm:$0xf]
  %v3044 = vld [vmem:[%s7 + $0xad4] sm:$0xff]
  %v3045 = vld [vmem:[%s7 + $0xadc] sm:$0xff]
  %v3046 = vld [vmem:[%s7 + $0xae4] sm:$0xff]
  %v3047 = vld [vmem:[%s7 + $0xaec] sm:$0xf]
  %v3048 = vld [vmem:[%s7 + $0xaf0] sm:$0xff]
  %v3049 = vld [vmem:[%s7 + $0xaf8] sm:$0xff]
  %v3050 = vld [vmem:[%s7 + $0xb00] sm:$0xff]
  %v3051 = vld [vmem:[%s7 + $0xb08] sm:$0xf]
  %v3052 = vld [vmem:[%s7 + $0xb0c] sm:$0xff]
  %v3053 = vld [vmem:[%s7 + $0xb14] sm:$0xff]
  %v3054 = vld [vmem:[%s7 + $0xb1c] sm:$0xff]
  %v3055 = vld [vmem:[%s7 + $0xb24] sm:$0xf]
  %v3056 = vld [vmem:[%s7 + $0xb28] sm:$0xff]
  %v3057 = vld [vmem:[%s7 + $0xb30] sm:$0xff]
  %v3058 = vld [vmem:[%s7 + $0xb38] sm:$0xff]
  %v3059 = vld [vmem:[%s7 + $0xb40] sm:$0xf]
  %v3060 = vld [vmem:[%s7 + $0xb44] sm:$0xff]
  %v3061 = vld [vmem:[%s7 + $0xb4c] sm:$0xff]
  %v3062 = vld [vmem:[%s7 + $0xb54] sm:$0xff]
  %v3063 = vld [vmem:[%s7 + $0xb5c] sm:$0xf]
  %v3064 = vld [vmem:[%s7 + $0xb60] sm:$0xff]
  %v3065 = vld [vmem:[%s7 + $0xb68] sm:$0xff]
  %v3066 = vld [vmem:[%s7 + $0xb70] sm:$0xff]
  %v3067 = vld [vmem:[%s7 + $0xb78] sm:$0xf]
  %v3068 = vld [vmem:[%s7 + $0xb7c] sm:$0xff]
  %v3069 = vld [vmem:[%s7 + $0xb84] sm:$0xff]
  %v3070 = vld [vmem:[%s7 + $0xb8c] sm:$0xff]
  %v3071 = vld [vmem:[%s7 + $0xb94] sm:$0xf]
  %v3072 = vld [vmem:[%s7 + $0xb98] sm:$0xff]
  %v3073 = vld [vmem:[%s7 + $0xba0] sm:$0xff]
  %v3074 = vld [vmem:[%s7 + $0xba8] sm:$0xff]
  %v3075 = vld [vmem:[%s7 + $0xbb0] sm:$0xf]
  %v3076 = vld [vmem:[%s7 + $0xbb4] sm:$0xff]
  %v3077 = vld [vmem:[%s7 + $0xbbc] sm:$0xff]
  %v3078 = vld [vmem:[%s7 + $0xbc4] sm:$0xff]
  %v3079 = vld [vmem:[%s7 + $0xbcc] sm:$0xf]
  %v3080 = vld [vmem:[%s7 + $0xbd0] sm:$0xff]
  %v3081 = vld [vmem:[%s7 + $0xbd8] sm:$0xff]
  %v3082 = vld [vmem:[%s7 + $0xbe0] sm:$0xff]
  %v3083 = vld [vmem:[%s7 + $0xbe8] sm:$0xf]
  %v3084 = vld [vmem:[%s7 + $0xbec] sm:$0xff]
  %v3085 = vld [vmem:[%s7 + $0xbf4] sm:$0xff]
  %v3086 = vld [vmem:[%s7 + $0xbfc] sm:$0xff]
  %v3087 = vld [vmem:[%s7 + $0xc04] sm:$0xf]
  %v3088 = vld [vmem:[%s7 + $0xc08] sm:$0xff]
  %v3089 = vld [vmem:[%s7 + $0xc10] sm:$0xff]
  %v3090 = vld [vmem:[%s7 + $0xc18] sm:$0xff]
  %v3091 = vld [vmem:[%s7 + $0xc20] sm:$0xf]
  %v3092 = vld [vmem:[%s7 + $0xc24] sm:$0xff]
  %v3093 = vld [vmem:[%s7 + $0xc2c] sm:$0xff]
  %v3094 = vld [vmem:[%s7 + $0xc34] sm:$0xff]
  %v3095 = vld [vmem:[%s7 + $0xc3c] sm:$0xf]
  %v3096 = vld [vmem:[%s7 + $0xc40] sm:$0xff]
  %v3097 = vld [vmem:[%s7 + $0xc48] sm:$0xff]
  %v3098 = vld [vmem:[%s7 + $0xc50] sm:$0xff]
  %v3099 = vld [vmem:[%s7 + $0xc58] sm:$0xf]
  %v3100 = vld [vmem:[%s7 + $0xc5c] sm:$0xff]
  %v3101 = vld [vmem:[%s7 + $0xc64] sm:$0xff]
  %v3102 = vld [vmem:[%s7 + $0xc6c] sm:$0xff]
  %v3103 = vld [vmem:[%s7 + $0xc74] sm:$0xf]
  %v3104 = vld [vmem:[%s7 + $0xc78] sm:$0xff]
  %v3105 = vld [vmem:[%s7 + $0xc80] sm:$0xff]
  %v3106 = vld [vmem:[%s7 + $0xc88] sm:$0xff]
  %v3107 = vld [vmem:[%s7 + $0xc90] sm:$0xf]
  %v3108 = vld [vmem:[%s7 + $0xc94] sm:$0xff]
  %v3109 = vld [vmem:[%s7 + $0xc9c] sm:$0xff]
  %v3110 = vld [vmem:[%s7 + $0xca4] sm:$0xff]
  %v3111 = vld [vmem:[%s7 + $0xcac] sm:$0xf]
  %v3112 = vld [vmem:[%s7 + $0xcb0] sm:$0xff]
  %v3113 = vld [vmem:[%s7 + $0xcb8] sm:$0xff]
  %v3114 = vld [vmem:[%s7 + $0xcc0] sm:$0xff]
  %v3115 = vld [vmem:[%s7 + $0xcc8] sm:$0xf]
  %v3116 = vld [vmem:[%s7 + $0xccc] sm:$0xff]
  %v3117 = vld [vmem:[%s7 + $0xcd4] sm:$0xff]
  %v3118 = vld [vmem:[%s7 + $0xcdc] sm:$0xff]
  %v3119 = vld [vmem:[%s7 + $0xce4] sm:$0xf]
  %v3120 = vld [vmem:[%s7 + $0xce8] sm:$0xff]
  %v3121 = vld [vmem:[%s7 + $0xcf0] sm:$0xff]
  %v3122 = vld [vmem:[%s7 + $0xcf8] sm:$0xff]
  %v3123 = vld [vmem:[%s7 + $0xd00] sm:$0xf]
  %v3124 = vld [vmem:[%s7 + $0xd04] sm:$0xff]
  %v3125 = vld [vmem:[%s7 + $0xd0c] sm:$0xff]
  %v3126 = vld [vmem:[%s7 + $0xd14] sm:$0xff]
  %v3127 = vld [vmem:[%s7 + $0xd1c] sm:$0xf]
  %v3128 = vld [vmem:[%s7 + $0xd20] sm:$0xff]
  %v3129 = vld [vmem:[%s7 + $0xd28] sm:$0xff]
  %v3130 = vld [vmem:[%s7 + $0xd30] sm:$0xff]
  %v3131 = vld [vmem:[%s7 + $0xd38] sm:$0xf]
  %v3132 = vld [vmem:[%s7 + $0xd3c] sm:$0xff]
  %v3133 = vld [vmem:[%s7 + $0xd44] sm:$0xff]
  %v3134 = vld [vmem:[%s7 + $0xd4c] sm:$0xff]
  %v3135 = vld [vmem:[%s7 + $0xd54] sm:$0xf]
  %v3136 = vld [vmem:[%s7 + $0xd58] sm:$0xff]
  %v3137 = vld [vmem:[%s7 + $0xd60] sm:$0xff]
  %v3138 = vld [vmem:[%s7 + $0xd68] sm:$0xff]
  %v3139 = vld [vmem:[%s7 + $0xd70] sm:$0xf]
  %v3140 = vld [vmem:[%s7 + $0xd74] sm:$0xff]
  %v3141 = vld [vmem:[%s7 + $0xd7c] sm:$0xff]
  %v3142 = vld [vmem:[%s7 + $0xd84] sm:$0xff]
  %v3143 = vld [vmem:[%s7 + $0xd8c] sm:$0xf]
  %v3144 = vld [vmem:[%s7 + $0xd90] sm:$0xff]
  %v3145 = vld [vmem:[%s7 + $0xd98] sm:$0xff]
  %v3146 = vld [vmem:[%s7 + $0xda0] sm:$0xff]
  %v3147 = vld [vmem:[%s7 + $0xda8] sm:$0xf]
  %v3148 = vld [vmem:[%s7 + $0xdac] sm:$0xff]
  %v3149 = vld [vmem:[%s7 + $0xdb4] sm:$0xff]
  %v3150 = vld [vmem:[%s7 + $0xdbc] sm:$0xff]
  %v3151 = vld [vmem:[%s7 + $0xdc4] sm:$0xf]
  %v3152 = vld [vmem:[%s7 + $0xdc8] sm:$0xff]
  %v3153 = vld [vmem:[%s7 + $0xdd0] sm:$0xff]
  %v3154 = vld [vmem:[%s7 + $0xdd8] sm:$0xff]
  %v3155 = vld [vmem:[%s7 + $0xde0] sm:$0xf]
  %v3156 = vld [vmem:[%s7 + $0xde4] sm:$0xff]
  %v3157 = vld [vmem:[%s7 + $0xdec] sm:$0xff]
  %v3158 = vld [vmem:[%s7 + $0xdf4] sm:$0xff]
  %v3159 = vld [vmem:[%s7 + $0xdfc] sm:$0xf]
  %v3160 = vld [vmem:[%s8] sm:$0x7f]
  %v3162 = vlaneseq
  %v3163 = vshrl.u32 %v3162, 7
  %v3164 = vsub.s32 0, %v3163
  %v3165 = vrot.slane %v3160, %v3164
  %v3166 = vlaneseq
  %v3167 = vshrl.u32 %v3166, 7
  %v3168 = vsub.s32 1, %v3167
  %v3169 = vrot.slane %v3160, %v3168
  %v3170 = vlaneseq
  %v3171 = vshrl.u32 %v3170, 7
  %v3172 = vsub.s32 2, %v3171
  %v3173 = vrot.slane %v3160, %v3172
  %v3174 = vlaneseq
  %v3175 = vshrl.u32 %v3174, 7
  %v3176 = vsub.s32 3, %v3175
  %v3177 = vrot.slane %v3160, %v3176
  %v3178 = vlaneseq
  %v3179 = vshrl.u32 %v3178, 7
  %v3180 = vsub.s32 4, %v3179
  %v3181 = vrot.slane %v3160, %v3180
  %v3182 = vlaneseq
  %v3183 = vshrl.u32 %v3182, 7
  %v3184 = vsub.s32 5, %v3183
  %v3185 = vrot.slane %v3160, %v3184
  %v3186 = vlaneseq
  %v3187 = vshrl.u32 %v3186, 7
  %v3188 = vsub.s32 6, %v3187
  %v3189 = vrot.slane %v3160, %v3188
  %v3709 = vunpack.c.l.b16 %v2648
  %v3710 = vunpack.c.h.b16 %v2648
  %v3711 = vunpack.c.l.b16 %v2649
  %v3712 = vunpack.c.h.b16 %v2649
  %v3713 = vunpack.c.l.b16 %v2650
  %v3714 = vunpack.c.h.b16 %v2650
  %v3715 = vunpack.c.l.b16 %v2651
  %v3716 = vunpack.c.l.b16 %v2652
  %v3717 = vunpack.c.h.b16 %v2652
  %v3718 = vunpack.c.l.b16 %v2653
  %v3719 = vunpack.c.h.b16 %v2653
  %v3720 = vunpack.c.l.b16 %v2654
  %v3721 = vunpack.c.h.b16 %v2654
  %v3722 = vunpack.c.l.b16 %v2655
  %v3723 = vunpack.c.l.b16 %v2656
  %v3724 = vunpack.c.h.b16 %v2656
  %v3725 = vunpack.c.l.b16 %v2657
  %v3726 = vunpack.c.h.b16 %v2657
  %v3727 = vunpack.c.l.b16 %v2658
  %v3728 = vunpack.c.h.b16 %v2658
  %v3729 = vunpack.c.l.b16 %v2659
  %v3730 = vunpack.c.l.b16 %v2660
  %v3731 = vunpack.c.h.b16 %v2660
  %v3732 = vunpack.c.l.b16 %v2661
  %v3733 = vunpack.c.h.b16 %v2661
  %v3734 = vunpack.c.l.b16 %v2662
  %v3735 = vunpack.c.h.b16 %v2662
  %v3736 = vunpack.c.l.b16 %v2663
  %v3737 = vunpack.c.l.b16 %v2664
  %v3738 = vunpack.c.h.b16 %v2664
  %v3739 = vunpack.c.l.b16 %v2665
  %v3740 = vunpack.c.h.b16 %v2665
  %v3741 = vunpack.c.l.b16 %v2666
  %v3742 = vunpack.c.h.b16 %v2666
  %v3743 = vunpack.c.l.b16 %v2667
  %v3744 = vunpack.c.l.b16 %v2668
  %v3745 = vunpack.c.h.b16 %v2668
  %v3746 = vunpack.c.l.b16 %v2669
  %v3747 = vunpack.c.h.b16 %v2669
  %v3748 = vunpack.c.l.b16 %v2670
  %v3749 = vunpack.c.h.b16 %v2670
  %v3750 = vunpack.c.l.b16 %v2671
  %v3751 = vunpack.c.l.b16 %v2672
  %v3752 = vunpack.c.h.b16 %v2672
  %v3753 = vunpack.c.l.b16 %v2673
  %v3754 = vunpack.c.h.b16 %v2673
  %v3755 = vunpack.c.l.b16 %v2674
  %v3756 = vunpack.c.h.b16 %v2674
  %v3757 = vunpack.c.l.b16 %v2675
  %v3758 = vunpack.c.l.b16 %v2676
  %v3759 = vunpack.c.h.b16 %v2676
  %v3760 = vunpack.c.l.b16 %v2677
  %v3761 = vunpack.c.h.b16 %v2677
  %v3762 = vunpack.c.l.b16 %v2678
  %v3763 = vunpack.c.h.b16 %v2678
  %v3764 = vunpack.c.l.b16 %v2679
  %v3765 = vunpack.c.l.b16 %v2680
  %v3766 = vunpack.c.h.b16 %v2680
  %v3767 = vunpack.c.l.b16 %v2681
  %v3768 = vunpack.c.h.b16 %v2681
  %v3769 = vunpack.c.l.b16 %v2682
  %v3770 = vunpack.c.h.b16 %v2682
  %v3771 = vunpack.c.l.b16 %v2683
  %v3772 = vunpack.c.l.b16 %v2684
  %v3773 = vunpack.c.h.b16 %v2684
  %v3774 = vunpack.c.l.b16 %v2685
  %v3775 = vunpack.c.h.b16 %v2685
  %v3776 = vunpack.c.l.b16 %v2686
  %v3777 = vunpack.c.h.b16 %v2686
  %v3778 = vunpack.c.l.b16 %v2687
  %v3779 = vunpack.c.l.b16 %v2688
  %v3780 = vunpack.c.h.b16 %v2688
  %v3781 = vunpack.c.l.b16 %v2689
  %v3782 = vunpack.c.h.b16 %v2689
  %v3783 = vunpack.c.l.b16 %v2690
  %v3784 = vunpack.c.h.b16 %v2690
  %v3785 = vunpack.c.l.b16 %v2691
  %v3786 = vunpack.c.l.b16 %v2692
  %v3787 = vunpack.c.h.b16 %v2692
  %v3788 = vunpack.c.l.b16 %v2693
  %v3789 = vunpack.c.h.b16 %v2693
  %v3790 = vunpack.c.l.b16 %v2694
  %v3791 = vunpack.c.h.b16 %v2694
  %v3792 = vunpack.c.l.b16 %v2695
  %v3793 = vunpack.c.l.b16 %v2696
  %v3794 = vunpack.c.h.b16 %v2696
  %v3795 = vunpack.c.l.b16 %v2697
  %v3796 = vunpack.c.h.b16 %v2697
  %v3797 = vunpack.c.l.b16 %v2698
  %v3798 = vunpack.c.h.b16 %v2698
  %v3799 = vunpack.c.l.b16 %v2699
  %v3800 = vunpack.c.l.b16 %v2700
  %v3801 = vunpack.c.h.b16 %v2700
  %v3802 = vunpack.c.l.b16 %v2701
  %v3803 = vunpack.c.h.b16 %v2701
  %v3804 = vunpack.c.l.b16 %v2702
  %v3805 = vunpack.c.h.b16 %v2702
  %v3806 = vunpack.c.l.b16 %v2703
  %v3807 = vunpack.c.l.b16 %v2704
  %v3808 = vunpack.c.h.b16 %v2704
  %v3809 = vunpack.c.l.b16 %v2705
  %v3810 = vunpack.c.h.b16 %v2705
  %v3811 = vunpack.c.l.b16 %v2706
  %v3812 = vunpack.c.h.b16 %v2706
  %v3813 = vunpack.c.l.b16 %v2707
  %v3814 = vunpack.c.l.b16 %v2708
  %v3815 = vunpack.c.h.b16 %v2708
  %v3816 = vunpack.c.l.b16 %v2709
  %v3817 = vunpack.c.h.b16 %v2709
  %v3818 = vunpack.c.l.b16 %v2710
  %v3819 = vunpack.c.h.b16 %v2710
  %v3820 = vunpack.c.l.b16 %v2711
  %v3821 = vunpack.c.l.b16 %v2712
  %v3822 = vunpack.c.h.b16 %v2712
  %v3823 = vunpack.c.l.b16 %v2713
  %v3824 = vunpack.c.h.b16 %v2713
  %v3825 = vunpack.c.l.b16 %v2714
  %v3826 = vunpack.c.h.b16 %v2714
  %v3827 = vunpack.c.l.b16 %v2715
  %v3828 = vunpack.c.l.b16 %v2716
  %v3829 = vunpack.c.h.b16 %v2716
  %v3830 = vunpack.c.l.b16 %v2717
  %v3831 = vunpack.c.h.b16 %v2717
  %v3832 = vunpack.c.l.b16 %v2718
  %v3833 = vunpack.c.h.b16 %v2718
  %v3834 = vunpack.c.l.b16 %v2719
  %v3835 = vunpack.c.l.b16 %v2720
  %v3836 = vunpack.c.h.b16 %v2720
  %v3837 = vunpack.c.l.b16 %v2721
  %v3838 = vunpack.c.h.b16 %v2721
  %v3839 = vunpack.c.l.b16 %v2722
  %v3840 = vunpack.c.h.b16 %v2722
  %v3841 = vunpack.c.l.b16 %v2723
  %v3842 = vunpack.c.l.b16 %v2724
  %v3843 = vunpack.c.h.b16 %v2724
  %v3844 = vunpack.c.l.b16 %v2725
  %v3845 = vunpack.c.h.b16 %v2725
  %v3846 = vunpack.c.l.b16 %v2726
  %v3847 = vunpack.c.h.b16 %v2726
  %v3848 = vunpack.c.l.b16 %v2727
  %v3849 = vunpack.c.l.b16 %v2728
  %v3850 = vunpack.c.h.b16 %v2728
  %v3851 = vunpack.c.l.b16 %v2729
  %v3852 = vunpack.c.h.b16 %v2729
  %v3853 = vunpack.c.l.b16 %v2730
  %v3854 = vunpack.c.h.b16 %v2730
  %v3855 = vunpack.c.l.b16 %v2731
  %v3856 = vunpack.c.l.b16 %v2732
  %v3857 = vunpack.c.h.b16 %v2732
  %v3858 = vunpack.c.l.b16 %v2733
  %v3859 = vunpack.c.h.b16 %v2733
  %v3860 = vunpack.c.l.b16 %v2734
  %v3861 = vunpack.c.h.b16 %v2734
  %v3862 = vunpack.c.l.b16 %v2735
  %v3863 = vunpack.c.l.b16 %v2736
  %v3864 = vunpack.c.h.b16 %v2736
  %v3865 = vunpack.c.l.b16 %v2737
  %v3866 = vunpack.c.h.b16 %v2737
  %v3867 = vunpack.c.l.b16 %v2738
  %v3868 = vunpack.c.h.b16 %v2738
  %v3869 = vunpack.c.l.b16 %v2739
  %v3870 = vunpack.c.l.b16 %v2740
  %v3871 = vunpack.c.h.b16 %v2740
  %v3872 = vunpack.c.l.b16 %v2741
  %v3873 = vunpack.c.h.b16 %v2741
  %v3874 = vunpack.c.l.b16 %v2742
  %v3875 = vunpack.c.h.b16 %v2742
  %v3876 = vunpack.c.l.b16 %v2743
  %v3877 = vunpack.c.l.b16 %v2744
  %v3878 = vunpack.c.h.b16 %v2744
  %v3879 = vunpack.c.l.b16 %v2745
  %v3880 = vunpack.c.h.b16 %v2745
  %v3881 = vunpack.c.l.b16 %v2746
  %v3882 = vunpack.c.h.b16 %v2746
  %v3883 = vunpack.c.l.b16 %v2747
  %v3884 = vunpack.c.l.b16 %v2748
  %v3885 = vunpack.c.h.b16 %v2748
  %v3886 = vunpack.c.l.b16 %v2749
  %v3887 = vunpack.c.h.b16 %v2749
  %v3888 = vunpack.c.l.b16 %v2750
  %v3889 = vunpack.c.h.b16 %v2750
  %v3890 = vunpack.c.l.b16 %v2751
  %v3891 = vunpack.c.l.b16 %v2752
  %v3892 = vunpack.c.h.b16 %v2752
  %v3893 = vunpack.c.l.b16 %v2753
  %v3894 = vunpack.c.h.b16 %v2753
  %v3895 = vunpack.c.l.b16 %v2754
  %v3896 = vunpack.c.h.b16 %v2754
  %v3897 = vunpack.c.l.b16 %v2755
  %v3898 = vunpack.c.l.b16 %v2756
  %v3899 = vunpack.c.h.b16 %v2756
  %v3900 = vunpack.c.l.b16 %v2757
  %v3901 = vunpack.c.h.b16 %v2757
  %v3902 = vunpack.c.l.b16 %v2758
  %v3903 = vunpack.c.h.b16 %v2758
  %v3904 = vunpack.c.l.b16 %v2759
  %v3905 = vunpack.c.l.b16 %v2760
  %v3906 = vunpack.c.h.b16 %v2760
  %v3907 = vunpack.c.l.b16 %v2761
  %v3908 = vunpack.c.h.b16 %v2761
  %v3909 = vunpack.c.l.b16 %v2762
  %v3910 = vunpack.c.h.b16 %v2762
  %v3911 = vunpack.c.l.b16 %v2763
  %v3912 = vunpack.c.l.b16 %v2764
  %v3913 = vunpack.c.h.b16 %v2764
  %v3914 = vunpack.c.l.b16 %v2765
  %v3915 = vunpack.c.h.b16 %v2765
  %v3916 = vunpack.c.l.b16 %v2766
  %v3917 = vunpack.c.h.b16 %v2766
  %v3918 = vunpack.c.l.b16 %v2767
  %v3919 = vunpack.c.l.b16 %v2768
  %v3920 = vunpack.c.h.b16 %v2768
  %v3921 = vunpack.c.l.b16 %v2769
  %v3922 = vunpack.c.h.b16 %v2769
  %v3923 = vunpack.c.l.b16 %v2770
  %v3924 = vunpack.c.h.b16 %v2770
  %v3925 = vunpack.c.l.b16 %v2771
  %v3926 = vunpack.c.l.b16 %v2772
  %v3927 = vunpack.c.h.b16 %v2772
  %v3928 = vunpack.c.l.b16 %v2773
  %v3929 = vunpack.c.h.b16 %v2773
  %v3930 = vunpack.c.l.b16 %v2774
  %v3931 = vunpack.c.h.b16 %v2774
  %v3932 = vunpack.c.l.b16 %v2775
  %v3933 = vunpack.c.l.b16 %v2776
  %v3934 = vunpack.c.h.b16 %v2776
  %v3935 = vunpack.c.l.b16 %v2777
  %v3936 = vunpack.c.h.b16 %v2777
  %v3937 = vunpack.c.l.b16 %v2778
  %v3938 = vunpack.c.h.b16 %v2778
  %v3939 = vunpack.c.l.b16 %v2779
  %v3940 = vunpack.c.l.b16 %v2780
  %v3941 = vunpack.c.h.b16 %v2780
  %v3942 = vunpack.c.l.b16 %v2781
  %v3943 = vunpack.c.h.b16 %v2781
  %v3944 = vunpack.c.l.b16 %v2782
  %v3945 = vunpack.c.h.b16 %v2782
  %v3946 = vunpack.c.l.b16 %v2783
  %v3947 = vunpack.c.l.b16 %v2784
  %v3948 = vunpack.c.h.b16 %v2784
  %v3949 = vunpack.c.l.b16 %v2785
  %v3950 = vunpack.c.h.b16 %v2785
  %v3951 = vunpack.c.l.b16 %v2786
  %v3952 = vunpack.c.h.b16 %v2786
  %v3953 = vunpack.c.l.b16 %v2787
  %v3954 = vunpack.c.l.b16 %v2788
  %v3955 = vunpack.c.h.b16 %v2788
  %v3956 = vunpack.c.l.b16 %v2789
  %v3957 = vunpack.c.h.b16 %v2789
  %v3958 = vunpack.c.l.b16 %v2790
  %v3959 = vunpack.c.h.b16 %v2790
  %v3960 = vunpack.c.l.b16 %v2791
  %v3961 = vunpack.c.l.b16 %v2792
  %v3962 = vunpack.c.h.b16 %v2792
  %v3963 = vunpack.c.l.b16 %v2793
  %v3964 = vunpack.c.h.b16 %v2793
  %v3965 = vunpack.c.l.b16 %v2794
  %v3966 = vunpack.c.h.b16 %v2794
  %v3967 = vunpack.c.l.b16 %v2795
  %v3968 = vunpack.c.l.b16 %v2796
  %v3969 = vunpack.c.h.b16 %v2796
  %v3970 = vunpack.c.l.b16 %v2797
  %v3971 = vunpack.c.h.b16 %v2797
  %v3972 = vunpack.c.l.b16 %v2798
  %v3973 = vunpack.c.h.b16 %v2798
  %v3974 = vunpack.c.l.b16 %v2799
  %v3975 = vunpack.c.l.b16 %v2800
  %v3976 = vunpack.c.h.b16 %v2800
  %v3977 = vunpack.c.l.b16 %v2801
  %v3978 = vunpack.c.h.b16 %v2801
  %v3979 = vunpack.c.l.b16 %v2802
  %v3980 = vunpack.c.h.b16 %v2802
  %v3981 = vunpack.c.l.b16 %v2803
  %v3982 = vunpack.c.l.b16 %v2804
  %v3983 = vunpack.c.h.b16 %v2804
  %v3984 = vunpack.c.l.b16 %v2805
  %v3985 = vunpack.c.h.b16 %v2805
  %v3986 = vunpack.c.l.b16 %v2806
  %v3987 = vunpack.c.h.b16 %v2806
  %v3988 = vunpack.c.l.b16 %v2807
  %v3989 = vunpack.c.l.b16 %v2808
  %v3990 = vunpack.c.h.b16 %v2808
  %v3991 = vunpack.c.l.b16 %v2809
  %v3992 = vunpack.c.h.b16 %v2809
  %v3993 = vunpack.c.l.b16 %v2810
  %v3994 = vunpack.c.h.b16 %v2810
  %v3995 = vunpack.c.l.b16 %v2811
  %v3996 = vunpack.c.l.b16 %v2812
  %v3997 = vunpack.c.h.b16 %v2812
  %v3998 = vunpack.c.l.b16 %v2813
  %v3999 = vunpack.c.h.b16 %v2813
  %v4000 = vunpack.c.l.b16 %v2814
  %v4001 = vunpack.c.h.b16 %v2814
  %v4002 = vunpack.c.l.b16 %v2815
  %v4003 = vunpack.c.l.b16 %v2816
  %v4004 = vunpack.c.h.b16 %v2816
  %v4005 = vunpack.c.l.b16 %v2817
  %v4006 = vunpack.c.h.b16 %v2817
  %v4007 = vunpack.c.l.b16 %v2818
  %v4008 = vunpack.c.h.b16 %v2818
  %v4009 = vunpack.c.l.b16 %v2819
  %v4010 = vunpack.c.l.b16 %v2820
  %v4011 = vunpack.c.h.b16 %v2820
  %v4012 = vunpack.c.l.b16 %v2821
  %v4013 = vunpack.c.h.b16 %v2821
  %v4014 = vunpack.c.l.b16 %v2822
  %v4015 = vunpack.c.h.b16 %v2822
  %v4016 = vunpack.c.l.b16 %v2823
  %v4017 = vunpack.c.l.b16 %v2824
  %v4018 = vunpack.c.h.b16 %v2824
  %v4019 = vunpack.c.l.b16 %v2825
  %v4020 = vunpack.c.h.b16 %v2825
  %v4021 = vunpack.c.l.b16 %v2826
  %v4022 = vunpack.c.h.b16 %v2826
  %v4023 = vunpack.c.l.b16 %v2827
  %v4024 = vunpack.c.l.b16 %v2828
  %v4025 = vunpack.c.h.b16 %v2828
  %v4026 = vunpack.c.l.b16 %v2829
  %v4027 = vunpack.c.h.b16 %v2829
  %v4028 = vunpack.c.l.b16 %v2830
  %v4029 = vunpack.c.h.b16 %v2830
  %v4030 = vunpack.c.l.b16 %v2831
  %v4031 = vunpack.c.l.b16 %v2832
  %v4032 = vunpack.c.h.b16 %v2832
  %v4033 = vunpack.c.l.b16 %v2833
  %v4034 = vunpack.c.h.b16 %v2833
  %v4035 = vunpack.c.l.b16 %v2834
  %v4036 = vunpack.c.h.b16 %v2834
  %v4037 = vunpack.c.l.b16 %v2835
  %v4038 = vunpack.c.l.b16 %v2836
  %v4039 = vunpack.c.h.b16 %v2836
  %v4040 = vunpack.c.l.b16 %v2837
  %v4041 = vunpack.c.h.b16 %v2837
  %v4042 = vunpack.c.l.b16 %v2838
  %v4043 = vunpack.c.h.b16 %v2838
  %v4044 = vunpack.c.l.b16 %v2839
  %v4045 = vunpack.c.l.b16 %v2840
  %v4046 = vunpack.c.h.b16 %v2840
  %v4047 = vunpack.c.l.b16 %v2841
  %v4048 = vunpack.c.h.b16 %v2841
  %v4049 = vunpack.c.l.b16 %v2842
  %v4050 = vunpack.c.h.b16 %v2842
  %v4051 = vunpack.c.l.b16 %v2843
  %v4052 = vunpack.c.l.b16 %v2844
  %v4053 = vunpack.c.h.b16 %v2844
  %v4054 = vunpack.c.l.b16 %v2845
  %v4055 = vunpack.c.h.b16 %v2845
  %v4056 = vunpack.c.l.b16 %v2846
  %v4057 = vunpack.c.h.b16 %v2846
  %v4058 = vunpack.c.l.b16 %v2847
  %v4059 = vunpack.c.l.b16 %v2848
  %v4060 = vunpack.c.h.b16 %v2848
  %v4061 = vunpack.c.l.b16 %v2849
  %v4062 = vunpack.c.h.b16 %v2849
  %v4063 = vunpack.c.l.b16 %v2850
  %v4064 = vunpack.c.h.b16 %v2850
  %v4065 = vunpack.c.l.b16 %v2851
  %v4066 = vunpack.c.l.b16 %v2852
  %v4067 = vunpack.c.h.b16 %v2852
  %v4068 = vunpack.c.l.b16 %v2853
  %v4069 = vunpack.c.h.b16 %v2853
  %v4070 = vunpack.c.l.b16 %v2854
  %v4071 = vunpack.c.h.b16 %v2854
  %v4072 = vunpack.c.l.b16 %v2855
  %v4073 = vunpack.c.l.b16 %v2856
  %v4074 = vunpack.c.h.b16 %v2856
  %v4075 = vunpack.c.l.b16 %v2857
  %v4076 = vunpack.c.h.b16 %v2857
  %v4077 = vunpack.c.l.b16 %v2858
  %v4078 = vunpack.c.h.b16 %v2858
  %v4079 = vunpack.c.l.b16 %v2859
  %v4080 = vunpack.c.l.b16 %v2860
  %v4081 = vunpack.c.h.b16 %v2860
  %v4082 = vunpack.c.l.b16 %v2861
  %v4083 = vunpack.c.h.b16 %v2861
  %v4084 = vunpack.c.l.b16 %v2862
  %v4085 = vunpack.c.h.b16 %v2862
  %v4086 = vunpack.c.l.b16 %v2863
  %v4087 = vunpack.c.l.b16 %v2864
  %v4088 = vunpack.c.h.b16 %v2864
  %v4089 = vunpack.c.l.b16 %v2865
  %v4090 = vunpack.c.h.b16 %v2865
  %v4091 = vunpack.c.l.b16 %v2866
  %v4092 = vunpack.c.h.b16 %v2866
  %v4093 = vunpack.c.l.b16 %v2867
  %v4094 = vunpack.c.l.b16 %v2868
  %v4095 = vunpack.c.h.b16 %v2868
  %v4096 = vunpack.c.l.b16 %v2869
  %v4097 = vunpack.c.h.b16 %v2869
  %v4098 = vunpack.c.l.b16 %v2870
  %v4099 = vunpack.c.h.b16 %v2870
  %v4100 = vunpack.c.l.b16 %v2871
  %v4101 = vunpack.c.l.b16 %v2872
  %v4102 = vunpack.c.h.b16 %v2872
  %v4103 = vunpack.c.l.b16 %v2873
  %v4104 = vunpack.c.h.b16 %v2873
  %v4105 = vunpack.c.l.b16 %v2874
  %v4106 = vunpack.c.h.b16 %v2874
  %v4107 = vunpack.c.l.b16 %v2875
  %v4108 = vunpack.c.l.b16 %v2876
  %v4109 = vunpack.c.h.b16 %v2876
  %v4110 = vunpack.c.l.b16 %v2877
  %v4111 = vunpack.c.h.b16 %v2877
  %v4112 = vunpack.c.l.b16 %v2878
  %v4113 = vunpack.c.h.b16 %v2878
  %v4114 = vunpack.c.l.b16 %v2879
  %v4115 = vunpack.c.l.b16 %v2880
  %v4116 = vunpack.c.h.b16 %v2880
  %v4117 = vunpack.c.l.b16 %v2881
  %v4118 = vunpack.c.h.b16 %v2881
  %v4119 = vunpack.c.l.b16 %v2882
  %v4120 = vunpack.c.h.b16 %v2882
  %v4121 = vunpack.c.l.b16 %v2883
  %v4122 = vunpack.c.l.b16 %v2884
  %v4123 = vunpack.c.h.b16 %v2884
  %v4124 = vunpack.c.l.b16 %v2885
  %v4125 = vunpack.c.h.b16 %v2885
  %v4126 = vunpack.c.l.b16 %v2886
  %v4127 = vunpack.c.h.b16 %v2886
  %v4128 = vunpack.c.l.b16 %v2887
  %v4129 = vunpack.c.l.b16 %v2888
  %v4130 = vunpack.c.h.b16 %v2888
  %v4131 = vunpack.c.l.b16 %v2889
  %v4132 = vunpack.c.h.b16 %v2889
  %v4133 = vunpack.c.l.b16 %v2890
  %v4134 = vunpack.c.h.b16 %v2890
  %v4135 = vunpack.c.l.b16 %v2891
  %v4136 = vunpack.c.l.b16 %v2892
  %v4137 = vunpack.c.h.b16 %v2892
  %v4138 = vunpack.c.l.b16 %v2893
  %v4139 = vunpack.c.h.b16 %v2893
  %v4140 = vunpack.c.l.b16 %v2894
  %v4141 = vunpack.c.h.b16 %v2894
  %v4142 = vunpack.c.l.b16 %v2895
  %v4143 = vunpack.c.l.b16 %v2896
  %v4144 = vunpack.c.h.b16 %v2896
  %v4145 = vunpack.c.l.b16 %v2897
  %v4146 = vunpack.c.h.b16 %v2897
  %v4147 = vunpack.c.l.b16 %v2898
  %v4148 = vunpack.c.h.b16 %v2898
  %v4149 = vunpack.c.l.b16 %v2899
  %v4150 = vunpack.c.l.b16 %v2900
  %v4151 = vunpack.c.h.b16 %v2900
  %v4152 = vunpack.c.l.b16 %v2901
  %v4153 = vunpack.c.h.b16 %v2901
  %v4154 = vunpack.c.l.b16 %v2902
  %v4155 = vunpack.c.h.b16 %v2902
  %v4156 = vunpack.c.l.b16 %v2903
  %v4157 = vunpack.c.l.b16 %v2904
  %v4158 = vunpack.c.h.b16 %v2904
  %v4159 = vunpack.c.l.b16 %v2905
  %v4160 = vunpack.c.h.b16 %v2905
  %v4161 = vunpack.c.l.b16 %v2906
  %v4162 = vunpack.c.h.b16 %v2906
  %v4163 = vunpack.c.l.b16 %v2907
  %v4164 = vunpack.c.l.b16 %v2908
  %v4165 = vunpack.c.h.b16 %v2908
  %v4166 = vunpack.c.l.b16 %v2909
  %v4167 = vunpack.c.h.b16 %v2909
  %v4168 = vunpack.c.l.b16 %v2910
  %v4169 = vunpack.c.h.b16 %v2910
  %v4170 = vunpack.c.l.b16 %v2911
  %v4171 = vunpack.c.l.b16 %v2912
  %v4172 = vunpack.c.h.b16 %v2912
  %v4173 = vunpack.c.l.b16 %v2913
  %v4174 = vunpack.c.h.b16 %v2913
  %v4175 = vunpack.c.l.b16 %v2914
  %v4176 = vunpack.c.h.b16 %v2914
  %v4177 = vunpack.c.l.b16 %v2915
  %v4178 = vunpack.c.l.b16 %v2916
  %v4179 = vunpack.c.h.b16 %v2916
  %v4180 = vunpack.c.l.b16 %v2917
  %v4181 = vunpack.c.h.b16 %v2917
  %v4182 = vunpack.c.l.b16 %v2918
  %v4183 = vunpack.c.h.b16 %v2918
  %v4184 = vunpack.c.l.b16 %v2919
  %v4185 = vunpack.c.l.b16 %v2920
  %v4186 = vunpack.c.h.b16 %v2920
  %v4187 = vunpack.c.l.b16 %v2921
  %v4188 = vunpack.c.h.b16 %v2921
  %v4189 = vunpack.c.l.b16 %v2922
  %v4190 = vunpack.c.h.b16 %v2922
  %v4191 = vunpack.c.l.b16 %v2923
  %v4192 = vunpack.c.l.b16 %v2924
  %v4193 = vunpack.c.h.b16 %v2924
  %v4194 = vunpack.c.l.b16 %v2925
  %v4195 = vunpack.c.h.b16 %v2925
  %v4196 = vunpack.c.l.b16 %v2926
  %v4197 = vunpack.c.h.b16 %v2926
  %v4198 = vunpack.c.l.b16 %v2927
  %v4199 = vunpack.c.l.b16 %v2928
  %v4200 = vunpack.c.h.b16 %v2928
  %v4201 = vunpack.c.l.b16 %v2929
  %v4202 = vunpack.c.h.b16 %v2929
  %v4203 = vunpack.c.l.b16 %v2930
  %v4204 = vunpack.c.h.b16 %v2930
  %v4205 = vunpack.c.l.b16 %v2931
  %v4206 = vunpack.c.l.b16 %v2932
  %v4207 = vunpack.c.h.b16 %v2932
  %v4208 = vunpack.c.l.b16 %v2933
  %v4209 = vunpack.c.h.b16 %v2933
  %v4210 = vunpack.c.l.b16 %v2934
  %v4211 = vunpack.c.h.b16 %v2934
  %v4212 = vunpack.c.l.b16 %v2935
  %v4213 = vunpack.c.l.b16 %v2936
  %v4214 = vunpack.c.h.b16 %v2936
  %v4215 = vunpack.c.l.b16 %v2937
  %v4216 = vunpack.c.h.b16 %v2937
  %v4217 = vunpack.c.l.b16 %v2938
  %v4218 = vunpack.c.h.b16 %v2938
  %v4219 = vunpack.c.l.b16 %v2939
  %v4220 = vunpack.c.l.b16 %v2940
  %v4221 = vunpack.c.h.b16 %v2940
  %v4222 = vunpack.c.l.b16 %v2941
  %v4223 = vunpack.c.h.b16 %v2941
  %v4224 = vunpack.c.l.b16 %v2942
  %v4225 = vunpack.c.h.b16 %v2942
  %v4226 = vunpack.c.l.b16 %v2943
  %v4227 = vunpack.c.l.b16 %v2944
  %v4228 = vunpack.c.h.b16 %v2944
  %v4229 = vunpack.c.l.b16 %v2945
  %v4230 = vunpack.c.h.b16 %v2945
  %v4231 = vunpack.c.l.b16 %v2946
  %v4232 = vunpack.c.h.b16 %v2946
  %v4233 = vunpack.c.l.b16 %v2947
  %v4234 = vunpack.c.l.b16 %v2948
  %v4235 = vunpack.c.h.b16 %v2948
  %v4236 = vunpack.c.l.b16 %v2949
  %v4237 = vunpack.c.h.b16 %v2949
  %v4238 = vunpack.c.l.b16 %v2950
  %v4239 = vunpack.c.h.b16 %v2950
  %v4240 = vunpack.c.l.b16 %v2951
  %v4241 = vunpack.c.l.b16 %v2952
  %v4242 = vunpack.c.h.b16 %v2952
  %v4243 = vunpack.c.l.b16 %v2953
  %v4244 = vunpack.c.h.b16 %v2953
  %v4245 = vunpack.c.l.b16 %v2954
  %v4246 = vunpack.c.h.b16 %v2954
  %v4247 = vunpack.c.l.b16 %v2955
  %v4248 = vunpack.c.l.b16 %v2956
  %v4249 = vunpack.c.h.b16 %v2956
  %v4250 = vunpack.c.l.b16 %v2957
  %v4251 = vunpack.c.h.b16 %v2957
  %v4252 = vunpack.c.l.b16 %v2958
  %v4253 = vunpack.c.h.b16 %v2958
  %v4254 = vunpack.c.l.b16 %v2959
  %v4255 = vunpack.c.l.b16 %v2960
  %v4256 = vunpack.c.h.b16 %v2960
  %v4257 = vunpack.c.l.b16 %v2961
  %v4258 = vunpack.c.h.b16 %v2961
  %v4259 = vunpack.c.l.b16 %v2962
  %v4260 = vunpack.c.h.b16 %v2962
  %v4261 = vunpack.c.l.b16 %v2963
  %v4262 = vunpack.c.l.b16 %v2964
  %v4263 = vunpack.c.h.b16 %v2964
  %v4264 = vunpack.c.l.b16 %v2965
  %v4265 = vunpack.c.h.b16 %v2965
  %v4266 = vunpack.c.l.b16 %v2966
  %v4267 = vunpack.c.h.b16 %v2966
  %v4268 = vunpack.c.l.b16 %v2967
  %v4269 = vunpack.c.l.b16 %v2968
  %v4270 = vunpack.c.h.b16 %v2968
  %v4271 = vunpack.c.l.b16 %v2969
  %v4272 = vunpack.c.h.b16 %v2969
  %v4273 = vunpack.c.l.b16 %v2970
  %v4274 = vunpack.c.h.b16 %v2970
  %v4275 = vunpack.c.l.b16 %v2971
  %v4276 = vunpack.c.l.b16 %v2972
  %v4277 = vunpack.c.h.b16 %v2972
  %v4278 = vunpack.c.l.b16 %v2973
  %v4279 = vunpack.c.h.b16 %v2973
  %v4280 = vunpack.c.l.b16 %v2974
  %v4281 = vunpack.c.h.b16 %v2974
  %v4282 = vunpack.c.l.b16 %v2975
  %v4283 = vunpack.c.l.b16 %v2976
  %v4284 = vunpack.c.h.b16 %v2976
  %v4285 = vunpack.c.l.b16 %v2977
  %v4286 = vunpack.c.h.b16 %v2977
  %v4287 = vunpack.c.l.b16 %v2978
  %v4288 = vunpack.c.h.b16 %v2978
  %v4289 = vunpack.c.l.b16 %v2979
  %v4290 = vunpack.c.l.b16 %v2980
  %v4291 = vunpack.c.h.b16 %v2980
  %v4292 = vunpack.c.l.b16 %v2981
  %v4293 = vunpack.c.h.b16 %v2981
  %v4294 = vunpack.c.l.b16 %v2982
  %v4295 = vunpack.c.h.b16 %v2982
  %v4296 = vunpack.c.l.b16 %v2983
  %v4297 = vunpack.c.l.b16 %v2984
  %v4298 = vunpack.c.h.b16 %v2984
  %v4299 = vunpack.c.l.b16 %v2985
  %v4300 = vunpack.c.h.b16 %v2985
  %v4301 = vunpack.c.l.b16 %v2986
  %v4302 = vunpack.c.h.b16 %v2986
  %v4303 = vunpack.c.l.b16 %v2987
  %v4304 = vunpack.c.l.b16 %v2988
  %v4305 = vunpack.c.h.b16 %v2988
  %v4306 = vunpack.c.l.b16 %v2989
  %v4307 = vunpack.c.h.b16 %v2989
  %v4308 = vunpack.c.l.b16 %v2990
  %v4309 = vunpack.c.h.b16 %v2990
  %v4310 = vunpack.c.l.b16 %v2991
  %v4311 = vunpack.c.l.b16 %v2992
  %v4312 = vunpack.c.h.b16 %v2992
  %v4313 = vunpack.c.l.b16 %v2993
  %v4314 = vunpack.c.h.b16 %v2993
  %v4315 = vunpack.c.l.b16 %v2994
  %v4316 = vunpack.c.h.b16 %v2994
  %v4317 = vunpack.c.l.b16 %v2995
  %v4318 = vunpack.c.l.b16 %v2996
  %v4319 = vunpack.c.h.b16 %v2996
  %v4320 = vunpack.c.l.b16 %v2997
  %v4321 = vunpack.c.h.b16 %v2997
  %v4322 = vunpack.c.l.b16 %v2998
  %v4323 = vunpack.c.h.b16 %v2998
  %v4324 = vunpack.c.l.b16 %v2999
  %v4325 = vunpack.c.l.b16 %v3000
  %v4326 = vunpack.c.h.b16 %v3000
  %v4327 = vunpack.c.l.b16 %v3001
  %v4328 = vunpack.c.h.b16 %v3001
  %v4329 = vunpack.c.l.b16 %v3002
  %v4330 = vunpack.c.h.b16 %v3002
  %v4331 = vunpack.c.l.b16 %v3003
  %v4332 = vunpack.c.l.b16 %v3004
  %v4333 = vunpack.c.h.b16 %v3004
  %v4334 = vunpack.c.l.b16 %v3005
  %v4335 = vunpack.c.h.b16 %v3005
  %v4336 = vunpack.c.l.b16 %v3006
  %v4337 = vunpack.c.h.b16 %v3006
  %v4338 = vunpack.c.l.b16 %v3007
  %v4339 = vunpack.c.l.b16 %v3008
  %v4340 = vunpack.c.h.b16 %v3008
  %v4341 = vunpack.c.l.b16 %v3009
  %v4342 = vunpack.c.h.b16 %v3009
  %v4343 = vunpack.c.l.b16 %v3010
  %v4344 = vunpack.c.h.b16 %v3010
  %v4345 = vunpack.c.l.b16 %v3011
  %v4346 = vunpack.c.l.b16 %v3012
  %v4347 = vunpack.c.h.b16 %v3012
  %v4348 = vunpack.c.l.b16 %v3013
  %v4349 = vunpack.c.h.b16 %v3013
  %v4350 = vunpack.c.l.b16 %v3014
  %v4351 = vunpack.c.h.b16 %v3014
  %v4352 = vunpack.c.l.b16 %v3015
  %v4353 = vunpack.c.l.b16 %v3016
  %v4354 = vunpack.c.h.b16 %v3016
  %v4355 = vunpack.c.l.b16 %v3017
  %v4356 = vunpack.c.h.b16 %v3017
  %v4357 = vunpack.c.l.b16 %v3018
  %v4358 = vunpack.c.h.b16 %v3018
  %v4359 = vunpack.c.l.b16 %v3019
  %v4360 = vunpack.c.l.b16 %v3020
  %v4361 = vunpack.c.h.b16 %v3020
  %v4362 = vunpack.c.l.b16 %v3021
  %v4363 = vunpack.c.h.b16 %v3021
  %v4364 = vunpack.c.l.b16 %v3022
  %v4365 = vunpack.c.h.b16 %v3022
  %v4366 = vunpack.c.l.b16 %v3023
  %v4367 = vunpack.c.l.b16 %v3024
  %v4368 = vunpack.c.h.b16 %v3024
  %v4369 = vunpack.c.l.b16 %v3025
  %v4370 = vunpack.c.h.b16 %v3025
  %v4371 = vunpack.c.l.b16 %v3026
  %v4372 = vunpack.c.h.b16 %v3026
  %v4373 = vunpack.c.l.b16 %v3027
  %v4374 = vunpack.c.l.b16 %v3028
  %v4375 = vunpack.c.h.b16 %v3028
  %v4376 = vunpack.c.l.b16 %v3029
  %v4377 = vunpack.c.h.b16 %v3029
  %v4378 = vunpack.c.l.b16 %v3030
  %v4379 = vunpack.c.h.b16 %v3030
  %v4380 = vunpack.c.l.b16 %v3031
  %v4381 = vunpack.c.l.b16 %v3032
  %v4382 = vunpack.c.h.b16 %v3032
  %v4383 = vunpack.c.l.b16 %v3033
  %v4384 = vunpack.c.h.b16 %v3033
  %v4385 = vunpack.c.l.b16 %v3034
  %v4386 = vunpack.c.h.b16 %v3034
  %v4387 = vunpack.c.l.b16 %v3035
  %v4388 = vunpack.c.l.b16 %v3036
  %v4389 = vunpack.c.h.b16 %v3036
  %v4390 = vunpack.c.l.b16 %v3037
  %v4391 = vunpack.c.h.b16 %v3037
  %v4392 = vunpack.c.l.b16 %v3038
  %v4393 = vunpack.c.h.b16 %v3038
  %v4394 = vunpack.c.l.b16 %v3039
  %v4395 = vunpack.c.l.b16 %v3040
  %v4396 = vunpack.c.h.b16 %v3040
  %v4397 = vunpack.c.l.b16 %v3041
  %v4398 = vunpack.c.h.b16 %v3041
  %v4399 = vunpack.c.l.b16 %v3042
  %v4400 = vunpack.c.h.b16 %v3042
  %v4401 = vunpack.c.l.b16 %v3043
  %v4402 = vunpack.c.l.b16 %v3044
  %v4403 = vunpack.c.h.b16 %v3044
  %v4404 = vunpack.c.l.b16 %v3045
  %v4405 = vunpack.c.h.b16 %v3045
  %v4406 = vunpack.c.l.b16 %v3046
  %v4407 = vunpack.c.h.b16 %v3046
  %v4408 = vunpack.c.l.b16 %v3047
  %v4409 = vunpack.c.l.b16 %v3048
  %v4410 = vunpack.c.h.b16 %v3048
  %v4411 = vunpack.c.l.b16 %v3049
  %v4412 = vunpack.c.h.b16 %v3049
  %v4413 = vunpack.c.l.b16 %v3050
  %v4414 = vunpack.c.h.b16 %v3050
  %v4415 = vunpack.c.l.b16 %v3051
  %v4416 = vunpack.c.l.b16 %v3052
  %v4417 = vunpack.c.h.b16 %v3052
  %v4418 = vunpack.c.l.b16 %v3053
  %v4419 = vunpack.c.h.b16 %v3053
  %v4420 = vunpack.c.l.b16 %v3054
  %v4421 = vunpack.c.h.b16 %v3054
  %v4422 = vunpack.c.l.b16 %v3055
  %v4423 = vunpack.c.l.b16 %v3056
  %v4424 = vunpack.c.h.b16 %v3056
  %v4425 = vunpack.c.l.b16 %v3057
  %v4426 = vunpack.c.h.b16 %v3057
  %v4427 = vunpack.c.l.b16 %v3058
  %v4428 = vunpack.c.h.b16 %v3058
  %v4429 = vunpack.c.l.b16 %v3059
  %v4430 = vunpack.c.l.b16 %v3060
  %v4431 = vunpack.c.h.b16 %v3060
  %v4432 = vunpack.c.l.b16 %v3061
  %v4433 = vunpack.c.h.b16 %v3061
  %v4434 = vunpack.c.l.b16 %v3062
  %v4435 = vunpack.c.h.b16 %v3062
  %v4436 = vunpack.c.l.b16 %v3063
  %v4437 = vunpack.c.l.b16 %v3064
  %v4438 = vunpack.c.h.b16 %v3064
  %v4439 = vunpack.c.l.b16 %v3065
  %v4440 = vunpack.c.h.b16 %v3065
  %v4441 = vunpack.c.l.b16 %v3066
  %v4442 = vunpack.c.h.b16 %v3066
  %v4443 = vunpack.c.l.b16 %v3067
  %v4444 = vunpack.c.l.b16 %v3068
  %v4445 = vunpack.c.h.b16 %v3068
  %v4446 = vunpack.c.l.b16 %v3069
  %v4447 = vunpack.c.h.b16 %v3069
  %v4448 = vunpack.c.l.b16 %v3070
  %v4449 = vunpack.c.h.b16 %v3070
  %v4450 = vunpack.c.l.b16 %v3071
  %v4451 = vunpack.c.l.b16 %v3072
  %v4452 = vunpack.c.h.b16 %v3072
  %v4453 = vunpack.c.l.b16 %v3073
  %v4454 = vunpack.c.h.b16 %v3073
  %v4455 = vunpack.c.l.b16 %v3074
  %v4456 = vunpack.c.h.b16 %v3074
  %v4457 = vunpack.c.l.b16 %v3075
  %v4458 = vunpack.c.l.b16 %v3076
  %v4459 = vunpack.c.h.b16 %v3076
  %v4460 = vunpack.c.l.b16 %v3077
  %v4461 = vunpack.c.h.b16 %v3077
  %v4462 = vunpack.c.l.b16 %v3078
  %v4463 = vunpack.c.h.b16 %v3078
  %v4464 = vunpack.c.l.b16 %v3079
  %v4465 = vunpack.c.l.b16 %v3080
  %v4466 = vunpack.c.h.b16 %v3080
  %v4467 = vunpack.c.l.b16 %v3081
  %v4468 = vunpack.c.h.b16 %v3081
  %v4469 = vunpack.c.l.b16 %v3082
  %v4470 = vunpack.c.h.b16 %v3082
  %v4471 = vunpack.c.l.b16 %v3083
  %v4472 = vunpack.c.l.b16 %v3084
  %v4473 = vunpack.c.h.b16 %v3084
  %v4474 = vunpack.c.l.b16 %v3085
  %v4475 = vunpack.c.h.b16 %v3085
  %v4476 = vunpack.c.l.b16 %v3086
  %v4477 = vunpack.c.h.b16 %v3086
  %v4478 = vunpack.c.l.b16 %v3087
  %v4479 = vunpack.c.l.b16 %v3088
  %v4480 = vunpack.c.h.b16 %v3088
  %v4481 = vunpack.c.l.b16 %v3089
  %v4482 = vunpack.c.h.b16 %v3089
  %v4483 = vunpack.c.l.b16 %v3090
  %v4484 = vunpack.c.h.b16 %v3090
  %v4485 = vunpack.c.l.b16 %v3091
  %v4486 = vunpack.c.l.b16 %v3092
  %v4487 = vunpack.c.h.b16 %v3092
  %v4488 = vunpack.c.l.b16 %v3093
  %v4489 = vunpack.c.h.b16 %v3093
  %v4490 = vunpack.c.l.b16 %v3094
  %v4491 = vunpack.c.h.b16 %v3094
  %v4492 = vunpack.c.l.b16 %v3095
  %v4493 = vunpack.c.l.b16 %v3096
  %v4494 = vunpack.c.h.b16 %v3096
  %v4495 = vunpack.c.l.b16 %v3097
  %v4496 = vunpack.c.h.b16 %v3097
  %v4497 = vunpack.c.l.b16 %v3098
  %v4498 = vunpack.c.h.b16 %v3098
  %v4499 = vunpack.c.l.b16 %v3099
  %v4500 = vunpack.c.l.b16 %v3100
  %v4501 = vunpack.c.h.b16 %v3100
  %v4502 = vunpack.c.l.b16 %v3101
  %v4503 = vunpack.c.h.b16 %v3101
  %v4504 = vunpack.c.l.b16 %v3102
  %v4505 = vunpack.c.h.b16 %v3102
  %v4506 = vunpack.c.l.b16 %v3103
  %v4507 = vunpack.c.l.b16 %v3104
  %v4508 = vunpack.c.h.b16 %v3104
  %v4509 = vunpack.c.l.b16 %v3105
  %v4510 = vunpack.c.h.b16 %v3105
  %v4511 = vunpack.c.l.b16 %v3106
  %v4512 = vunpack.c.h.b16 %v3106
  %v4513 = vunpack.c.l.b16 %v3107
  %v4514 = vunpack.c.l.b16 %v3108
  %v4515 = vunpack.c.h.b16 %v3108
  %v4516 = vunpack.c.l.b16 %v3109
  %v4517 = vunpack.c.h.b16 %v3109
  %v4518 = vunpack.c.l.b16 %v3110
  %v4519 = vunpack.c.h.b16 %v3110
  %v4520 = vunpack.c.l.b16 %v3111
  %v4521 = vunpack.c.l.b16 %v3112
  %v4522 = vunpack.c.h.b16 %v3112
  %v4523 = vunpack.c.l.b16 %v3113
  %v4524 = vunpack.c.h.b16 %v3113
  %v4525 = vunpack.c.l.b16 %v3114
  %v4526 = vunpack.c.h.b16 %v3114
  %v4527 = vunpack.c.l.b16 %v3115
  %v4528 = vunpack.c.l.b16 %v3116
  %v4529 = vunpack.c.h.b16 %v3116
  %v4530 = vunpack.c.l.b16 %v3117
  %v4531 = vunpack.c.h.b16 %v3117
  %v4532 = vunpack.c.l.b16 %v3118
  %v4533 = vunpack.c.h.b16 %v3118
  %v4534 = vunpack.c.l.b16 %v3119
  %v4535 = vunpack.c.l.b16 %v3120
  %v4536 = vunpack.c.h.b16 %v3120
  %v4537 = vunpack.c.l.b16 %v3121
  %v4538 = vunpack.c.h.b16 %v3121
  %v4539 = vunpack.c.l.b16 %v3122
  %v4540 = vunpack.c.h.b16 %v3122
  %v4541 = vunpack.c.l.b16 %v3123
  %v4542 = vunpack.c.l.b16 %v3124
  %v4543 = vunpack.c.h.b16 %v3124
  %v4544 = vunpack.c.l.b16 %v3125
  %v4545 = vunpack.c.h.b16 %v3125
  %v4546 = vunpack.c.l.b16 %v3126
  %v4547 = vunpack.c.h.b16 %v3126
  %v4548 = vunpack.c.l.b16 %v3127
  %v4549 = vunpack.c.l.b16 %v3128
  %v4550 = vunpack.c.h.b16 %v3128
  %v4551 = vunpack.c.l.b16 %v3129
  %v4552 = vunpack.c.h.b16 %v3129
  %v4553 = vunpack.c.l.b16 %v3130
  %v4554 = vunpack.c.h.b16 %v3130
  %v4555 = vunpack.c.l.b16 %v3131
  %v4556 = vunpack.c.l.b16 %v3132
  %v4557 = vunpack.c.h.b16 %v3132
  %v4558 = vunpack.c.l.b16 %v3133
  %v4559 = vunpack.c.h.b16 %v3133
  %v4560 = vunpack.c.l.b16 %v3134
  %v4561 = vunpack.c.h.b16 %v3134
  %v4562 = vunpack.c.l.b16 %v3135
  %v4563 = vunpack.c.l.b16 %v3136
  %v4564 = vunpack.c.h.b16 %v3136
  %v4565 = vunpack.c.l.b16 %v3137
  %v4566 = vunpack.c.h.b16 %v3137
  %v4567 = vunpack.c.l.b16 %v3138
  %v4568 = vunpack.c.h.b16 %v3138
  %v4569 = vunpack.c.l.b16 %v3139
  %v4570 = vunpack.c.l.b16 %v3140
  %v4571 = vunpack.c.h.b16 %v3140
  %v4572 = vunpack.c.l.b16 %v3141
  %v4573 = vunpack.c.h.b16 %v3141
  %v4574 = vunpack.c.l.b16 %v3142
  %v4575 = vunpack.c.h.b16 %v3142
  %v4576 = vunpack.c.l.b16 %v3143
  %v4577 = vunpack.c.l.b16 %v3144
  %v4578 = vunpack.c.h.b16 %v3144
  %v4579 = vunpack.c.l.b16 %v3145
  %v4580 = vunpack.c.h.b16 %v3145
  %v4581 = vunpack.c.l.b16 %v3146
  %v4582 = vunpack.c.h.b16 %v3146
  %v4583 = vunpack.c.l.b16 %v3147
  %v4584 = vunpack.c.l.b16 %v3148
  %v4585 = vunpack.c.h.b16 %v3148
  %v4586 = vunpack.c.l.b16 %v3149
  %v4587 = vunpack.c.h.b16 %v3149
  %v4588 = vunpack.c.l.b16 %v3150
  %v4589 = vunpack.c.h.b16 %v3150
  %v4590 = vunpack.c.l.b16 %v3151
  %v4591 = vunpack.c.l.b16 %v3152
  %v4592 = vunpack.c.h.b16 %v3152
  %v4593 = vunpack.c.l.b16 %v3153
  %v4594 = vunpack.c.h.b16 %v3153
  %v4595 = vunpack.c.l.b16 %v3154
  %v4596 = vunpack.c.h.b16 %v3154
  %v4597 = vunpack.c.l.b16 %v3155
  %v4598 = vunpack.c.l.b16 %v3156
  %v4599 = vunpack.c.h.b16 %v3156
  %v4600 = vunpack.c.l.b16 %v3157
  %v4601 = vunpack.c.h.b16 %v3157
  %v4602 = vunpack.c.l.b16 %v3158
  %v4603 = vunpack.c.h.b16 %v3158
  %v4604 = vunpack.c.l.b16 %v3159
  %v4605 = vpack.c.b16 %v3716, %v3709
  %v4606 = vpack.c.b16 %v3717, %v3710
  %v4607 = vpack.c.b16 %v3718, %v3711
  %v4608 = vpack.c.b16 %v3719, %v3712
  %v4609 = vpack.c.b16 %v3720, %v3713
  %v4610 = vpack.c.b16 %v3721, %v3714
  %v4611 = vpack.c.b16 %v3722, %v3715
  %v4612 = vpack.c.b16 %v3730, %v3723
  %v4613 = vpack.c.b16 %v3731, %v3724
  %v4614 = vpack.c.b16 %v3732, %v3725
  %v4615 = vpack.c.b16 %v3733, %v3726
  %v4616 = vpack.c.b16 %v3734, %v3727
  %v4617 = vpack.c.b16 %v3735, %v3728
  %v4618 = vpack.c.b16 %v3736, %v3729
  %v4619 = vpack.c.b16 %v3744, %v3737
  %v4620 = vpack.c.b16 %v3745, %v3738
  %v4621 = vpack.c.b16 %v3746, %v3739
  %v4622 = vpack.c.b16 %v3747, %v3740
  %v4623 = vpack.c.b16 %v3748, %v3741
  %v4624 = vpack.c.b16 %v3749, %v3742
  %v4625 = vpack.c.b16 %v3750, %v3743
  %v4626 = vpack.c.b16 %v3758, %v3751
  %v4627 = vpack.c.b16 %v3759, %v3752
  %v4628 = vpack.c.b16 %v3760, %v3753
  %v4629 = vpack.c.b16 %v3761, %v3754
  %v4630 = vpack.c.b16 %v3762, %v3755
  %v4631 = vpack.c.b16 %v3763, %v3756
  %v4632 = vpack.c.b16 %v3764, %v3757
  %v4633 = vpack.c.b16 %v3772, %v3765
  %v4634 = vpack.c.b16 %v3773, %v3766
  %v4635 = vpack.c.b16 %v3774, %v3767
  %v4636 = vpack.c.b16 %v3775, %v3768
  %v4637 = vpack.c.b16 %v3776, %v3769
  %v4638 = vpack.c.b16 %v3777, %v3770
  %v4639 = vpack.c.b16 %v3778, %v3771
  %v4640 = vpack.c.b16 %v3786, %v3779
  %v4641 = vpack.c.b16 %v3787, %v3780
  %v4642 = vpack.c.b16 %v3788, %v3781
  %v4643 = vpack.c.b16 %v3789, %v3782
  %v4644 = vpack.c.b16 %v3790, %v3783
  %v4645 = vpack.c.b16 %v3791, %v3784
  %v4646 = vpack.c.b16 %v3792, %v3785
  %v4647 = vpack.c.b16 %v3800, %v3793
  %v4648 = vpack.c.b16 %v3801, %v3794
  %v4649 = vpack.c.b16 %v3802, %v3795
  %v4650 = vpack.c.b16 %v3803, %v3796
  %v4651 = vpack.c.b16 %v3804, %v3797
  %v4652 = vpack.c.b16 %v3805, %v3798
  %v4653 = vpack.c.b16 %v3806, %v3799
  %v4654 = vpack.c.b16 %v3814, %v3807
  %v4655 = vpack.c.b16 %v3815, %v3808
  %v4656 = vpack.c.b16 %v3816, %v3809
  %v4657 = vpack.c.b16 %v3817, %v3810
  %v4658 = vpack.c.b16 %v3818, %v3811
  %v4659 = vpack.c.b16 %v3819, %v3812
  %v4660 = vpack.c.b16 %v3820, %v3813
  %v4661 = vpack.c.b16 %v3828, %v3821
  %v4662 = vpack.c.b16 %v3829, %v3822
  %v4663 = vpack.c.b16 %v3830, %v3823
  %v4664 = vpack.c.b16 %v3831, %v3824
  %v4665 = vpack.c.b16 %v3832, %v3825
  %v4666 = vpack.c.b16 %v3833, %v3826
  %v4667 = vpack.c.b16 %v3834, %v3827
  %v4668 = vpack.c.b16 %v3842, %v3835
  %v4669 = vpack.c.b16 %v3843, %v3836
  %v4670 = vpack.c.b16 %v3844, %v3837
  %v4671 = vpack.c.b16 %v3845, %v3838
  %v4672 = vpack.c.b16 %v3846, %v3839
  %v4673 = vpack.c.b16 %v3847, %v3840
  %v4674 = vpack.c.b16 %v3848, %v3841
  %v4675 = vpack.c.b16 %v3856, %v3849
  %v4676 = vpack.c.b16 %v3857, %v3850
  %v4677 = vpack.c.b16 %v3858, %v3851
  %v4678 = vpack.c.b16 %v3859, %v3852
  %v4679 = vpack.c.b16 %v3860, %v3853
  %v4680 = vpack.c.b16 %v3861, %v3854
  %v4681 = vpack.c.b16 %v3862, %v3855
  %v4682 = vpack.c.b16 %v3870, %v3863
  %v4683 = vpack.c.b16 %v3871, %v3864
  %v4684 = vpack.c.b16 %v3872, %v3865
  %v4685 = vpack.c.b16 %v3873, %v3866
  %v4686 = vpack.c.b16 %v3874, %v3867
  %v4687 = vpack.c.b16 %v3875, %v3868
  %v4688 = vpack.c.b16 %v3876, %v3869
  %v4689 = vpack.c.b16 %v3884, %v3877
  %v4690 = vpack.c.b16 %v3885, %v3878
  %v4691 = vpack.c.b16 %v3886, %v3879
  %v4692 = vpack.c.b16 %v3887, %v3880
  %v4693 = vpack.c.b16 %v3888, %v3881
  %v4694 = vpack.c.b16 %v3889, %v3882
  %v4695 = vpack.c.b16 %v3890, %v3883
  %v4696 = vpack.c.b16 %v3898, %v3891
  %v4697 = vpack.c.b16 %v3899, %v3892
  %v4698 = vpack.c.b16 %v3900, %v3893
  %v4699 = vpack.c.b16 %v3901, %v3894
  %v4700 = vpack.c.b16 %v3902, %v3895
  %v4701 = vpack.c.b16 %v3903, %v3896
  %v4702 = vpack.c.b16 %v3904, %v3897
  %v4703 = vpack.c.b16 %v3912, %v3905
  %v4704 = vpack.c.b16 %v3913, %v3906
  %v4705 = vpack.c.b16 %v3914, %v3907
  %v4706 = vpack.c.b16 %v3915, %v3908
  %v4707 = vpack.c.b16 %v3916, %v3909
  %v4708 = vpack.c.b16 %v3917, %v3910
  %v4709 = vpack.c.b16 %v3918, %v3911
  %v4710 = vpack.c.b16 %v3926, %v3919
  %v4711 = vpack.c.b16 %v3927, %v3920
  %v4712 = vpack.c.b16 %v3928, %v3921
  %v4713 = vpack.c.b16 %v3929, %v3922
  %v4714 = vpack.c.b16 %v3930, %v3923
  %v4715 = vpack.c.b16 %v3931, %v3924
  %v4716 = vpack.c.b16 %v3932, %v3925
  %v4717 = vpack.c.b16 %v3940, %v3933
  %v4718 = vpack.c.b16 %v3941, %v3934
  %v4719 = vpack.c.b16 %v3942, %v3935
  %v4720 = vpack.c.b16 %v3943, %v3936
  %v4721 = vpack.c.b16 %v3944, %v3937
  %v4722 = vpack.c.b16 %v3945, %v3938
  %v4723 = vpack.c.b16 %v3946, %v3939
  %v4724 = vpack.c.b16 %v3954, %v3947
  %v4725 = vpack.c.b16 %v3955, %v3948
  %v4726 = vpack.c.b16 %v3956, %v3949
  %v4727 = vpack.c.b16 %v3957, %v3950
  %v4728 = vpack.c.b16 %v3958, %v3951
  %v4729 = vpack.c.b16 %v3959, %v3952
  %v4730 = vpack.c.b16 %v3960, %v3953
  %v4731 = vpack.c.b16 %v3968, %v3961
  %v4732 = vpack.c.b16 %v3969, %v3962
  %v4733 = vpack.c.b16 %v3970, %v3963
  %v4734 = vpack.c.b16 %v3971, %v3964
  %v4735 = vpack.c.b16 %v3972, %v3965
  %v4736 = vpack.c.b16 %v3973, %v3966
  %v4737 = vpack.c.b16 %v3974, %v3967
  %v4738 = vpack.c.b16 %v3982, %v3975
  %v4739 = vpack.c.b16 %v3983, %v3976
  %v4740 = vpack.c.b16 %v3984, %v3977
  %v4741 = vpack.c.b16 %v3985, %v3978
  %v4742 = vpack.c.b16 %v3986, %v3979
  %v4743 = vpack.c.b16 %v3987, %v3980
  %v4744 = vpack.c.b16 %v3988, %v3981
  %v4745 = vpack.c.b16 %v3996, %v3989
  %v4746 = vpack.c.b16 %v3997, %v3990
  %v4747 = vpack.c.b16 %v3998, %v3991
  %v4748 = vpack.c.b16 %v3999, %v3992
  %v4749 = vpack.c.b16 %v4000, %v3993
  %v4750 = vpack.c.b16 %v4001, %v3994
  %v4751 = vpack.c.b16 %v4002, %v3995
  %v4752 = vpack.c.b16 %v4010, %v4003
  %v4753 = vpack.c.b16 %v4011, %v4004
  %v4754 = vpack.c.b16 %v4012, %v4005
  %v4755 = vpack.c.b16 %v4013, %v4006
  %v4756 = vpack.c.b16 %v4014, %v4007
  %v4757 = vpack.c.b16 %v4015, %v4008
  %v4758 = vpack.c.b16 %v4016, %v4009
  %v4759 = vpack.c.b16 %v4024, %v4017
  %v4760 = vpack.c.b16 %v4025, %v4018
  %v4761 = vpack.c.b16 %v4026, %v4019
  %v4762 = vpack.c.b16 %v4027, %v4020
  %v4763 = vpack.c.b16 %v4028, %v4021
  %v4764 = vpack.c.b16 %v4029, %v4022
  %v4765 = vpack.c.b16 %v4030, %v4023
  %v4766 = vpack.c.b16 %v4038, %v4031
  %v4767 = vpack.c.b16 %v4039, %v4032
  %v4768 = vpack.c.b16 %v4040, %v4033
  %v4769 = vpack.c.b16 %v4041, %v4034
  %v4770 = vpack.c.b16 %v4042, %v4035
  %v4771 = vpack.c.b16 %v4043, %v4036
  %v4772 = vpack.c.b16 %v4044, %v4037
  %v4773 = vpack.c.b16 %v4052, %v4045
  %v4774 = vpack.c.b16 %v4053, %v4046
  %v4775 = vpack.c.b16 %v4054, %v4047
  %v4776 = vpack.c.b16 %v4055, %v4048
  %v4777 = vpack.c.b16 %v4056, %v4049
  %v4778 = vpack.c.b16 %v4057, %v4050
  %v4779 = vpack.c.b16 %v4058, %v4051
  %v4780 = vpack.c.b16 %v4066, %v4059
  %v4781 = vpack.c.b16 %v4067, %v4060
  %v4782 = vpack.c.b16 %v4068, %v4061
  %v4783 = vpack.c.b16 %v4069, %v4062
  %v4784 = vpack.c.b16 %v4070, %v4063
  %v4785 = vpack.c.b16 %v4071, %v4064
  %v4786 = vpack.c.b16 %v4072, %v4065
  %v4787 = vpack.c.b16 %v4080, %v4073
  %v4788 = vpack.c.b16 %v4081, %v4074
  %v4789 = vpack.c.b16 %v4082, %v4075
  %v4790 = vpack.c.b16 %v4083, %v4076
  %v4791 = vpack.c.b16 %v4084, %v4077
  %v4792 = vpack.c.b16 %v4085, %v4078
  %v4793 = vpack.c.b16 %v4086, %v4079
  %v4794 = vpack.c.b16 %v4094, %v4087
  %v4795 = vpack.c.b16 %v4095, %v4088
  %v4796 = vpack.c.b16 %v4096, %v4089
  %v4797 = vpack.c.b16 %v4097, %v4090
  %v4798 = vpack.c.b16 %v4098, %v4091
  %v4799 = vpack.c.b16 %v4099, %v4092
  %v4800 = vpack.c.b16 %v4100, %v4093
  %v4801 = vpack.c.b16 %v4108, %v4101
  %v4802 = vpack.c.b16 %v4109, %v4102
  %v4803 = vpack.c.b16 %v4110, %v4103
  %v4804 = vpack.c.b16 %v4111, %v4104
  %v4805 = vpack.c.b16 %v4112, %v4105
  %v4806 = vpack.c.b16 %v4113, %v4106
  %v4807 = vpack.c.b16 %v4114, %v4107
  %v4808 = vpack.c.b16 %v4122, %v4115
  %v4809 = vpack.c.b16 %v4123, %v4116
  %v4810 = vpack.c.b16 %v4124, %v4117
  %v4811 = vpack.c.b16 %v4125, %v4118
  %v4812 = vpack.c.b16 %v4126, %v4119
  %v4813 = vpack.c.b16 %v4127, %v4120
  %v4814 = vpack.c.b16 %v4128, %v4121
  %v4815 = vpack.c.b16 %v4136, %v4129
  %v4816 = vpack.c.b16 %v4137, %v4130
  %v4817 = vpack.c.b16 %v4138, %v4131
  %v4818 = vpack.c.b16 %v4139, %v4132
  %v4819 = vpack.c.b16 %v4140, %v4133
  %v4820 = vpack.c.b16 %v4141, %v4134
  %v4821 = vpack.c.b16 %v4142, %v4135
  %v4822 = vpack.c.b16 %v4150, %v4143
  %v4823 = vpack.c.b16 %v4151, %v4144
  %v4824 = vpack.c.b16 %v4152, %v4145
  %v4825 = vpack.c.b16 %v4153, %v4146
  %v4826 = vpack.c.b16 %v4154, %v4147
  %v4827 = vpack.c.b16 %v4155, %v4148
  %v4828 = vpack.c.b16 %v4156, %v4149
  %v4829 = vpack.c.b16 %v4164, %v4157
  %v4830 = vpack.c.b16 %v4165, %v4158
  %v4831 = vpack.c.b16 %v4166, %v4159
  %v4832 = vpack.c.b16 %v4167, %v4160
  %v4833 = vpack.c.b16 %v4168, %v4161
  %v4834 = vpack.c.b16 %v4169, %v4162
  %v4835 = vpack.c.b16 %v4170, %v4163
  %v4836 = vpack.c.b16 %v4178, %v4171
  %v4837 = vpack.c.b16 %v4179, %v4172
  %v4838 = vpack.c.b16 %v4180, %v4173
  %v4839 = vpack.c.b16 %v4181, %v4174
  %v4840 = vpack.c.b16 %v4182, %v4175
  %v4841 = vpack.c.b16 %v4183, %v4176
  %v4842 = vpack.c.b16 %v4184, %v4177
  %v4843 = vpack.c.b16 %v4192, %v4185
  %v4844 = vpack.c.b16 %v4193, %v4186
  %v4845 = vpack.c.b16 %v4194, %v4187
  %v4846 = vpack.c.b16 %v4195, %v4188
  %v4847 = vpack.c.b16 %v4196, %v4189
  %v4848 = vpack.c.b16 %v4197, %v4190
  %v4849 = vpack.c.b16 %v4198, %v4191
  %v4850 = vpack.c.b16 %v4206, %v4199
  %v4851 = vpack.c.b16 %v4207, %v4200
  %v4852 = vpack.c.b16 %v4208, %v4201
  %v4853 = vpack.c.b16 %v4209, %v4202
  %v4854 = vpack.c.b16 %v4210, %v4203
  %v4855 = vpack.c.b16 %v4211, %v4204
  %v4856 = vpack.c.b16 %v4212, %v4205
  %v4857 = vpack.c.b16 %v4220, %v4213
  %v4858 = vpack.c.b16 %v4221, %v4214
  %v4859 = vpack.c.b16 %v4222, %v4215
  %v4860 = vpack.c.b16 %v4223, %v4216
  %v4861 = vpack.c.b16 %v4224, %v4217
  %v4862 = vpack.c.b16 %v4225, %v4218
  %v4863 = vpack.c.b16 %v4226, %v4219
  %v4864 = vpack.c.b16 %v4234, %v4227
  %v4865 = vpack.c.b16 %v4235, %v4228
  %v4866 = vpack.c.b16 %v4236, %v4229
  %v4867 = vpack.c.b16 %v4237, %v4230
  %v4868 = vpack.c.b16 %v4238, %v4231
  %v4869 = vpack.c.b16 %v4239, %v4232
  %v4870 = vpack.c.b16 %v4240, %v4233
  %v4871 = vpack.c.b16 %v4248, %v4241
  %v4872 = vpack.c.b16 %v4249, %v4242
  %v4873 = vpack.c.b16 %v4250, %v4243
  %v4874 = vpack.c.b16 %v4251, %v4244
  %v4875 = vpack.c.b16 %v4252, %v4245
  %v4876 = vpack.c.b16 %v4253, %v4246
  %v4877 = vpack.c.b16 %v4254, %v4247
  %v4878 = vpack.c.b16 %v4262, %v4255
  %v4879 = vpack.c.b16 %v4263, %v4256
  %v4880 = vpack.c.b16 %v4264, %v4257
  %v4881 = vpack.c.b16 %v4265, %v4258
  %v4882 = vpack.c.b16 %v4266, %v4259
  %v4883 = vpack.c.b16 %v4267, %v4260
  %v4884 = vpack.c.b16 %v4268, %v4261
  %v4885 = vpack.c.b16 %v4276, %v4269
  %v4886 = vpack.c.b16 %v4277, %v4270
  %v4887 = vpack.c.b16 %v4278, %v4271
  %v4888 = vpack.c.b16 %v4279, %v4272
  %v4889 = vpack.c.b16 %v4280, %v4273
  %v4890 = vpack.c.b16 %v4281, %v4274
  %v4891 = vpack.c.b16 %v4282, %v4275
  %v4892 = vpack.c.b16 %v4290, %v4283
  %v4893 = vpack.c.b16 %v4291, %v4284
  %v4894 = vpack.c.b16 %v4292, %v4285
  %v4895 = vpack.c.b16 %v4293, %v4286
  %v4896 = vpack.c.b16 %v4294, %v4287
  %v4897 = vpack.c.b16 %v4295, %v4288
  %v4898 = vpack.c.b16 %v4296, %v4289
  %v4899 = vpack.c.b16 %v4304, %v4297
  %v4900 = vpack.c.b16 %v4305, %v4298
  %v4901 = vpack.c.b16 %v4306, %v4299
  %v4902 = vpack.c.b16 %v4307, %v4300
  %v4903 = vpack.c.b16 %v4308, %v4301
  %v4904 = vpack.c.b16 %v4309, %v4302
  %v4905 = vpack.c.b16 %v4310, %v4303
  %v4906 = vpack.c.b16 %v4318, %v4311
  %v4907 = vpack.c.b16 %v4319, %v4312
  %v4908 = vpack.c.b16 %v4320, %v4313
  %v4909 = vpack.c.b16 %v4321, %v4314
  %v4910 = vpack.c.b16 %v4322, %v4315
  %v4911 = vpack.c.b16 %v4323, %v4316
  %v4912 = vpack.c.b16 %v4324, %v4317
  %v4913 = vpack.c.b16 %v4332, %v4325
  %v4914 = vpack.c.b16 %v4333, %v4326
  %v4915 = vpack.c.b16 %v4334, %v4327
  %v4916 = vpack.c.b16 %v4335, %v4328
  %v4917 = vpack.c.b16 %v4336, %v4329
  %v4918 = vpack.c.b16 %v4337, %v4330
  %v4919 = vpack.c.b16 %v4338, %v4331
  %v4920 = vpack.c.b16 %v4346, %v4339
  %v4921 = vpack.c.b16 %v4347, %v4340
  %v4922 = vpack.c.b16 %v4348, %v4341
  %v4923 = vpack.c.b16 %v4349, %v4342
  %v4924 = vpack.c.b16 %v4350, %v4343
  %v4925 = vpack.c.b16 %v4351, %v4344
  %v4926 = vpack.c.b16 %v4352, %v4345
  %v4927 = vpack.c.b16 %v4360, %v4353
  %v4928 = vpack.c.b16 %v4361, %v4354
  %v4929 = vpack.c.b16 %v4362, %v4355
  %v4930 = vpack.c.b16 %v4363, %v4356
  %v4931 = vpack.c.b16 %v4364, %v4357
  %v4932 = vpack.c.b16 %v4365, %v4358
  %v4933 = vpack.c.b16 %v4366, %v4359
  %v4934 = vpack.c.b16 %v4374, %v4367
  %v4935 = vpack.c.b16 %v4375, %v4368
  %v4936 = vpack.c.b16 %v4376, %v4369
  %v4937 = vpack.c.b16 %v4377, %v4370
  %v4938 = vpack.c.b16 %v4378, %v4371
  %v4939 = vpack.c.b16 %v4379, %v4372
  %v4940 = vpack.c.b16 %v4380, %v4373
  %v4941 = vpack.c.b16 %v4388, %v4381
  %v4942 = vpack.c.b16 %v4389, %v4382
  %v4943 = vpack.c.b16 %v4390, %v4383
  %v4944 = vpack.c.b16 %v4391, %v4384
  %v4945 = vpack.c.b16 %v4392, %v4385
  %v4946 = vpack.c.b16 %v4393, %v4386
  %v4947 = vpack.c.b16 %v4394, %v4387
  %v4948 = vpack.c.b16 %v4402, %v4395
  %v4949 = vpack.c.b16 %v4403, %v4396
  %v4950 = vpack.c.b16 %v4404, %v4397
  %v4951 = vpack.c.b16 %v4405, %v4398
  %v4952 = vpack.c.b16 %v4406, %v4399
  %v4953 = vpack.c.b16 %v4407, %v4400
  %v4954 = vpack.c.b16 %v4408, %v4401
  %v4955 = vpack.c.b16 %v4416, %v4409
  %v4956 = vpack.c.b16 %v4417, %v4410
  %v4957 = vpack.c.b16 %v4418, %v4411
  %v4958 = vpack.c.b16 %v4419, %v4412
  %v4959 = vpack.c.b16 %v4420, %v4413
  %v4960 = vpack.c.b16 %v4421, %v4414
  %v4961 = vpack.c.b16 %v4422, %v4415
  %v4962 = vpack.c.b16 %v4430, %v4423
  %v4963 = vpack.c.b16 %v4431, %v4424
  %v4964 = vpack.c.b16 %v4432, %v4425
  %v4965 = vpack.c.b16 %v4433, %v4426
  %v4966 = vpack.c.b16 %v4434, %v4427
  %v4967 = vpack.c.b16 %v4435, %v4428
  %v4968 = vpack.c.b16 %v4436, %v4429
  %v4969 = vpack.c.b16 %v4444, %v4437
  %v4970 = vpack.c.b16 %v4445, %v4438
  %v4971 = vpack.c.b16 %v4446, %v4439
  %v4972 = vpack.c.b16 %v4447, %v4440
  %v4973 = vpack.c.b16 %v4448, %v4441
  %v4974 = vpack.c.b16 %v4449, %v4442
  %v4975 = vpack.c.b16 %v4450, %v4443
  %v4976 = vpack.c.b16 %v4458, %v4451
  %v4977 = vpack.c.b16 %v4459, %v4452
  %v4978 = vpack.c.b16 %v4460, %v4453
  %v4979 = vpack.c.b16 %v4461, %v4454
  %v4980 = vpack.c.b16 %v4462, %v4455
  %v4981 = vpack.c.b16 %v4463, %v4456
  %v4982 = vpack.c.b16 %v4464, %v4457
  %v4983 = vpack.c.b16 %v4472, %v4465
  %v4984 = vpack.c.b16 %v4473, %v4466
  %v4985 = vpack.c.b16 %v4474, %v4467
  %v4986 = vpack.c.b16 %v4475, %v4468
  %v4987 = vpack.c.b16 %v4476, %v4469
  %v4988 = vpack.c.b16 %v4477, %v4470
  %v4989 = vpack.c.b16 %v4478, %v4471
  %v4990 = vpack.c.b16 %v4486, %v4479
  %v4991 = vpack.c.b16 %v4487, %v4480
  %v4992 = vpack.c.b16 %v4488, %v4481
  %v4993 = vpack.c.b16 %v4489, %v4482
  %v4994 = vpack.c.b16 %v4490, %v4483
  %v4995 = vpack.c.b16 %v4491, %v4484
  %v4996 = vpack.c.b16 %v4492, %v4485
  %v4997 = vpack.c.b16 %v4500, %v4493
  %v4998 = vpack.c.b16 %v4501, %v4494
  %v4999 = vpack.c.b16 %v4502, %v4495
  %v5000 = vpack.c.b16 %v4503, %v4496
  %v5001 = vpack.c.b16 %v4504, %v4497
  %v5002 = vpack.c.b16 %v4505, %v4498
  %v5003 = vpack.c.b16 %v4506, %v4499
  %v5004 = vpack.c.b16 %v4514, %v4507
  %v5005 = vpack.c.b16 %v4515, %v4508
  %v5006 = vpack.c.b16 %v4516, %v4509
  %v5007 = vpack.c.b16 %v4517, %v4510
  %v5008 = vpack.c.b16 %v4518, %v4511
  %v5009 = vpack.c.b16 %v4519, %v4512
  %v5010 = vpack.c.b16 %v4520, %v4513
  %v5011 = vpack.c.b16 %v4528, %v4521
  %v5012 = vpack.c.b16 %v4529, %v4522
  %v5013 = vpack.c.b16 %v4530, %v4523
  %v5014 = vpack.c.b16 %v4531, %v4524
  %v5015 = vpack.c.b16 %v4532, %v4525
  %v5016 = vpack.c.b16 %v4533, %v4526
  %v5017 = vpack.c.b16 %v4534, %v4527
  %v5018 = vpack.c.b16 %v4542, %v4535
  %v5019 = vpack.c.b16 %v4543, %v4536
  %v5020 = vpack.c.b16 %v4544, %v4537
  %v5021 = vpack.c.b16 %v4545, %v4538
  %v5022 = vpack.c.b16 %v4546, %v4539
  %v5023 = vpack.c.b16 %v4547, %v4540
  %v5024 = vpack.c.b16 %v4548, %v4541
  %v5025 = vpack.c.b16 %v4556, %v4549
  %v5026 = vpack.c.b16 %v4557, %v4550
  %v5027 = vpack.c.b16 %v4558, %v4551
  %v5028 = vpack.c.b16 %v4559, %v4552
  %v5029 = vpack.c.b16 %v4560, %v4553
  %v5030 = vpack.c.b16 %v4561, %v4554
  %v5031 = vpack.c.b16 %v4562, %v4555
  %v5032 = vpack.c.b16 %v4570, %v4563
  %v5033 = vpack.c.b16 %v4571, %v4564
  %v5034 = vpack.c.b16 %v4572, %v4565
  %v5035 = vpack.c.b16 %v4573, %v4566
  %v5036 = vpack.c.b16 %v4574, %v4567
  %v5037 = vpack.c.b16 %v4575, %v4568
  %v5038 = vpack.c.b16 %v4576, %v4569
  %v5039 = vpack.c.b16 %v4584, %v4577
  %v5040 = vpack.c.b16 %v4585, %v4578
  %v5041 = vpack.c.b16 %v4586, %v4579
  %v5042 = vpack.c.b16 %v4587, %v4580
  %v5043 = vpack.c.b16 %v4588, %v4581
  %v5044 = vpack.c.b16 %v4589, %v4582
  %v5045 = vpack.c.b16 %v4590, %v4583
  %v5046 = vpack.c.b16 %v4598, %v4591
  %v5047 = vpack.c.b16 %v4599, %v4592
  %v5048 = vpack.c.b16 %v4600, %v4593
  %v5049 = vpack.c.b16 %v4601, %v4594
  %v5050 = vpack.c.b16 %v4602, %v4595
  %v5051 = vpack.c.b16 %v4603, %v4596
  %v5052 = vpack.c.b16 %v4604, %v4597
  %5501 = vmatprep.subr.bf16.mxu0 %v4655
  %5502 = vmatpush1.bf16.msra.mxu0 %v4654
  %5503 = vmatprep.subr.bf16.mxu0 %v4648
  %5504 = vmatpush1.bf16.msra.mxu0 %v4647
  %5505 = vmatprep.subr.bf16.mxu0 %v4641
  %5506 = vmatpush1.bf16.msra.mxu0 %v4640
  %5507 = vmatprep.subr.bf16.mxu0 %v4634
  %5508 = vmatpush1.bf16.msra.mxu0 %v4633
  %5509 = vmatprep.subr.bf16.mxu0 %v4627
  %5510 = vmatpush1.bf16.msra.mxu0 %v4626
  %5511 = vmatprep.subr.bf16.mxu0 %v4620
  %5512 = vmatpush1.bf16.msra.mxu0 %v4619
  %5513 = vmatprep.subr.bf16.mxu0 %v4613
  %5514 = vmatpush1.bf16.msra.mxu0 %v4612
  %5515 = vmatprep.subr.bf16.mxu0 %v4606
  %5516 = vmatpush1.bf16.msra.mxu0 %v4605
  %5517 = vmatprep.subr.bf16.mxu0 %v4711
  %5518 = vmatpush2.bf16.msra.mxu0 %v4710
  %5519 = vmatprep.subr.bf16.mxu0 %v4704
  %5520 = vmatpush2.bf16.msra.mxu0 %v4703
  %5521 = vmatprep.subr.bf16.mxu0 %v4697
  %5522 = vmatpush2.bf16.msra.mxu0 %v4696
  %5523 = vmatprep.subr.bf16.mxu0 %v4690
  %5524 = vmatpush2.bf16.msra.mxu0 %v4689
  %5525 = vmatprep.subr.bf16.mxu0 %v4683
  %5526 = vmatpush2.bf16.msra.mxu0 %v4682
  %5527 = vmatprep.subr.bf16.mxu0 %v4676
  %5528 = vmatpush2.bf16.msra.mxu0 %v4675
  %5529 = vmatprep.subr.bf16.mxu0 %v4669
  %5530 = vmatpush2.bf16.msra.mxu0 %v4668
  %5531 = vmatprep.subr.bf16.mxu0 %v4662
  %5532 = vmatpush2.bf16.msra.mxu0 %v4661
  %5533 = vmatprep.mubr.bf16.mxu0 %v2641
  %5534 = vmatmul.mubr.bf16.gmra.mxu0 %v2640
  %v5535 = vpop.f32.mrf.mxu0
  %v5536 = vadd.f32 %v3165, %v5535
  %v5537 = vpop.f32.mrf.mxu0
  %v5538 = vadd.f32 %v3169, %v5537
  %v5539 = vpop.f32.mrf.mxu0
  %v5540 = vadd.f32 %v3165, %v5539
  %v5541 = vpop.f32.mrf.mxu0
  %v5542 = vadd.f32 %v3169, %v5541
  %5543 = vdwg.mxu0
  %5544 = vmatprep.subr.bf16.mxu0 %v4767
  %5545 = vmatpush1.bf16.msra.mxu0 %v4766
  %5546 = vmatprep.subr.bf16.mxu0 %v4760
  %5547 = vmatpush1.bf16.msra.mxu0 %v4759
  %5548 = vmatprep.subr.bf16.mxu0 %v4753
  %5549 = vmatpush1.bf16.msra.mxu0 %v4752
  %5550 = vmatprep.subr.bf16.mxu0 %v4746
  %5551 = vmatpush1.bf16.msra.mxu0 %v4745
  %5552 = vmatprep.subr.bf16.mxu0 %v4739
  %5553 = vmatpush1.bf16.msra.mxu0 %v4738
  %5554 = vmatprep.subr.bf16.mxu0 %v4732
  %5555 = vmatpush1.bf16.msra.mxu0 %v4731
  %5556 = vmatprep.subr.bf16.mxu0 %v4725
  %5557 = vmatpush1.bf16.msra.mxu0 %v4724
  %5558 = vmatprep.subr.bf16.mxu0 %v4718
  %5559 = vmatpush1.bf16.msra.mxu0 %v4717
  %5560 = vmatprep.subr.bf16.mxu0 %v4823
  %5561 = vmatpush2.bf16.msra.mxu0 %v4822
  %5562 = vmatprep.subr.bf16.mxu0 %v4816
  %5563 = vmatpush2.bf16.msra.mxu0 %v4815
  %5564 = vmatprep.subr.bf16.mxu0 %v4809
  %5565 = vmatpush2.bf16.msra.mxu0 %v4808
  %5566 = vmatprep.subr.bf16.mxu0 %v4802
  %5567 = vmatpush2.bf16.msra.mxu0 %v4801
  %5568 = vmatprep.subr.bf16.mxu0 %v4795
  %5569 = vmatpush2.bf16.msra.mxu0 %v4794
  %5570 = vmatprep.subr.bf16.mxu0 %v4788
  %5571 = vmatpush2.bf16.msra.mxu0 %v4787
  %5572 = vmatprep.subr.bf16.mxu0 %v4781
  %5573 = vmatpush2.bf16.msra.mxu0 %v4780
  %5574 = vmatprep.subr.bf16.mxu0 %v4774
  %5575 = vmatpush2.bf16.msra.mxu0 %v4773
  %5576 = vmatprep.mubr.bf16.mxu0 %v2643
  %5577 = vmatmul.mubr.bf16.gmra.mxu0 %v2642
  %v5578 = vpop.f32.mrf.mxu0
  %v5579 = vadd.f32 %v5536, %v5578
  %v5580 = vpop.f32.mrf.mxu0
  %v5581 = vadd.f32 %v5538, %v5580
  %v5582 = vpop.f32.mrf.mxu0
  %v5583 = vadd.f32 %v5540, %v5582
  %v5584 = vpop.f32.mrf.mxu0
  %v5585 = vadd.f32 %v5542, %v5584
  %5586 = vdwg.mxu0
  %5587 = vmatprep.subr.bf16.mxu0 %v4879
  %5588 = vmatpush1.bf16.msra.mxu0 %v4878
  %5589 = vmatprep.subr.bf16.mxu0 %v4872
  %5590 = vmatpush1.bf16.msra.mxu0 %v4871
  %5591 = vmatprep.subr.bf16.mxu0 %v4865
  %5592 = vmatpush1.bf16.msra.mxu0 %v4864
  %5593 = vmatprep.subr.bf16.mxu0 %v4858
  %5594 = vmatpush1.bf16.msra.mxu0 %v4857
  %5595 = vmatprep.subr.bf16.mxu0 %v4851
  %5596 = vmatpush1.bf16.msra.mxu0 %v4850
  %5597 = vmatprep.subr.bf16.mxu0 %v4844
  %5598 = vmatpush1.bf16.msra.mxu0 %v4843
  %5599 = vmatprep.subr.bf16.mxu0 %v4837
  %5600 = vmatpush1.bf16.msra.mxu0 %v4836
  %5601 = vmatprep.subr.bf16.mxu0 %v4830
  %5602 = vmatpush1.bf16.msra.mxu0 %v4829
  %5603 = vmatprep.subr.bf16.mxu0 %v4935
  %5604 = vmatpush2.bf16.msra.mxu0 %v4934
  %5605 = vmatprep.subr.bf16.mxu0 %v4928
  %5606 = vmatpush2.bf16.msra.mxu0 %v4927
  %5607 = vmatprep.subr.bf16.mxu0 %v4921
  %5608 = vmatpush2.bf16.msra.mxu0 %v4920
  %5609 = vmatprep.subr.bf16.mxu0 %v4914
  %5610 = vmatpush2.bf16.msra.mxu0 %v4913
  %5611 = vmatprep.subr.bf16.mxu0 %v4907
  %5612 = vmatpush2.bf16.msra.mxu0 %v4906
  %5613 = vmatprep.subr.bf16.mxu0 %v4900
  %5614 = vmatpush2.bf16.msra.mxu0 %v4899
  %5615 = vmatprep.subr.bf16.mxu0 %v4893
  %5616 = vmatpush2.bf16.msra.mxu0 %v4892
  %5617 = vmatprep.subr.bf16.mxu0 %v4886
  %5618 = vmatpush2.bf16.msra.mxu0 %v4885
  %5619 = vmatprep.mubr.bf16.mxu0 %v2645
  %5620 = vmatmul.mubr.bf16.gmra.mxu0 %v2644
  %v5621 = vpop.f32.mrf.mxu0
  %v5622 = vadd.f32 %v5579, %v5621
  %v5623 = vpop.f32.mrf.mxu0
  %v5624 = vadd.f32 %v5581, %v5623
  %v5625 = vpop.f32.mrf.mxu0
  %v5626 = vadd.f32 %v5583, %v5625
  %v5627 = vpop.f32.mrf.mxu0
  %v5628 = vadd.f32 %v5585, %v5627
  %5629 = vdwg.mxu0
  %5630 = vmatprep.subr.bf16.mxu0 %v4991
  %5631 = vmatpush1.bf16.msra.mxu0 %v4990
  %5632 = vmatprep.subr.bf16.mxu0 %v4984
  %5633 = vmatpush1.bf16.msra.mxu0 %v4983
  %5634 = vmatprep.subr.bf16.mxu0 %v4977
  %5635 = vmatpush1.bf16.msra.mxu0 %v4976
  %5636 = vmatprep.subr.bf16.mxu0 %v4970
  %5637 = vmatpush1.bf16.msra.mxu0 %v4969
  %5638 = vmatprep.subr.bf16.mxu0 %v4963
  %5639 = vmatpush1.bf16.msra.mxu0 %v4962
  %5640 = vmatprep.subr.bf16.mxu0 %v4956
  %5641 = vmatpush1.bf16.msra.mxu0 %v4955
  %5642 = vmatprep.subr.bf16.mxu0 %v4949
  %5643 = vmatpush1.bf16.msra.mxu0 %v4948
  %5644 = vmatprep.subr.bf16.mxu0 %v4942
  %5645 = vmatpush1.bf16.msra.mxu0 %v4941
  %5646 = vmatprep.subr.bf16.mxu0 %v5047
  %5647 = vmatpush2.bf16.msra.mxu0 %v5046
  %5648 = vmatprep.subr.bf16.mxu0 %v5040
  %5649 = vmatpush2.bf16.msra.mxu0 %v5039
  %5650 = vmatprep.subr.bf16.mxu0 %v5033
  %5651 = vmatpush2.bf16.msra.mxu0 %v5032
  %5652 = vmatprep.subr.bf16.mxu0 %v5026
  %5653 = vmatpush2.bf16.msra.mxu0 %v5025
  %5654 = vmatprep.subr.bf16.mxu0 %v5019
  %5655 = vmatpush2.bf16.msra.mxu0 %v5018
  %5656 = vmatprep.subr.bf16.mxu0 %v5012
  %5657 = vmatpush2.bf16.msra.mxu0 %v5011
  %5658 = vmatprep.subr.bf16.mxu0 %v5005
  %5659 = vmatpush2.bf16.msra.mxu0 %v5004
  %5660 = vmatprep.subr.bf16.mxu0 %v4998
  %5661 = vmatpush2.bf16.msra.mxu0 %v4997
  %5662 = vmatprep.mubr.bf16.mxu0 %v2647
  %5663 = vmatmul.mubr.bf16.gmra.mxu0 %v2646
  %v5664 = vpop.f32.mrf.mxu0
  %v5665 = vadd.f32 %v5622, %v5664
  %v5666 = vpop.f32.mrf.mxu0
  %v5667 = vadd.f32 %v5624, %v5666
  %v5668 = vpop.f32.mrf.mxu0
  %v5669 = vadd.f32 %v5626, %v5668
  %v5670 = vpop.f32.mrf.mxu0
  %v5671 = vadd.f32 %v5628, %v5670
  %5672 = vdwg.mxu0
  %5673 = vmatprep.subr.bf16.mxu0 %v4657
  %5674 = vmatpush1.bf16.msra.mxu0 %v4656
  %5675 = vmatprep.subr.bf16.mxu0 %v4650
  %5676 = vmatpush1.bf16.msra.mxu0 %v4649
  %5677 = vmatprep.subr.bf16.mxu0 %v4643
  %5678 = vmatpush1.bf16.msra.mxu0 %v4642
  %5679 = vmatprep.subr.bf16.mxu0 %v4636
  %5680 = vmatpush1.bf16.msra.mxu0 %v4635
  %5681 = vmatprep.subr.bf16.mxu0 %v4629
  %5682 = vmatpush1.bf16.msra.mxu0 %v4628
  %5683 = vmatprep.subr.bf16.mxu0 %v4622
  %5684 = vmatpush1.bf16.msra.mxu0 %v4621
  %5685 = vmatprep.subr.bf16.mxu0 %v4615
  %5686 = vmatpush1.bf16.msra.mxu0 %v4614
  %5687 = vmatprep.subr.bf16.mxu0 %v4608
  %5688 = vmatpush1.bf16.msra.mxu0 %v4607
  %5689 = vmatprep.subr.bf16.mxu0 %v4713
  %5690 = vmatpush2.bf16.msra.mxu0 %v4712
  %5691 = vmatprep.subr.bf16.mxu0 %v4706
  %5692 = vmatpush2.bf16.msra.mxu0 %v4705
  %5693 = vmatprep.subr.bf16.mxu0 %v4699
  %5694 = vmatpush2.bf16.msra.mxu0 %v4698
  %5695 = vmatprep.subr.bf16.mxu0 %v4692
  %5696 = vmatpush2.bf16.msra.mxu0 %v4691
  %5697 = vmatprep.subr.bf16.mxu0 %v4685
  %5698 = vmatpush2.bf16.msra.mxu0 %v4684
  %5699 = vmatprep.subr.bf16.mxu0 %v4678
  %5700 = vmatpush2.bf16.msra.mxu0 %v4677
  %5701 = vmatprep.subr.bf16.mxu0 %v4671
  %5702 = vmatpush2.bf16.msra.mxu0 %v4670
  %5703 = vmatprep.subr.bf16.mxu0 %v4664
  %5704 = vmatpush2.bf16.msra.mxu0 %v4663
  %5705 = vmatprep.mubr.bf16.mxu0 %v2641
  %5706 = vmatmul.mubr.bf16.gmra.mxu0 %v2640
  %v5707 = vpop.f32.mrf.mxu0
  %v5708 = vadd.f32 %v3173, %v5707
  %v5709 = vpop.f32.mrf.mxu0
  %v5710 = vadd.f32 %v3177, %v5709
  %v5711 = vpop.f32.mrf.mxu0
  %v5712 = vadd.f32 %v3173, %v5711
  %v5713 = vpop.f32.mrf.mxu0
  %v5714 = vadd.f32 %v3177, %v5713
  %5715 = vdwg.mxu0
  %5716 = vmatprep.subr.bf16.mxu0 %v4769
  %5717 = vmatpush1.bf16.msra.mxu0 %v4768
  %5718 = vmatprep.subr.bf16.mxu0 %v4762
  %5719 = vmatpush1.bf16.msra.mxu0 %v4761
  %5720 = vmatprep.subr.bf16.mxu0 %v4755
  %5721 = vmatpush1.bf16.msra.mxu0 %v4754
  %5722 = vmatprep.subr.bf16.mxu0 %v4748
  %5723 = vmatpush1.bf16.msra.mxu0 %v4747
  %5724 = vmatprep.subr.bf16.mxu0 %v4741
  %5725 = vmatpush1.bf16.msra.mxu0 %v4740
  %5726 = vmatprep.subr.bf16.mxu0 %v4734
  %5727 = vmatpush1.bf16.msra.mxu0 %v4733
  %5728 = vmatprep.subr.bf16.mxu0 %v4727
  %5729 = vmatpush1.bf16.msra.mxu0 %v4726
  %5730 = vmatprep.subr.bf16.mxu0 %v4720
  %5731 = vmatpush1.bf16.msra.mxu0 %v4719
  %5732 = vmatprep.subr.bf16.mxu0 %v4825
  %5733 = vmatpush2.bf16.msra.mxu0 %v4824
  %5734 = vmatprep.subr.bf16.mxu0 %v4818
  %5735 = vmatpush2.bf16.msra.mxu0 %v4817
  %5736 = vmatprep.subr.bf16.mxu0 %v4811
  %5737 = vmatpush2.bf16.msra.mxu0 %v4810
  %5738 = vmatprep.subr.bf16.mxu0 %v4804
  %5739 = vmatpush2.bf16.msra.mxu0 %v4803
  %5740 = vmatprep.subr.bf16.mxu0 %v4797
  %5741 = vmatpush2.bf16.msra.mxu0 %v4796
  %5742 = vmatprep.subr.bf16.mxu0 %v4790
  %5743 = vmatpush2.bf16.msra.mxu0 %v4789
  %5744 = vmatprep.subr.bf16.mxu0 %v4783
  %5745 = vmatpush2.bf16.msra.mxu0 %v4782
  %5746 = vmatprep.subr.bf16.mxu0 %v4776
  %5747 = vmatpush2.bf16.msra.mxu0 %v4775
  %5748 = vmatprep.mubr.bf16.mxu0 %v2643
  %5749 = vmatmul.mubr.bf16.gmra.mxu0 %v2642
  %v5750 = vpop.f32.mrf.mxu0
  %v5751 = vadd.f32 %v5708, %v5750
  %v5752 = vpop.f32.mrf.mxu0
  %v5753 = vadd.f32 %v5710, %v5752
  %v5754 = vpop.f32.mrf.mxu0
  %v5755 = vadd.f32 %v5712, %v5754
  %v5756 = vpop.f32.mrf.mxu0
  %v5757 = vadd.f32 %v5714, %v5756
  %5758 = vdwg.mxu0
  %5759 = vmatprep.subr.bf16.mxu0 %v4881
  %5760 = vmatpush1.bf16.msra.mxu0 %v4880
  %5761 = vmatprep.subr.bf16.mxu0 %v4874
  %5762 = vmatpush1.bf16.msra.mxu0 %v4873
  %5763 = vmatprep.subr.bf16.mxu0 %v4867
  %5764 = vmatpush1.bf16.msra.mxu0 %v4866
  %5765 = vmatprep.subr.bf16.mxu0 %v4860
  %5766 = vmatpush1.bf16.msra.mxu0 %v4859
  %5767 = vmatprep.subr.bf16.mxu0 %v4853
  %5768 = vmatpush1.bf16.msra.mxu0 %v4852
  %5769 = vmatprep.subr.bf16.mxu0 %v4846
  %5770 = vmatpush1.bf16.msra.mxu0 %v4845
  %5771 = vmatprep.subr.bf16.mxu0 %v4839
  %5772 = vmatpush1.bf16.msra.mxu0 %v4838
  %5773 = vmatprep.subr.bf16.mxu0 %v4832
  %5774 = vmatpush1.bf16.msra.mxu0 %v4831
  %5775 = vmatprep.subr.bf16.mxu0 %v4937
  %5776 = vmatpush2.bf16.msra.mxu0 %v4936
  %5777 = vmatprep.subr.bf16.mxu0 %v4930
  %5778 = vmatpush2.bf16.msra.mxu0 %v4929
  %5779 = vmatprep.subr.bf16.mxu0 %v4923
  %5780 = vmatpush2.bf16.msra.mxu0 %v4922
  %5781 = vmatprep.subr.bf16.mxu0 %v4916
  %5782 = vmatpush2.bf16.msra.mxu0 %v4915
  %5783 = vmatprep.subr.bf16.mxu0 %v4909
  %5784 = vmatpush2.bf16.msra.mxu0 %v4908
  %5785 = vmatprep.subr.bf16.mxu0 %v4902
  %5786 = vmatpush2.bf16.msra.mxu0 %v4901
  %5787 = vmatprep.subr.bf16.mxu0 %v4895
  %5788 = vmatpush2.bf16.msra.mxu0 %v4894
  %5789 = vmatprep.subr.bf16.mxu0 %v4888
  %5790 = vmatpush2.bf16.msra.mxu0 %v4887
  %5791 = vmatprep.mubr.bf16.mxu0 %v2645
  %5792 = vmatmul.mubr.bf16.gmra.mxu0 %v2644
  %v5793 = vpop.f32.mrf.mxu0
  %v5794 = vadd.f32 %v5751, %v5793
  %v5795 = vpop.f32.mrf.mxu0
  %v5796 = vadd.f32 %v5753, %v5795
  %v5797 = vpop.f32.mrf.mxu0
  %v5798 = vadd.f32 %v5755, %v5797
  %v5799 = vpop.f32.mrf.mxu0
  %v5800 = vadd.f32 %v5757, %v5799
  %5801 = vdwg.mxu0
  %5802 = vmatprep.subr.bf16.mxu0 %v4993
  %5803 = vmatpush1.bf16.msra.mxu0 %v4992
  %5804 = vmatprep.subr.bf16.mxu0 %v4986
  %5805 = vmatpush1.bf16.msra.mxu0 %v4985
  %5806 = vmatprep.subr.bf16.mxu0 %v4979
  %5807 = vmatpush1.bf16.msra.mxu0 %v4978
  %5808 = vmatprep.subr.bf16.mxu0 %v4972
  %5809 = vmatpush1.bf16.msra.mxu0 %v4971
  %5810 = vmatprep.subr.bf16.mxu0 %v4965
  %5811 = vmatpush1.bf16.msra.mxu0 %v4964
  %5812 = vmatprep.subr.bf16.mxu0 %v4958
  %5813 = vmatpush1.bf16.msra.mxu0 %v4957
  %5814 = vmatprep.subr.bf16.mxu0 %v4951
  %5815 = vmatpush1.bf16.msra.mxu0 %v4950
  %5816 = vmatprep.subr.bf16.mxu0 %v4944
  %5817 = vmatpush1.bf16.msra.mxu0 %v4943
  %5818 = vmatprep.subr.bf16.mxu0 %v5049
  %5819 = vmatpush2.bf16.msra.mxu0 %v5048
  %5820 = vmatprep.subr.bf16.mxu0 %v5042
  %5821 = vmatpush2.bf16.msra.mxu0 %v5041
  %5822 = vmatprep.subr.bf16.mxu0 %v5035
  %5823 = vmatpush2.bf16.msra.mxu0 %v5034
  %5824 = vmatprep.subr.bf16.mxu0 %v5028
  %5825 = vmatpush2.bf16.msra.mxu0 %v5027
  %5826 = vmatprep.subr.bf16.mxu0 %v5021
  %5827 = vmatpush2.bf16.msra.mxu0 %v5020
  %5828 = vmatprep.subr.bf16.mxu0 %v5014
  %5829 = vmatpush2.bf16.msra.mxu0 %v5013
  %5830 = vmatprep.subr.bf16.mxu0 %v5007
  %5831 = vmatpush2.bf16.msra.mxu0 %v5006
  %5832 = vmatprep.subr.bf16.mxu0 %v5000
  %5833 = vmatpush2.bf16.msra.mxu0 %v4999
  %5834 = vmatprep.mubr.bf16.mxu0 %v2647
  %5835 = vmatmul.mubr.bf16.gmra.mxu0 %v2646
  %v5836 = vpop.f32.mrf.mxu0
  %v5837 = vadd.f32 %v5794, %v5836
  %v5838 = vpop.f32.mrf.mxu0
  %v5839 = vadd.f32 %v5796, %v5838
  %v5840 = vpop.f32.mrf.mxu0
  %v5841 = vadd.f32 %v5798, %v5840
  %v5842 = vpop.f32.mrf.mxu0
  %v5843 = vadd.f32 %v5800, %v5842
  %5844 = vdwg.mxu0
  %5845 = vmatprep.subr.bf16.mxu0 %v4659
  %5846 = vmatpush1.bf16.msra.mxu0 %v4658
  %5847 = vmatprep.subr.bf16.mxu0 %v4652
  %5848 = vmatpush1.bf16.msra.mxu0 %v4651
  %5849 = vmatprep.subr.bf16.mxu0 %v4645
  %5850 = vmatpush1.bf16.msra.mxu0 %v4644
  %5851 = vmatprep.subr.bf16.mxu0 %v4638
  %5852 = vmatpush1.bf16.msra.mxu0 %v4637
  %5853 = vmatprep.subr.bf16.mxu0 %v4631
  %5854 = vmatpush1.bf16.msra.mxu0 %v4630
  %5855 = vmatprep.subr.bf16.mxu0 %v4624
  %5856 = vmatpush1.bf16.msra.mxu0 %v4623
  %5857 = vmatprep.subr.bf16.mxu0 %v4617
  %5858 = vmatpush1.bf16.msra.mxu0 %v4616
  %5859 = vmatprep.subr.bf16.mxu0 %v4610
  %5860 = vmatpush1.bf16.msra.mxu0 %v4609
  %5861 = vmatprep.subr.bf16.mxu0 %v4715
  %5862 = vmatpush2.bf16.msra.mxu0 %v4714
  %5863 = vmatprep.subr.bf16.mxu0 %v4708
  %5864 = vmatpush2.bf16.msra.mxu0 %v4707
  %5865 = vmatprep.subr.bf16.mxu0 %v4701
  %5866 = vmatpush2.bf16.msra.mxu0 %v4700
  %5867 = vmatprep.subr.bf16.mxu0 %v4694
  %5868 = vmatpush2.bf16.msra.mxu0 %v4693
  %5869 = vmatprep.subr.bf16.mxu0 %v4687
  %5870 = vmatpush2.bf16.msra.mxu0 %v4686
  %5871 = vmatprep.subr.bf16.mxu0 %v4680
  %5872 = vmatpush2.bf16.msra.mxu0 %v4679
  %5873 = vmatprep.subr.bf16.mxu0 %v4673
  %5874 = vmatpush2.bf16.msra.mxu0 %v4672
  %5875 = vmatprep.subr.bf16.mxu0 %v4666
  %5876 = vmatpush2.bf16.msra.mxu0 %v4665
  %5877 = vmatprep.mubr.bf16.mxu0 %v2641
  %5878 = vmatmul.mubr.bf16.gmra.mxu0 %v2640
  %v5879 = vpop.f32.mrf.mxu0
  %v5880 = vadd.f32 %v3181, %v5879
  %v5881 = vpop.f32.mrf.mxu0
  %v5882 = vadd.f32 %v3185, %v5881
  %v5883 = vpop.f32.mrf.mxu0
  %v5884 = vadd.f32 %v3181, %v5883
  %v5885 = vpop.f32.mrf.mxu0
  %v5886 = vadd.f32 %v3185, %v5885
  %5887 = vdwg.mxu0
  %5888 = vmatprep.subr.bf16.mxu0 %v4771
  %5889 = vmatpush1.bf16.msra.mxu0 %v4770
  %5890 = vmatprep.subr.bf16.mxu0 %v4764
  %5891 = vmatpush1.bf16.msra.mxu0 %v4763
  %5892 = vmatprep.subr.bf16.mxu0 %v4757
  %5893 = vmatpush1.bf16.msra.mxu0 %v4756
  %5894 = vmatprep.subr.bf16.mxu0 %v4750
  %5895 = vmatpush1.bf16.msra.mxu0 %v4749
  %5896 = vmatprep.subr.bf16.mxu0 %v4743
  %5897 = vmatpush1.bf16.msra.mxu0 %v4742
  %5898 = vmatprep.subr.bf16.mxu0 %v4736
  %5899 = vmatpush1.bf16.msra.mxu0 %v4735
  %5900 = vmatprep.subr.bf16.mxu0 %v4729
  %5901 = vmatpush1.bf16.msra.mxu0 %v4728
  %5902 = vmatprep.subr.bf16.mxu0 %v4722
  %5903 = vmatpush1.bf16.msra.mxu0 %v4721
  %5904 = vmatprep.subr.bf16.mxu0 %v4827
  %5905 = vmatpush2.bf16.msra.mxu0 %v4826
  %5906 = vmatprep.subr.bf16.mxu0 %v4820
  %5907 = vmatpush2.bf16.msra.mxu0 %v4819
  %5908 = vmatprep.subr.bf16.mxu0 %v4813
  %5909 = vmatpush2.bf16.msra.mxu0 %v4812
  %5910 = vmatprep.subr.bf16.mxu0 %v4806
  %5911 = vmatpush2.bf16.msra.mxu0 %v4805
  %5912 = vmatprep.subr.bf16.mxu0 %v4799
  %5913 = vmatpush2.bf16.msra.mxu0 %v4798
  %5914 = vmatprep.subr.bf16.mxu0 %v4792
  %5915 = vmatpush2.bf16.msra.mxu0 %v4791
  %5916 = vmatprep.subr.bf16.mxu0 %v4785
  %5917 = vmatpush2.bf16.msra.mxu0 %v4784
  %5918 = vmatprep.subr.bf16.mxu0 %v4778
  %5919 = vmatpush2.bf16.msra.mxu0 %v4777
  %5920 = vmatprep.mubr.bf16.mxu0 %v2643
  %5921 = vmatmul.mubr.bf16.gmra.mxu0 %v2642
  %v5922 = vpop.f32.mrf.mxu0
  %v5923 = vadd.f32 %v5880, %v5922
  %v5924 = vpop.f32.mrf.mxu0
  %v5925 = vadd.f32 %v5882, %v5924
  %v5926 = vpop.f32.mrf.mxu0
  %v5927 = vadd.f32 %v5884, %v5926
  %v5928 = vpop.f32.mrf.mxu0
  %v5929 = vadd.f32 %v5886, %v5928
  %5930 = vdwg.mxu0
  %5931 = vmatprep.subr.bf16.mxu0 %v4883
  %5932 = vmatpush1.bf16.msra.mxu0 %v4882
  %5933 = vmatprep.subr.bf16.mxu0 %v4876
  %5934 = vmatpush1.bf16.msra.mxu0 %v4875
  %5935 = vmatprep.subr.bf16.mxu0 %v4869
  %5936 = vmatpush1.bf16.msra.mxu0 %v4868
  %5937 = vmatprep.subr.bf16.mxu0 %v4862
  %5938 = vmatpush1.bf16.msra.mxu0 %v4861
  %5939 = vmatprep.subr.bf16.mxu0 %v4855
  %5940 = vmatpush1.bf16.msra.mxu0 %v4854
  %5941 = vmatprep.subr.bf16.mxu0 %v4848
  %5942 = vmatpush1.bf16.msra.mxu0 %v4847
  %5943 = vmatprep.subr.bf16.mxu0 %v4841
  %5944 = vmatpush1.bf16.msra.mxu0 %v4840
  %5945 = vmatprep.subr.bf16.mxu0 %v4834
  %5946 = vmatpush1.bf16.msra.mxu0 %v4833
  %5947 = vmatprep.subr.bf16.mxu0 %v4939
  %5948 = vmatpush2.bf16.msra.mxu0 %v4938
  %5949 = vmatprep.subr.bf16.mxu0 %v4932
  %5950 = vmatpush2.bf16.msra.mxu0 %v4931
  %5951 = vmatprep.subr.bf16.mxu0 %v4925
  %5952 = vmatpush2.bf16.msra.mxu0 %v4924
  %5953 = vmatprep.subr.bf16.mxu0 %v4918
  %5954 = vmatpush2.bf16.msra.mxu0 %v4917
  %5955 = vmatprep.subr.bf16.mxu0 %v4911
  %5956 = vmatpush2.bf16.msra.mxu0 %v4910
  %5957 = vmatprep.subr.bf16.mxu0 %v4904
  %5958 = vmatpush2.bf16.msra.mxu0 %v4903
  %5959 = vmatprep.subr.bf16.mxu0 %v4897
  %5960 = vmatpush2.bf16.msra.mxu0 %v4896
  %5961 = vmatprep.subr.bf16.mxu0 %v4890
  %5962 = vmatpush2.bf16.msra.mxu0 %v4889
  %5963 = vmatprep.mubr.bf16.mxu0 %v2645
  %5964 = vmatmul.mubr.bf16.gmra.mxu0 %v2644
  %v5965 = vpop.f32.mrf.mxu0
  %v5966 = vadd.f32 %v5923, %v5965
  %v5967 = vpop.f32.mrf.mxu0
  %v5968 = vadd.f32 %v5925, %v5967
  %v5969 = vpop.f32.mrf.mxu0
  %v5970 = vadd.f32 %v5927, %v5969
  %v5971 = vpop.f32.mrf.mxu0
  %v5972 = vadd.f32 %v5929, %v5971
  %5973 = vdwg.mxu0
  %5974 = vmatprep.subr.bf16.mxu0 %v4995
  %5975 = vmatpush1.bf16.msra.mxu0 %v4994
  %5976 = vmatprep.subr.bf16.mxu0 %v4988
  %5977 = vmatpush1.bf16.msra.mxu0 %v4987
  %5978 = vmatprep.subr.bf16.mxu0 %v4981
  %5979 = vmatpush1.bf16.msra.mxu0 %v4980
  %5980 = vmatprep.subr.bf16.mxu0 %v4974
  %5981 = vmatpush1.bf16.msra.mxu0 %v4973
  %5982 = vmatprep.subr.bf16.mxu0 %v4967
  %5983 = vmatpush1.bf16.msra.mxu0 %v4966
  %5984 = vmatprep.subr.bf16.mxu0 %v4960
  %5985 = vmatpush1.bf16.msra.mxu0 %v4959
  %5986 = vmatprep.subr.bf16.mxu0 %v4953
  %5987 = vmatpush1.bf16.msra.mxu0 %v4952
  %5988 = vmatprep.subr.bf16.mxu0 %v4946
  %5989 = vmatpush1.bf16.msra.mxu0 %v4945
  %5990 = vmatprep.subr.bf16.mxu0 %v5051
  %5991 = vmatpush2.bf16.msra.mxu0 %v5050
  %5992 = vmatprep.subr.bf16.mxu0 %v5044
  %5993 = vmatpush2.bf16.msra.mxu0 %v5043
  %5994 = vmatprep.subr.bf16.mxu0 %v5037
  %5995 = vmatpush2.bf16.msra.mxu0 %v5036
  %5996 = vmatprep.subr.bf16.mxu0 %v5030
  %5997 = vmatpush2.bf16.msra.mxu0 %v5029
  %5998 = vmatprep.subr.bf16.mxu0 %v5023
  %5999 = vmatpush2.bf16.msra.mxu0 %v5022
  %6000 = vmatprep.subr.bf16.mxu0 %v5016
  %6001 = vmatpush2.bf16.msra.mxu0 %v5015
  %6002 = vmatprep.subr.bf16.mxu0 %v5009
  %6003 = vmatpush2.bf16.msra.mxu0 %v5008
  %6004 = vmatprep.subr.bf16.mxu0 %v5002
  %6005 = vmatpush2.bf16.msra.mxu0 %v5001
  %6006 = vmatprep.mubr.bf16.mxu0 %v2647
  %6007 = vmatmul.mubr.bf16.gmra.mxu0 %v2646
  %v6008 = vpop.f32.mrf.mxu0
  %v6009 = vadd.f32 %v5966, %v6008
  %v6010 = vpop.f32.mrf.mxu0
  %v6011 = vadd.f32 %v5968, %v6010
  %v6012 = vpop.f32.mrf.mxu0
  %v6013 = vadd.f32 %v5970, %v6012
  %v6014 = vpop.f32.mrf.mxu0
  %v6015 = vadd.f32 %v5972, %v6014
  %6016 = vdwg.mxu0
  %6017 = vmatprep.subr.bf16.mxu0 0
  %6018 = vmatpush1.bf16.msra.mxu0 %v4660
  %6019 = vmatprep.subr.bf16.mxu0 0
  %6020 = vmatpush1.bf16.msra.mxu0 %v4653
  %6021 = vmatprep.subr.bf16.mxu0 0
  %6022 = vmatpush1.bf16.msra.mxu0 %v4646
  %6023 = vmatprep.subr.bf16.mxu0 0
  %6024 = vmatpush1.bf16.msra.mxu0 %v4639
  %6025 = vmatprep.subr.bf16.mxu0 0
  %6026 = vmatpush1.bf16.msra.mxu0 %v4632
  %6027 = vmatprep.subr.bf16.mxu0 0
  %6028 = vmatpush1.bf16.msra.mxu0 %v4625
  %6029 = vmatprep.subr.bf16.mxu0 0
  %6030 = vmatpush1.bf16.msra.mxu0 %v4618
  %6031 = vmatprep.subr.bf16.mxu0 0
  %6032 = vmatpush1.bf16.msra.mxu0 %v4611
  %6033 = vmatprep.subr.bf16.mxu0 0
  %6034 = vmatpush2.bf16.msra.mxu0 %v4716
  %6035 = vmatprep.subr.bf16.mxu0 0
  %6036 = vmatpush2.bf16.msra.mxu0 %v4709
  %6037 = vmatprep.subr.bf16.mxu0 0
  %6038 = vmatpush2.bf16.msra.mxu0 %v4702
  %6039 = vmatprep.subr.bf16.mxu0 0
  %6040 = vmatpush2.bf16.msra.mxu0 %v4695
  %6041 = vmatprep.subr.bf16.mxu0 0
  %6042 = vmatpush2.bf16.msra.mxu0 %v4688
  %6043 = vmatprep.subr.bf16.mxu0 0
  %6044 = vmatpush2.bf16.msra.mxu0 %v4681
  %6045 = vmatprep.subr.bf16.mxu0 0
  %6046 = vmatpush2.bf16.msra.mxu0 %v4674
  %6047 = vmatprep.subr.bf16.mxu0 0
  %6048 = vmatpush2.bf16.msra.mxu0 %v4667
  %6049 = vmatprep.mubr.bf16.mxu0 %v2641
  %6050 = vmatmul.mubr.bf16.gmra.mxu0 %v2640
  %v6051 = vpop.f32.mrf.mxu0
  %v6052 = vadd.f32 %v3189, %v6051
  %v6053 = vpop.f32.mrf.mxu0
  %v6054 = vpop.f32.mrf.mxu0
  %v6055 = vadd.f32 %v3189, %v6054
  %v6056 = vpop.f32.mrf.mxu0
  %6057 = vdwg.mxu0
  %6058 = vmatprep.subr.bf16.mxu0 0
  %6059 = vmatpush1.bf16.msra.mxu0 %v4772
  %6060 = vmatprep.subr.bf16.mxu0 0
  %6061 = vmatpush1.bf16.msra.mxu0 %v4765
  %6062 = vmatprep.subr.bf16.mxu0 0
  %6063 = vmatpush1.bf16.msra.mxu0 %v4758
  %6064 = vmatprep.subr.bf16.mxu0 0
  %6065 = vmatpush1.bf16.msra.mxu0 %v4751
  %6066 = vmatprep.subr.bf16.mxu0 0
  %6067 = vmatpush1.bf16.msra.mxu0 %v4744
  %6068 = vmatprep.subr.bf16.mxu0 0
  %6069 = vmatpush1.bf16.msra.mxu0 %v4737
  %6070 = vmatprep.subr.bf16.mxu0 0
  %6071 = vmatpush1.bf16.msra.mxu0 %v4730
  %6072 = vmatprep.subr.bf16.mxu0 0
  %6073 = vmatpush1.bf16.msra.mxu0 %v4723
  %6074 = vmatprep.subr.bf16.mxu0 0
  %6075 = vmatpush2.bf16.msra.mxu0 %v4828
  %6076 = vmatprep.subr.bf16.mxu0 0
  %6077 = vmatpush2.bf16.msra.mxu0 %v4821
  %6078 = vmatprep.subr.bf16.mxu0 0
  %6079 = vmatpush2.bf16.msra.mxu0 %v4814
  %6080 = vmatprep.subr.bf16.mxu0 0
  %6081 = vmatpush2.bf16.msra.mxu0 %v4807
  %6082 = vmatprep.subr.bf16.mxu0 0
  %6083 = vmatpush2.bf16.msra.mxu0 %v4800
  %6084 = vmatprep.subr.bf16.mxu0 0
  %6085 = vmatpush2.bf16.msra.mxu0 %v4793
  %6086 = vmatprep.subr.bf16.mxu0 0
  %6087 = vmatpush2.bf16.msra.mxu0 %v4786
  %6088 = vmatprep.subr.bf16.mxu0 0
  %6089 = vmatpush2.bf16.msra.mxu0 %v4779
  %6090 = vmatprep.mubr.bf16.mxu0 %v2643
  %6091 = vmatmul.mubr.bf16.gmra.mxu0 %v2642
  %v6092 = vpop.f32.mrf.mxu0
  %v6093 = vadd.f32 %v6052, %v6092
  %v6094 = vpop.f32.mrf.mxu0
  %v6095 = vpop.f32.mrf.mxu0
  %v6096 = vadd.f32 %v6055, %v6095
  %v6097 = vpop.f32.mrf.mxu0
  %6098 = vdwg.mxu0
  %6099 = vmatprep.subr.bf16.mxu0 0
  %6100 = vmatpush1.bf16.msra.mxu0 %v4884
  %6101 = vmatprep.subr.bf16.mxu0 0
  %6102 = vmatpush1.bf16.msra.mxu0 %v4877
  %6103 = vmatprep.subr.bf16.mxu0 0
  %6104 = vmatpush1.bf16.msra.mxu0 %v4870
  %6105 = vmatprep.subr.bf16.mxu0 0
  %6106 = vmatpush1.bf16.msra.mxu0 %v4863
  %6107 = vmatprep.subr.bf16.mxu0 0
  %6108 = vmatpush1.bf16.msra.mxu0 %v4856
  %6109 = vmatprep.subr.bf16.mxu0 0
  %6110 = vmatpush1.bf16.msra.mxu0 %v4849
  %6111 = vmatprep.subr.bf16.mxu0 0
  %6112 = vmatpush1.bf16.msra.mxu0 %v4842
  %6113 = vmatprep.subr.bf16.mxu0 0
  %6114 = vmatpush1.bf16.msra.mxu0 %v4835
  %6115 = vmatprep.subr.bf16.mxu0 0
  %6116 = vmatpush2.bf16.msra.mxu0 %v4940
  %6117 = vmatprep.subr.bf16.mxu0 0
  %6118 = vmatpush2.bf16.msra.mxu0 %v4933
  %6119 = vmatprep.subr.bf16.mxu0 0
  %6120 = vmatpush2.bf16.msra.mxu0 %v4926
  %6121 = vmatprep.subr.bf16.mxu0 0
  %6122 = vmatpush2.bf16.msra.mxu0 %v4919
  %6123 = vmatprep.subr.bf16.mxu0 0
  %6124 = vmatpush2.bf16.msra.mxu0 %v4912
  %6125 = vmatprep.subr.bf16.mxu0 0
  %6126 = vmatpush2.bf16.msra.mxu0 %v4905
  %6127 = vmatprep.subr.bf16.mxu0 0
  %6128 = vmatpush2.bf16.msra.mxu0 %v4898
  %6129 = vmatprep.subr.bf16.mxu0 0
  %6130 = vmatpush2.bf16.msra.mxu0 %v4891
  %6131 = vmatprep.mubr.bf16.mxu0 %v2645
  %6132 = vmatmul.mubr.bf16.gmra.mxu0 %v2644
  %v6133 = vpop.f32.mrf.mxu0
  %v6134 = vadd.f32 %v6093, %v6133
  %v6135 = vpop.f32.mrf.mxu0
  %v6136 = vpop.f32.mrf.mxu0
  %v6137 = vadd.f32 %v6096, %v6136
  %v6138 = vpop.f32.mrf.mxu0
  %6139 = vdwg.mxu0
  %6140 = vmatprep.subr.bf16.mxu0 0
  %6141 = vmatpush1.bf16.msra.mxu0 %v4996
  %6142 = vmatprep.subr.bf16.mxu0 0
  %6143 = vmatpush1.bf16.msra.mxu0 %v4989
  %6144 = vmatprep.subr.bf16.mxu0 0
  %6145 = vmatpush1.bf16.msra.mxu0 %v4982
  %6146 = vmatprep.subr.bf16.mxu0 0
  %6147 = vmatpush1.bf16.msra.mxu0 %v4975
  %6148 = vmatprep.subr.bf16.mxu0 0
  %6149 = vmatpush1.bf16.msra.mxu0 %v4968
  %6150 = vmatprep.subr.bf16.mxu0 0
  %6151 = vmatpush1.bf16.msra.mxu0 %v4961
  %6152 = vmatprep.subr.bf16.mxu0 0
  %6153 = vmatpush1.bf16.msra.mxu0 %v4954
  %6154 = vmatprep.subr.bf16.mxu0 0
  %6155 = vmatpush1.bf16.msra.mxu0 %v4947
  %6156 = vmatprep.subr.bf16.mxu0 0
  %6157 = vmatpush2.bf16.msra.mxu0 %v5052
  %6158 = vmatprep.subr.bf16.mxu0 0
  %6159 = vmatpush2.bf16.msra.mxu0 %v5045
  %6160 = vmatprep.subr.bf16.mxu0 0
  %6161 = vmatpush2.bf16.msra.mxu0 %v5038
  %6162 = vmatprep.subr.bf16.mxu0 0
  %6163 = vmatpush2.bf16.msra.mxu0 %v5031
  %6164 = vmatprep.subr.bf16.mxu0 0
  %6165 = vmatpush2.bf16.msra.mxu0 %v5024
  %6166 = vmatprep.subr.bf16.mxu0 0
  %6167 = vmatpush2.bf16.msra.mxu0 %v5017
  %6168 = vmatprep.subr.bf16.mxu0 0
  %6169 = vmatpush2.bf16.msra.mxu0 %v5010
  %6170 = vmatprep.subr.bf16.mxu0 0
  %6171 = vmatpush2.bf16.msra.mxu0 %v5003
  %6172 = vmatprep.mubr.bf16.mxu0 %v2647
  %6173 = vmatmul.mubr.bf16.gmra.mxu0 %v2646
  %v6174 = vpop.f32.mrf.mxu0
  %v6175 = vadd.f32 %v6134, %v6174
  %v6176 = vpop.f32.mrf.mxu0
  %v6177 = vpop.f32.mrf.mxu0
  %v6178 = vadd.f32 %v6137, %v6177
  %v6179 = vpop.f32.mrf.mxu0
  %6180 = vdwg.mxu0
  %v6181 = vtanh.pop %v5665
  %v6182 = vtanh.pop %v5667
  %v6183 = vtanh.pop %v5837
  %v6184 = vtanh.pop %v5839
  %v6185 = vtanh.pop %v6009
  %v6186 = vtanh.pop %v6011
  %v6187 = vtanh.pop %v6175
  %v6188 = vtanh.pop %v5669
  %v6189 = vtanh.pop %v5671
  %v6190 = vtanh.pop %v5841
  %v6191 = vtanh.pop %v5843
  %v6192 = vtanh.pop %v6013
  %v6193 = vtanh.pop %v6015
  %v6194 = vtanh.pop %v6178
  %v6195 = vpack.c.bf16 %v6188, %v6181
  %v6196 = vpack.c.bf16 %v6189, %v6182
  %v6197 = vpack.c.bf16 %v6190, %v6183
  %v6198 = vpack.c.bf16 %v6191, %v6184
  %v6199 = vpack.c.bf16 %v6192, %v6185
  %v6200 = vpack.c.bf16 %v6193, %v6186
  %v6201 = vpack.c.bf16 %v6194, %v6187
  %v6209 = vunpack.c.l.b16 %v6195
  %v6210 = vunpack.c.l.b16 %v6196
  %v6211 = vunpack.c.l.b16 %v6197
  %v6212 = vunpack.c.l.b16 %v6198
  %v6213 = vunpack.c.l.b16 %v6199
  %v6214 = vunpack.c.l.b16 %v6200
  %v6215 = vunpack.c.l.b16 %v6201
  %v6216 = vunpack.c.h.b16 %v6195
  %v6217 = vunpack.c.h.b16 %v6196
  %v6218 = vunpack.c.h.b16 %v6197
  %v6219 = vunpack.c.h.b16 %v6198
  %v6220 = vunpack.c.h.b16 %v6199
  %v6221 = vunpack.c.h.b16 %v6200
  %v6222 = vunpack.c.h.b16 %v6201
  %v6223 = vpack.c.b16 %v6210, %v6209
  %v6224 = vpack.c.b16 %v6212, %v6211
  %v6225 = vpack.c.b16 %v6214, %v6213
  %v6226 = vpack.c.b16 %v6215, %v6215
  %v6227 = vpack.c.b16 %v6217, %v6216
  %v6228 = vpack.c.b16 %v6219, %v6218
  %v6229 = vpack.c.b16 %v6221, %v6220
  %v6230 = vpack.c.b16 %v6222, %v6222
  %6239 = vst [vmem:[%s9] sm:$0xff] %v6223
  %6240 = vst [vmem:[%s9 + $0x8] sm:$0xff] %v6224
  %6241 = vst [vmem:[%s9 + $0x10] sm:$0xff] %v6225
  %vm6242 = vcmask 125952
  %6243 = vst.msk [vmem:[%s9 + $0x18] sm:$0xf] %vm6242, %v6226
  %6244 = vst [vmem:[%s9 + $0x1c] sm:$0xff] %v6227
  %6245 = vst [vmem:[%s9 + $0x24] sm:$0xff] %v6228
  %6246 = vst [vmem:[%s9 + $0x2c] sm:$0xff] %v6229
  %6247 = vst.msk [vmem:[%s9 + $0x34] sm:$0xf] %vm6242, %v6230
  // Predicated region
  $region38: #{generator_forward.1} parent=0 // pred_check
    _
  $region39: #{generator_forward.1} parent=0 // pred_check_branch
    %6249 = sbr.rel (0) target = $region41
  $region40: #{generator_forward.1} parent=0 // pred_region
    _
  $region41: #{generator_forward.1} parent=0 // pred_fallthru
    _
  // Predicated region
  $region42: #{generator_forward.1} parent=0 // pred_check
    _
  $region43: #{generator_forward.1} parent=0 // pred_check_branch
    %6251 = sbr.rel (0) target = $region45
  $region44: #{generator_forward.1} parent=0 // pred_region
    _
  $region45: #{generator_forward.1} parent=0 // pred_fallthru
    _

</llo_original>
